<compile_context>
chip_gen: v6e
topology: v6e:2x2x1
jax: 0.10.0
libtpu: 0.0.40
codegen_flags: <defaults>
</compile_context>

<pallas_src>
import jax
import jax.numpy as jnp
from jax.experimental import pallas as pl
from jax.experimental.pallas import tpu as pltpu

BN_EPS = 1e-3


def conv_bn_kernel(w_ref, x_ref, gamma_ref, beta_ref, o_ref):
    # w_ref: (tc, Cin) bf16   x_ref: (Cin, M) bf16
    # gamma_ref / beta_ref: (1, 1, tc) f32   o_ref: (1, M, tc) f32
    # Y tile = X^T @ W_tile^T (contract Cin on both operands) -> (M, tc).
    # The Cout tile lives on the lane axis -> lane-dense MXU output / stores.
    y = jax.lax.dot_general(
        x_ref[...], w_ref[...],
        dimension_numbers=(((0,), (1,)), ((), ())),
        preferred_element_type=jnp.float32,
    )
    inv_m = 1.0 / y.shape[0]
    # Training-mode BatchNorm2d: biased batch mean / var per output channel
    # (channels are columns -> reduce over axis 0).  Exact two-pass variance:
    # y is already resident, so the second sweep is cheap VPU work.
    mean = jnp.sum(y, axis=0, keepdims=True) * inv_m
    centered = y - mean
    var = jnp.sum(centered * centered, axis=0, keepdims=True) * inv_m
    scale = jax.lax.rsqrt(var + BN_EPS) * gamma_ref[0]
    o_ref[0] = (centered * scale + beta_ref[0]).astype(o_ref.dtype)


def _cout_tile(cout):
    """Largest multiple-of-8 divisor of `cout` not exceeding a per-gen target."""
    target = 144  # v7x / unknown: 4 'parallel' tiles -> 2 per TensorCore.
    try:
        kind = jax.devices()[0].device_kind.lower()
        if "v5" in kind or "v6" in kind:
            target = 288  # single TensorCore: fewer, larger grid steps.
    except Exception:
        pass
    best = None
    t = 8
    while t <= min(cout, target):
        if cout % t == 0:
            best = t
        t += 8
    return best if best is not None else cout


def conv2d_batchnorm(x_nchw, w_oihw, gamma, beta, *, compute_dtype=jnp.bfloat16):
    """x_nchw: (N, Cin, H, W), w_oihw: (Cout, Cin, 1, 1), gamma/beta: (Cout,)."""
    N, Cin, H, W = x_nchw.shape
    Cout = w_oihw.shape[0]
    M = N * H * W

    # Layout plumbing only; no HBM-side weight transpose.  bf16 halves the
    # dominant (weight) HBM traffic; accumulation stays f32 inside the kernel.
    w_mat = w_oihw.reshape(Cout, Cin).astype(compute_dtype)          # (Cout, Cin)
    if N == 1:
        x_cm = x_nchw.reshape(Cin, M)                                # pure reshape
    else:
        x_cm = jnp.transpose(x_nchw, (1, 0, 2, 3)).reshape(Cin, M)
    x_cm = x_cm.astype(compute_dtype)

    tc = _cout_tile(Cout)
    nt = Cout // tc
    gamma3 = gamma.astype(jnp.float32).reshape(nt, 1, tc)
    beta3 = beta.astype(jnp.float32).reshape(nt, 1, tc)

    itemsize = jnp.dtype(compute_dtype).itemsize
    cost = pl.CostEstimate(
        flops=2 * Cout * Cin * M,
        transcendentals=Cout,  # one rsqrt per output channel
        bytes_accessed=(Cout * Cin + Cin * M) * itemsize + (Cout * M + 2 * Cout) * 4,
    )

    out3 = pl.pallas_call(
        conv_bn_kernel,
        out_shape=jax.ShapeDtypeStruct((nt, M, tc), jnp.float32),
        grid=(nt,),
        in_specs=[
            pl.BlockSpec((tc, Cin), lambda j: (j, 0)),       # weight tile (double-buffered)
            pl.BlockSpec((Cin, M), lambda j: (0, 0)),        # x resident (constant index map)
            pl.BlockSpec((1, 1, tc), lambda j: (j, 0, 0)),   # gamma tile
            pl.BlockSpec((1, 1, tc), lambda j: (j, 0, 0)),   # beta tile
        ],
        out_specs=pl.BlockSpec((1, M, tc), lambda j: (j, 0, 0)),
        compiler_params=pltpu.CompilerParams(
            dimension_semantics=("parallel",),
        ),
        cost_estimate=cost,
    )(w_mat, x_cm, gamma3, beta3)

    # (nt, M, tc) -> (Cout, M): cheap transpose of a ~113 KB array.
    out_cm = jnp.transpose(out3, (0, 2, 1)).reshape(Cout, M)
    if N == 1:
        return out_cm.reshape(1, Cout, H, W)
    return jnp.transpose(out_cm.reshape(Cout, N, H, W), (1, 0, 2, 3))


def reference(x_nchw, w_oihw, gamma, beta):
    Cout, Cin = w_oihw.shape[0], w_oihw.shape[1]
    y = jnp.einsum(
        "nchw,oc->nohw", x_nchw, w_oihw.reshape(Cout, Cin),
        preferred_element_type=jnp.float32,
    )
    mean = jnp.mean(y, axis=(0, 2, 3), keepdims=True)
    var = jnp.mean((y - mean) ** 2, axis=(0, 2, 3), keepdims=True)
    return (y - mean) * jax.lax.rsqrt(var + BN_EPS) * gamma.reshape(1, Cout, 1, 1) \
        + beta.reshape(1, Cout, 1, 1)


if __name__ == "__main__":
    key = jax.random.PRNGKey(0)
    k_x, k_w = jax.random.split(key)

    # Shapes implied by the module's forward: x696 = (1, 3456, 7, 7).
    N, Cin, H, W = 1, 3456, 7, 7
    Cout = 576

    x = jax.random.normal(k_x, (N, Cin, H, W), dtype=jnp.float32)
    w = jax.random.normal(k_w, (Cout, Cin, 1, 1), dtype=jnp.float32) * 0.02
    gamma = jnp.ones((Cout,), dtype=jnp.float32)   # BatchNorm2d default init
    beta = jnp.zeros((Cout,), dtype=jnp.float32)

    out = conv2d_batchnorm(x, w, gamma, beta)
    out = jax.block_until_ready(out)
    assert out.shape == (N, Cout, H, W), out.shape

    # Tight check vs a bf16-input-matched f32 reference (isolates kernel
    # correctness from the intentional bf16 cast of the operands).
    x_q = x.astype(jnp.bfloat16).astype(jnp.float32)
    w_q = w.astype(jnp.bfloat16).astype(jnp.float32)
    ref_q = reference(x_q, w_q, gamma, beta)
    assert jnp.allclose(out, ref_q, atol=5e-3, rtol=5e-3), float(
        jnp.max(jnp.abs(out - ref_q)))

    # Loose check vs the pure-f32 reference (bounds the bf16 quantization cost).
    ref_f32 = reference(x, w, gamma, beta)
    assert jnp.allclose(out, ref_f32, atol=1e-1, rtol=1e-1), float(
        jnp.max(jnp.abs(out - ref_f32)))

    print("KERNEL_OK")
</pallas_src>

<mosaic_0001>
module attributes {stable_mosaic.version = 11 : i64} {
  func.func @conv_bn_kernel(%arg0: i32, %arg1: memref<144x3456xbf16, #tpu.memory_space<vmem>>, %arg2: memref<3456x49xbf16, #tpu.memory_space<vmem>>, %arg3: memref<1x1x144xf32, #tpu.memory_space<vmem>>, %arg4: memref<1x1x144xf32, #tpu.memory_space<vmem>>, %arg5: memref<1x49x144xf32, #tpu.memory_space<vmem>>) attributes {dimension_semantics = [#tpu.dimension_semantics<parallel>], iteration_bounds = array<i64: 4>, scalar_prefetch = 0 : i64, scratch_operands = 0 : i64, tpu.core_type = #tpu.core_type<tc>, window_params = [{transform_indices = @transform_0, window_bounds = array<i64: 144, 3456>}, {pipeline_mode = #tpu.pipeline_mode<synchronous>, transform_indices = @transform_1, window_bounds = array<i64: 3456, 49>}, {transform_indices = @transform_2, window_bounds = array<i64: 1, 1, 144>}, {transform_indices = @transform_3, window_bounds = array<i64: 1, 1, 144>}, {transform_indices = @transform_4, window_bounds = array<i64: 1, 49, 144>}]} {
    %c0 = arith.constant 0 : index
    %c0_0 = arith.constant 0 : index
    %0 = vector.load %arg2[%c0, %c0_0] : memref<3456x49xbf16, #tpu.memory_space<vmem>>, vector<3456x49xbf16>
    %c0_1 = arith.constant 0 : index
    %c0_2 = arith.constant 0 : index
    %1 = vector.load %arg1[%c0_1, %c0_2] : memref<144x3456xbf16, #tpu.memory_space<vmem>>, vector<144x3456xbf16>
    %cst = arith.constant dense<0.000000e+00> : vector<49x144xf32>
    %2 = tpu.matmul %0, %1, %cst {dimension_numbers = #tpu.dot_dimension_numbers<[0], [1], [1], [0], [0, 1, 1, 0], [], []>} : vector<3456x49xbf16>, vector<144x3456xbf16>, vector<49x144xf32> -> vector<49x144xf32>
    %cst_3 = arith.constant dense<0.000000e+00> : vector<144xf32>
    %3 = vector.multi_reduction <add>, %2, %cst_3 [0] : vector<49x144xf32> to vector<144xf32>
    %4 = vector.shape_cast %3 : vector<144xf32> to vector<1x144xf32>
    %cst_4 = arith.constant 0.0204081628 : f32
    %5 = vector.broadcast %cst_4 : f32 to vector<1x144xf32>
    %6 = arith.mulf %4, %5 : vector<1x144xf32>
    %7 = vector.broadcast %6 : vector<1x144xf32> to vector<49x144xf32>
    %8 = arith.subf %2, %7 : vector<49x144xf32>
    %9 = arith.mulf %8, %8 : vector<49x144xf32>
    %cst_5 = arith.constant dense<0.000000e+00> : vector<144xf32>
    %10 = vector.multi_reduction <add>, %9, %cst_5 [0] : vector<49x144xf32> to vector<144xf32>
    %11 = vector.shape_cast %10 : vector<144xf32> to vector<1x144xf32>
    %cst_6 = arith.constant 0.0204081628 : f32
    %12 = vector.broadcast %cst_6 : f32 to vector<1x144xf32>
    %13 = arith.mulf %11, %12 : vector<1x144xf32>
    %cst_7 = arith.constant 1.000000e-03 : f32
    %14 = vector.broadcast %cst_7 : f32 to vector<1x144xf32>
    %15 = arith.addf %13, %14 : vector<1x144xf32>
    %16 = math.rsqrt %15 : vector<1x144xf32>
    %c0_8 = arith.constant 0 : index
    %c0_9 = arith.constant 0 : index
    %c0_10 = arith.constant 0 : index
    %17 = vector.load %arg3[%c0_8, %c0_9, %c0_10] : memref<1x1x144xf32, #tpu.memory_space<vmem>>, vector<1x1x144xf32>
    %18 = vector.shape_cast %17 : vector<1x1x144xf32> to vector<1x144xf32>
    %19 = arith.mulf %16, %18 : vector<1x144xf32>
    %20 = vector.broadcast %19 : vector<1x144xf32> to vector<49x144xf32>
    %21 = arith.mulf %8, %20 : vector<49x144xf32>
    %c0_11 = arith.constant 0 : index
    %c0_12 = arith.constant 0 : index
    %c0_13 = arith.constant 0 : index
    %22 = vector.load %arg4[%c0_11, %c0_12, %c0_13] : memref<1x1x144xf32, #tpu.memory_space<vmem>>, vector<1x1x144xf32>
    %23 = vector.shape_cast %22 : vector<1x1x144xf32> to vector<1x144xf32>
    %24 = vector.broadcast %23 : vector<1x144xf32> to vector<49x144xf32>
    %25 = arith.addf %21, %24 : vector<49x144xf32>
    %c0_14 = arith.constant 0 : index
    %c0_15 = arith.constant 0 : index
    %c0_16 = arith.constant 0 : index
    %26 = vector.load %arg5[%c0_14, %c0_15, %c0_16] : memref<1x49x144xf32, #tpu.memory_space<vmem>>, vector<1x49x144xf32>
    %27 = vector.shape_cast %26 : vector<1x49x144xf32> to vector<49x144xf32>
    %28 = vector.shape_cast %25 : vector<49x144xf32> to vector<1x49x144xf32>
    tpu.vector_store %arg5[%c0_14, %c0_15, %c0_16], %28 {strides = array<i32>} : memref<1x49x144xf32, #tpu.memory_space<vmem>>, vector<1x49x144xf32>,
    return
  }
  func.func @transform_0(%arg0: i32) -> (i32, i32) {
    %c0_i32 = arith.constant 0 : i32
    %c0_i32_0 = arith.constant 0 : i32
    return %arg0, %c0_i32 : i32, i32
  }
  func.func @transform_1(%arg0: i32) -> (i32, i32) {
    %c0_i32 = arith.constant 0 : i32
    %c0_i32_0 = arith.constant 0 : i32
    %c0_i32_1 = arith.constant 0 : i32
    return %c0_i32, %c0_i32_0 : i32, i32
  }
  func.func @transform_2(%arg0: i32) -> (i32, i32, i32) {
    %c0_i32 = arith.constant 0 : i32
    %c0_i32_0 = arith.constant 0 : i32
    %c0_i32_1 = arith.constant 0 : i32
    return %arg0, %c0_i32, %c0_i32_0 : i32, i32, i32
  }
  func.func @transform_3(%arg0: i32) -> (i32, i32, i32) {
    %c0_i32 = arith.constant 0 : i32
    %c0_i32_0 = arith.constant 0 : i32
    %c0_i32_1 = arith.constant 0 : i32
    return %arg0, %c0_i32, %c0_i32_0 : i32, i32, i32
  }
  func.func @transform_4(%arg0: i32) -> (i32, i32, i32) {
    %c0_i32 = arith.constant 0 : i32
    %c0_i32_0 = arith.constant 0 : i32
    %c0_i32_1 = arith.constant 0 : i32
    return %arg0, %c0_i32, %c0_i32_0 : i32, i32, i32
  }
}

</mosaic_0001>

<llo_original>
// kernel: tpu_custom_call.1
$region0: #{tpu_custom_call.1}
  #allocation0 [shape = 'u32[]', space=smem, size = 0x4, offset = 0x4, fixed_abs, tag = 'smem constant byte address 0x4 - core index']
  #allocation1 [shape = 'u32[144,128]{1,0:T(1,128)}', space=vmem, size = 0x12000, scoped, tag = 'internal scratch']
  %s0 = inlined_call_operand.hbm [shape: bf16[576,3456], index: 0, kind: input, shape index: {}]
  %s1 = inlined_call_operand.vmem [shape: bf16[3456,49], index: 1, kind: input, shape index: {}]
  %s2 = inlined_call_operand.hbm [shape: f32[4,1,144], index: 2, kind: input, shape index: {}]
  %s3 = inlined_call_operand.hbm [shape: f32[4,1,144], index: 3, kind: input, shape index: {}]
  %s4 = inlined_call_operand.vmem [shape: f32[4,49,144], index: 4, kind: output, shape index: {}]
  %s5 = sld [smem:[#allocation0]]
  $region61: #{tpu_custom_call.1} parent=0
    _
  %s7 = ssub.s32 1, %s5
  %s8 = scalar_select 0, %s7, %s5
  $region1: #{tpu_custom_call.1} parent=0
    #allocation2 [shape = 'u8[1990656]{0}', space=vmem, size = 0x1e6000, scoped, tag = 'input window, operand 0']
    #allocation3 [shape = 's32[2]{0}', space=sflag, size = 0x8, scoped, tag = 'scoped memory for tpu_custom_call.1']
    #allocation4 [shape = 'u8[2048]{0}', space=vmem, size = 0x800, scoped, tag = 'input window, operand 2']
    #allocation5 [shape = 's32[2]{0}', space=sflag, size = 0x8, scoped, tag = 'scoped memory for tpu_custom_call.1']
    #allocation6 [shape = 'u8[2048]{0}', space=vmem, size = 0x800, scoped, tag = 'input window, operand 3']
    %9 = vsyncpa [#allocation3], 0
    %s10 = scalar_lea.sflag [#allocation3], 1
    %11 = vsyncpa %s10, 0
    %12 = vsyncpa [#allocation5], 0
    %s13 = scalar_lea.sflag [#allocation5], 1
    %14 = vsyncpa %s13, 0
    loop: start=0, step=1, limit=6
    $region2: #{tpu_custom_call.1} parent=1 // loop_pre_header
      _
    $region3: #{tpu_custom_call.1} parent=1 // loop_header
      %s16 = sphi 0, %s20
      %p17 = scmp.ge.s32.totalorder %s16, 6
      %s26 = sphi 0, %s28
      %s29 = sphi 0, %s26
      %s30 = sphi 0, %s29
      %s46 = sphi 0, %s30
      %s50 = sphi 0, %s50
      %s52 = sphi 0, %s50
      %s53 = sphi 0, %s52
      %s67 = sphi 0, %s53
      %s73 = sphi 0, %s75
      %s76 = sphi 0, %s73
      %s77 = sphi 0, %s76
      %s93 = sphi 0, %s77
      %s99 = sphi 0, %s101
      %s102 = sphi 0, %s99
      %s103 = sphi 0, %s102
      %s119 = sphi 0, %s103
      %s125 = sphi 0, %s127
      %s128 = sphi 0, %s125
      %s129 = sphi 0, %s128
      %s145 = sphi 0, %s129
    $region4: #{tpu_custom_call.1} parent=1 // loop_header_branch
      %19 = sbr.rel (%p17) target = $region8
    $region5: #{tpu_custom_call.1} parent=1 // loop_body
      %s21 = ssub.s32 %s16, 1
      %s22 = ssub.s32 %s16, 2
      %s23 = sadd.s32 %s16, 1
      %s24 = ssub.s32 %s16, %s23
      %p25 = scmp.eq.s32.totalorder %s24, 0
      %s27 = sadd.s32 %s26, 1
      %s28 = scalar_select %p25, %s26, %s27
      %p31 = pneg %p25
      %p32 = scmp.eq.s32.totalorder %s16, 3
      %p33 = por %p31, %p32
      %p34 = scmp.ne.s32.totalorder %s26, %s29
      %p35 = scmp.eq.s32.totalorder %s16, 0
      %p36 = por %p34, %p35
      %p37 = scmp.ne.s32.totalorder %s26, %s29
      %p38 = scmp.eq.s32.totalorder %s21, 3
      %p39 = por %p37, %p38
      %p40 = scmp.ne.s32.totalorder %s29, %s30
      %p41 = scmp.eq.s32.totalorder %s21, 0
      %p42 = por %p40, %p41
      %p43 = scmp.ne.s32.totalorder %s29, %s30
      %p44 = scmp.eq.s32.totalorder %s22, 3
      %p45 = por %p43, %p44
      %p47 = scmp.ne.s32.totalorder %s30, %s46
      %p48 = scmp.eq.s32.totalorder %s22, 0
      %p49 = por %p47, %p48
      %s51 = sadd.s32 %s50, 1
      %p54 = scmp.eq.s32.totalorder %s16, 3
      %p55 = scmp.ne.s32.totalorder %s50, %s52
      %p56 = scmp.eq.s32.totalorder %s16, 0
      %p57 = por %p55, %p56
      %p58 = scmp.ne.s32.totalorder %s50, %s52
      %p59 = scmp.eq.s32.totalorder %s21, 3
      %p60 = por %p58, %p59
      %p61 = scmp.ne.s32.totalorder %s52, %s53
      %p62 = scmp.eq.s32.totalorder %s21, 0
      %p63 = por %p61, %p62
      %p64 = scmp.ne.s32.totalorder %s52, %s53
      %p65 = scmp.eq.s32.totalorder %s22, 3
      %p66 = por %p64, %p65
      %p68 = scmp.ne.s32.totalorder %s53, %s67
      %p69 = scmp.eq.s32.totalorder %s22, 0
      %p70 = por %p68, %p69
      %s71 = ssub.s32 %s16, %s23
      %p72 = scmp.eq.s32.totalorder %s71, 0
      %s74 = sadd.s32 %s73, 1
      %s75 = scalar_select %p72, %s73, %s74
      %p78 = pneg %p72
      %p79 = scmp.eq.s32.totalorder %s16, 3
      %p80 = por %p78, %p79
      %p81 = scmp.ne.s32.totalorder %s73, %s76
      %p82 = scmp.eq.s32.totalorder %s16, 0
      %p83 = por %p81, %p82
      %p84 = scmp.ne.s32.totalorder %s73, %s76
      %p85 = scmp.eq.s32.totalorder %s21, 3
      %p86 = por %p84, %p85
      %p87 = scmp.ne.s32.totalorder %s76, %s77
      %p88 = scmp.eq.s32.totalorder %s21, 0
      %p89 = por %p87, %p88
      %p90 = scmp.ne.s32.totalorder %s76, %s77
      %p91 = scmp.eq.s32.totalorder %s22, 3
      %p92 = por %p90, %p91
      %p94 = scmp.ne.s32.totalorder %s77, %s93
      %p95 = scmp.eq.s32.totalorder %s22, 0
      %p96 = por %p94, %p95
      %s97 = ssub.s32 %s16, %s23
      %p98 = scmp.eq.s32.totalorder %s97, 0
      %s100 = sadd.s32 %s99, 1
      %s101 = scalar_select %p98, %s99, %s100
      %p104 = pneg %p98
      %p105 = scmp.eq.s32.totalorder %s16, 3
      %p106 = por %p104, %p105
      %p107 = scmp.ne.s32.totalorder %s99, %s102
      %p108 = scmp.eq.s32.totalorder %s16, 0
      %p109 = por %p107, %p108
      %p110 = scmp.ne.s32.totalorder %s99, %s102
      %p111 = scmp.eq.s32.totalorder %s21, 3
      %p112 = por %p110, %p111
      %p113 = scmp.ne.s32.totalorder %s102, %s103
      %p114 = scmp.eq.s32.totalorder %s21, 0
      %p115 = por %p113, %p114
      %p116 = scmp.ne.s32.totalorder %s102, %s103
      %p117 = scmp.eq.s32.totalorder %s22, 3
      %p118 = por %p116, %p117
      %p120 = scmp.ne.s32.totalorder %s103, %s119
      %p121 = scmp.eq.s32.totalorder %s22, 0
      %p122 = por %p120, %p121
      %s123 = ssub.s32 %s16, %s23
      %p124 = scmp.eq.s32.totalorder %s123, 0
      %s126 = sadd.s32 %s125, 1
      %s127 = scalar_select %p124, %s125, %s126
      %p130 = pneg %p124
      %p131 = scmp.eq.s32.totalorder %s16, 3
      %p132 = por %p130, %p131
      %p133 = scmp.ne.s32.totalorder %s125, %s128
      %p134 = scmp.eq.s32.totalorder %s16, 0
      %p135 = por %p133, %p134
      %p136 = scmp.ne.s32.totalorder %s125, %s128
      %p137 = scmp.eq.s32.totalorder %s21, 3
      %p138 = por %p136, %p137
      %p139 = scmp.ne.s32.totalorder %s128, %s129
      %p140 = scmp.eq.s32.totalorder %s21, 0
      %p141 = por %p139, %p140
      %p142 = scmp.ne.s32.totalorder %s128, %s129
      %p143 = scmp.eq.s32.totalorder %s22, 3
      %p144 = por %p142, %p143
      %p146 = scmp.ne.s32.totalorder %s129, %s145
      %p147 = scmp.eq.s32.totalorder %s22, 0
      %p148 = por %p146, %p147
      %p149 = scmp.le.s32.totalorder 1, %s16
      %p150 = scmp.lt.s32.totalorder %s16, 5
      %p151 = pnand %p149, %p150
      %p152 = pneg %p151
      // Predicated region
      $region9: #{tpu_custom_call.1} parent=5 // pred_check
        _
      $region10: #{tpu_custom_call.1} parent=5 // pred_check_branch
        %154 = sbr.rel (%p151) target = $region12
      $region11: #{tpu_custom_call.1} parent=5 // pred_region
        %s155 = ssub.s32 %s16, 1
        // Predicated region
        $region13: #{tpu_custom_call.1} parent=11 // pred_check
          %p156 = pneg %p63
        $region14: #{tpu_custom_call.1} parent=11 // pred_check_branch
          %158 = sbr.rel (%p156) target = $region16
        $region15: #{tpu_custom_call.1} parent=11 // pred_region
          _
        $region16: #{tpu_custom_call.1} parent=11 // pred_fallthru
          _
      $region12: #{tpu_custom_call.1} parent=5 // pred_fallthru
        _
      %p159 = scmp.lt.s32.totalorder %s16, 4
      // Predicated region
      $region17: #{tpu_custom_call.1} parent=5 // pred_check
        %p160 = pneg %p159
      $region18: #{tpu_custom_call.1} parent=5 // pred_check_branch
        %162 = sbr.rel (%p160) target = $region20
      $region19: #{tpu_custom_call.1} parent=5 // pred_region
        // Predicated region
        $region21: #{tpu_custom_call.1} parent=19 // pred_check
          %p163 = pneg %p36
        $region22: #{tpu_custom_call.1} parent=19 // pred_check_branch
          %165 = sbr.rel (%p163) target = $region24
        $region23: #{tpu_custom_call.1} parent=19 // pred_region
          %s166 = sand.u32 %s26, 1
          %s167 = scalar_lea.sflag [#allocation3], %s166
          %s168 = sand.u32 %s26, 1
          %s169 = smul.addr %s168, 1944
          %s170 = scalar_lea.vmem [#allocation2], %s169
          %s171 = smul.u32 18, %s16
          %s173 = ssub.s32 31104, 31104
          %174 = vsyncadd %s167, %s173
          %s175 = smul.addr %s171, 27
          %s176 = smul.addr %s175, 64
          %s177 = scalar_lea.hbm %s0, %s176
          %s178 = sshll.u32 %s170, 4
          %s179 = int_to_ptr.vmem [resolvable:$true] %s178
          %184 = dma.hbm_to_vmem [thread:$0]  %s177, 31104, %s179, %s167, 1728, 1728, 108
        $region24: #{tpu_custom_call.1} parent=19 // pred_fallthru
          _
        // Predicated region
        $region25: #{tpu_custom_call.1} parent=19 // pred_check
          %p185 = pneg %p83
        $region26: #{tpu_custom_call.1} parent=19 // pred_check_branch
          %187 = sbr.rel (%p185) target = $region28
        $region27: #{tpu_custom_call.1} parent=19 // pred_region
          %s188 = sand.u32 %s16, 1
          %s189 = scalar_lea.sflag [#allocation5], %s188
          %s190 = sand.u32 %s73, 1
          %s191 = smul.addr %s190, 2
          %s192 = scalar_lea.vmem [#allocation4], %s191
          %s194 = ssub.s32 32, 32
          %195 = vsyncadd %s189, %s194
          %s196 = smul.addr %s16, 2
          %s197 = smul.addr %s196, 16
          %s198 = scalar_lea.hbm %s2, %s197
          %s200 = sshll.u32 %s192, 4
          %s201 = int_to_ptr.vmem [resolvable:$true] %s200
          %203 = dma.hbm_to_vmem [thread:$0]  %s198, 32, %s201, %s189
        $region28: #{tpu_custom_call.1} parent=19 // pred_fallthru
          _
        // Predicated region
        $region29: #{tpu_custom_call.1} parent=19 // pred_check
          %p204 = pneg %p109
        $region30: #{tpu_custom_call.1} parent=19 // pred_check_branch
          %206 = sbr.rel (%p204) target = $region32
        $region31: #{tpu_custom_call.1} parent=19 // pred_region
          %s207 = sand.u32 %s16, 1
          %s208 = scalar_lea.sflag [#allocation5], %s207
          %s209 = sand.u32 %s99, 1
          %s210 = smul.addr %s209, 2
          %s211 = scalar_lea.vmem [#allocation6], %s210
          %s213 = ssub.s32 32, 32
          %214 = vsyncadd %s208, %s213
          %s215 = smul.addr %s16, 2
          %s216 = smul.addr %s215, 16
          %s217 = scalar_lea.hbm %s3, %s216
          %s219 = sshll.u32 %s211, 4
          %s220 = int_to_ptr.vmem [resolvable:$true] %s219
          %222 = dma.hbm_to_vmem [thread:$0]  %s217, 32, %s220, %s208
        $region32: #{tpu_custom_call.1} parent=19 // pred_fallthru
          _
      $region20: #{tpu_custom_call.1} parent=5 // pred_fallthru
        _
      %p223 = scmp.le.s32.totalorder 1, %s16
      %p224 = scmp.lt.s32.totalorder %s16, 5
      %p225 = pnand %p223, %p224
      %p226 = pneg %p225
      // Predicated region
      $region33: #{tpu_custom_call.1} parent=5 // pred_check
        _
      $region34: #{tpu_custom_call.1} parent=5 // pred_check_branch
        %228 = sbr.rel (%p225) target = $region36
      $region35: #{tpu_custom_call.1} parent=5 // pred_region
        %s229 = ssub.s32 %s16, 1
        %s230 = sand.u32 %s29, 1
        %s231 = scalar_lea.sflag [#allocation3], %s230
        %s232 = sand.u32 %s29, 1
        %s233 = smul.addr %s232, 1944
        %s234 = scalar_lea.vmem [#allocation2], %s233
        // Predicated region
        $region37: #{tpu_custom_call.1} parent=35 // pred_check
          %p235 = pneg %p42
        $region38: #{tpu_custom_call.1} parent=35 // pred_check_branch
          %237 = sbr.rel (%p235) target = $region40
        $region39: #{tpu_custom_call.1} parent=35 // pred_region
          %238 = dma.done %s231, 31104
        $region40: #{tpu_custom_call.1} parent=35 // pred_fallthru
          _
        %s239 = sand.u32 %s21, 1
        %s240 = scalar_lea.sflag [#allocation5], %s239
        %s241 = sand.u32 %s76, 1
        %s242 = smul.addr %s241, 2
        %s243 = scalar_lea.vmem [#allocation4], %s242
        // Predicated region
        $region41: #{tpu_custom_call.1} parent=35 // pred_check
          %p244 = pneg %p89
        $region42: #{tpu_custom_call.1} parent=35 // pred_check_branch
          %246 = sbr.rel (%p244) target = $region44
        $region43: #{tpu_custom_call.1} parent=35 // pred_region
          %247 = dma.done %s240, 32
        $region44: #{tpu_custom_call.1} parent=35 // pred_fallthru
          _
        %s248 = sand.u32 %s21, 1
        %s249 = scalar_lea.sflag [#allocation5], %s248
        %s250 = sand.u32 %s102, 1
        %s251 = smul.addr %s250, 2
        %s252 = scalar_lea.vmem [#allocation6], %s251
        // Predicated region
        $region45: #{tpu_custom_call.1} parent=35 // pred_check
          %p253 = pneg %p115
        $region46: #{tpu_custom_call.1} parent=35 // pred_check_branch
          %255 = sbr.rel (%p253) target = $region48
        $region47: #{tpu_custom_call.1} parent=35 // pred_region
          %256 = dma.done %s249, 32
        $region48: #{tpu_custom_call.1} parent=35 // pred_fallthru
          _
        %s257 = sand.u32 %s29, 1
        %s258 = scalar_lea.sflag [#allocation3], %s257
        %s259 = sand.u32 %s29, 1
        %s260 = smul.addr %s259, 1944
        %s261 = scalar_lea.vmem [#allocation2], %s260
        %p262 = pneg %p42
        %p263 = pneg %p39
        %p264 = pneg %p63
        %p265 = pneg %p60
        %s266 = sand.u32 %s21, 1
        %s267 = scalar_lea.sflag [#allocation5], %s266
        %s268 = sand.u32 %s76, 1
        %s269 = smul.addr %s268, 2
        %s270 = scalar_lea.vmem [#allocation4], %s269
        %p271 = pneg %p89
        %p272 = pneg %p86
        %s273 = sand.u32 %s21, 1
        %s274 = scalar_lea.sflag [#allocation5], %s273
        %s275 = sand.u32 %s102, 1
        %s276 = smul.addr %s275, 2
        %s277 = scalar_lea.vmem [#allocation6], %s276
        %p278 = pneg %p115
        %p279 = pneg %p112
        %p280 = pneg %p141
        %p281 = pneg %p138
        %p282 = scmp.lt.s32.totalorder %s21, 3
        %s283 = scalar_select %p282, %s21, 3
        %s284 = smul.addr %s283, 14
        %s285 = smul.addr %s284, 8
        %s286 = scalar_lea.vmem %s4, %s285
        %s287 = smul.u32 18, %s21
        %p288 = scmp.lt.s32.totalorder %s21, 3
        %s289 = scalar_select %p288, %s21, 3
        %s290 = smul.addr %s289, 14
        %s291 = smul.addr %s290, 8
        %s292 = scalar_lea.vmem %s4, %s291
        %v294 = vld [vmem:[%s1] sm:$0xf]
        %v295 = vld [vmem:[%s1 + $0x4] sm:$0xf]
        %v296 = vld [vmem:[%s1 + $0x8] sm:$0xf]
        %v297 = vld [vmem:[%s1 + $0xc] sm:$0xf]
        %v298 = vld [vmem:[%s1 + $0x10] sm:$0xf]
        %v299 = vld [vmem:[%s1 + $0x14] sm:$0xf]
        %v300 = vld [vmem:[%s1 + $0x18] sm:$0xf]
        %v301 = vld [vmem:[%s1 + $0x1c] sm:$0xf]
        %v302 = vld [vmem:[%s1 + $0x20] sm:$0xf]
        %v303 = vld [vmem:[%s1 + $0x24] sm:$0xf]
        %v304 = vld [vmem:[%s1 + $0x28] sm:$0xf]
        %v305 = vld [vmem:[%s1 + $0x2c] sm:$0xf]
        %v306 = vld [vmem:[%s1 + $0x30] sm:$0xf]
        %v307 = vld [vmem:[%s1 + $0x34] sm:$0xf]
        %v308 = vld [vmem:[%s1 + $0x38] sm:$0xf]
        %v309 = vld [vmem:[%s1 + $0x3c] sm:$0xf]
        %v310 = vld [vmem:[%s1 + $0x40] sm:$0xf]
        %v311 = vld [vmem:[%s1 + $0x44] sm:$0xf]
        %v312 = vld [vmem:[%s1 + $0x48] sm:$0xf]
        %v313 = vld [vmem:[%s1 + $0x4c] sm:$0xf]
        %v314 = vld [vmem:[%s1 + $0x50] sm:$0xf]
        %v315 = vld [vmem:[%s1 + $0x54] sm:$0xf]
        %v316 = vld [vmem:[%s1 + $0x58] sm:$0xf]
        %v317 = vld [vmem:[%s1 + $0x5c] sm:$0xf]
        %v318 = vld [vmem:[%s1 + $0x60] sm:$0xf]
        %v319 = vld [vmem:[%s1 + $0x64] sm:$0xf]
        %v320 = vld [vmem:[%s1 + $0x68] sm:$0xf]
        %v321 = vld [vmem:[%s1 + $0x6c] sm:$0xf]
        %v322 = vld [vmem:[%s1 + $0x70] sm:$0xf]
        %v323 = vld [vmem:[%s1 + $0x74] sm:$0xf]
        %v324 = vld [vmem:[%s1 + $0x78] sm:$0xf]
        %v325 = vld [vmem:[%s1 + $0x7c] sm:$0xf]
        %v326 = vld [vmem:[%s1 + $0x80] sm:$0xf]
        %v327 = vld [vmem:[%s1 + $0x84] sm:$0xf]
        %v328 = vld [vmem:[%s1 + $0x88] sm:$0xf]
        %v329 = vld [vmem:[%s1 + $0x8c] sm:$0xf]
        %v330 = vld [vmem:[%s1 + $0x90] sm:$0xf]
        %v331 = vld [vmem:[%s1 + $0x94] sm:$0xf]
        %v332 = vld [vmem:[%s1 + $0x98] sm:$0xf]
        %v333 = vld [vmem:[%s1 + $0x9c] sm:$0xf]
        %v334 = vld [vmem:[%s1 + $0xa0] sm:$0xf]
        %v335 = vld [vmem:[%s1 + $0xa4] sm:$0xf]
        %v336 = vld [vmem:[%s1 + $0xa8] sm:$0xf]
        %v337 = vld [vmem:[%s1 + $0xac] sm:$0xf]
        %v338 = vld [vmem:[%s1 + $0xb0] sm:$0xf]
        %v339 = vld [vmem:[%s1 + $0xb4] sm:$0xf]
        %v340 = vld [vmem:[%s1 + $0xb8] sm:$0xf]
        %v341 = vld [vmem:[%s1 + $0xbc] sm:$0xf]
        %v342 = vld [vmem:[%s1 + $0xc0] sm:$0xf]
        %v343 = vld [vmem:[%s1 + $0xc4] sm:$0xf]
        %v344 = vld [vmem:[%s1 + $0xc8] sm:$0xf]
        %v345 = vld [vmem:[%s1 + $0xcc] sm:$0xf]
        %v346 = vld [vmem:[%s1 + $0xd0] sm:$0xf]
        %v347 = vld [vmem:[%s1 + $0xd4] sm:$0xf]
        %v348 = vld [vmem:[%s1 + $0xd8] sm:$0xf]
        %v349 = vld [vmem:[%s1 + $0xdc] sm:$0xf]
        %v350 = vld [vmem:[%s1 + $0xe0] sm:$0xf]
        %v351 = vld [vmem:[%s1 + $0xe4] sm:$0xf]
        %v352 = vld [vmem:[%s1 + $0xe8] sm:$0xf]
        %v353 = vld [vmem:[%s1 + $0xec] sm:$0xf]
        %v354 = vld [vmem:[%s1 + $0xf0] sm:$0xf]
        %v355 = vld [vmem:[%s1 + $0xf4] sm:$0xf]
        %v356 = vld [vmem:[%s1 + $0xf8] sm:$0xf]
        %v357 = vld [vmem:[%s1 + $0xfc] sm:$0xf]
        %v358 = vld [vmem:[%s1 + $0x100] sm:$0xf]
        %v359 = vld [vmem:[%s1 + $0x104] sm:$0xf]
        %v360 = vld [vmem:[%s1 + $0x108] sm:$0xf]
        %v361 = vld [vmem:[%s1 + $0x10c] sm:$0xf]
        %v362 = vld [vmem:[%s1 + $0x110] sm:$0xf]
        %v363 = vld [vmem:[%s1 + $0x114] sm:$0xf]
        %v364 = vld [vmem:[%s1 + $0x118] sm:$0xf]
        %v365 = vld [vmem:[%s1 + $0x11c] sm:$0xf]
        %v366 = vld [vmem:[%s1 + $0x120] sm:$0xf]
        %v367 = vld [vmem:[%s1 + $0x124] sm:$0xf]
        %v368 = vld [vmem:[%s1 + $0x128] sm:$0xf]
        %v369 = vld [vmem:[%s1 + $0x12c] sm:$0xf]
        %v370 = vld [vmem:[%s1 + $0x130] sm:$0xf]
        %v371 = vld [vmem:[%s1 + $0x134] sm:$0xf]
        %v372 = vld [vmem:[%s1 + $0x138] sm:$0xf]
        %v373 = vld [vmem:[%s1 + $0x13c] sm:$0xf]
        %v374 = vld [vmem:[%s1 + $0x140] sm:$0xf]
        %v375 = vld [vmem:[%s1 + $0x144] sm:$0xf]
        %v376 = vld [vmem:[%s1 + $0x148] sm:$0xf]
        %v377 = vld [vmem:[%s1 + $0x14c] sm:$0xf]
        %v378 = vld [vmem:[%s1 + $0x150] sm:$0xf]
        %v379 = vld [vmem:[%s1 + $0x154] sm:$0xf]
        %v380 = vld [vmem:[%s1 + $0x158] sm:$0xf]
        %v381 = vld [vmem:[%s1 + $0x15c] sm:$0xf]
        %v382 = vld [vmem:[%s1 + $0x160] sm:$0xf]
        %v383 = vld [vmem:[%s1 + $0x164] sm:$0xf]
        %v384 = vld [vmem:[%s1 + $0x168] sm:$0xf]
        %v385 = vld [vmem:[%s1 + $0x16c] sm:$0xf]
        %v386 = vld [vmem:[%s1 + $0x170] sm:$0xf]
        %v387 = vld [vmem:[%s1 + $0x174] sm:$0xf]
        %v388 = vld [vmem:[%s1 + $0x178] sm:$0xf]
        %v389 = vld [vmem:[%s1 + $0x17c] sm:$0xf]
        %v390 = vld [vmem:[%s1 + $0x180] sm:$0xf]
        %v391 = vld [vmem:[%s1 + $0x184] sm:$0xf]
        %v392 = vld [vmem:[%s1 + $0x188] sm:$0xf]
        %v393 = vld [vmem:[%s1 + $0x18c] sm:$0xf]
        %v394 = vld [vmem:[%s1 + $0x190] sm:$0xf]
        %v395 = vld [vmem:[%s1 + $0x194] sm:$0xf]
        %v396 = vld [vmem:[%s1 + $0x198] sm:$0xf]
        %v397 = vld [vmem:[%s1 + $0x19c] sm:$0xf]
        %v398 = vld [vmem:[%s1 + $0x1a0] sm:$0xf]
        %v399 = vld [vmem:[%s1 + $0x1a4] sm:$0xf]
        %v400 = vld [vmem:[%s1 + $0x1a8] sm:$0xf]
        %v401 = vld [vmem:[%s1 + $0x1ac] sm:$0xf]
        %v402 = vld [vmem:[%s1 + $0x1b0] sm:$0xf]
        %v403 = vld [vmem:[%s1 + $0x1b4] sm:$0xf]
        %v404 = vld [vmem:[%s1 + $0x1b8] sm:$0xf]
        %v405 = vld [vmem:[%s1 + $0x1bc] sm:$0xf]
        %v406 = vld [vmem:[%s1 + $0x1c0] sm:$0xf]
        %v407 = vld [vmem:[%s1 + $0x1c4] sm:$0xf]
        %v408 = vld [vmem:[%s1 + $0x1c8] sm:$0xf]
        %v409 = vld [vmem:[%s1 + $0x1cc] sm:$0xf]
        %v410 = vld [vmem:[%s1 + $0x1d0] sm:$0xf]
        %v411 = vld [vmem:[%s1 + $0x1d4] sm:$0xf]
        %v412 = vld [vmem:[%s1 + $0x1d8] sm:$0xf]
        %v413 = vld [vmem:[%s1 + $0x1dc] sm:$0xf]
        %v414 = vld [vmem:[%s1 + $0x1e0] sm:$0xf]
        %v415 = vld [vmem:[%s1 + $0x1e4] sm:$0xf]
        %v416 = vld [vmem:[%s1 + $0x1e8] sm:$0xf]
        %v417 = vld [vmem:[%s1 + $0x1ec] sm:$0xf]
        %v418 = vld [vmem:[%s1 + $0x1f0] sm:$0xf]
        %v419 = vld [vmem:[%s1 + $0x1f4] sm:$0xf]
        %v420 = vld [vmem:[%s1 + $0x1f8] sm:$0xf]
        %v421 = vld [vmem:[%s1 + $0x1fc] sm:$0xf]
        %v422 = vld [vmem:[%s1 + $0x200] sm:$0xf]
        %v423 = vld [vmem:[%s1 + $0x204] sm:$0xf]
        %v424 = vld [vmem:[%s1 + $0x208] sm:$0xf]
        %v425 = vld [vmem:[%s1 + $0x20c] sm:$0xf]
        %v426 = vld [vmem:[%s1 + $0x210] sm:$0xf]
        %v427 = vld [vmem:[%s1 + $0x214] sm:$0xf]
        %v428 = vld [vmem:[%s1 + $0x218] sm:$0xf]
        %v429 = vld [vmem:[%s1 + $0x21c] sm:$0xf]
        %v430 = vld [vmem:[%s1 + $0x220] sm:$0xf]
        %v431 = vld [vmem:[%s1 + $0x224] sm:$0xf]
        %v432 = vld [vmem:[%s1 + $0x228] sm:$0xf]
        %v433 = vld [vmem:[%s1 + $0x22c] sm:$0xf]
        %v434 = vld [vmem:[%s1 + $0x230] sm:$0xf]
        %v435 = vld [vmem:[%s1 + $0x234] sm:$0xf]
        %v436 = vld [vmem:[%s1 + $0x238] sm:$0xf]
        %v437 = vld [vmem:[%s1 + $0x23c] sm:$0xf]
        %v438 = vld [vmem:[%s1 + $0x240] sm:$0xf]
        %v439 = vld [vmem:[%s1 + $0x244] sm:$0xf]
        %v440 = vld [vmem:[%s1 + $0x248] sm:$0xf]
        %v441 = vld [vmem:[%s1 + $0x24c] sm:$0xf]
        %v442 = vld [vmem:[%s1 + $0x250] sm:$0xf]
        %v443 = vld [vmem:[%s1 + $0x254] sm:$0xf]
        %v444 = vld [vmem:[%s1 + $0x258] sm:$0xf]
        %v445 = vld [vmem:[%s1 + $0x25c] sm:$0xf]
        %v446 = vld [vmem:[%s1 + $0x260] sm:$0xf]
        %v447 = vld [vmem:[%s1 + $0x264] sm:$0xf]
        %v448 = vld [vmem:[%s1 + $0x268] sm:$0xf]
        %v449 = vld [vmem:[%s1 + $0x26c] sm:$0xf]
        %v450 = vld [vmem:[%s1 + $0x270] sm:$0xf]
        %v451 = vld [vmem:[%s1 + $0x274] sm:$0xf]
        %v452 = vld [vmem:[%s1 + $0x278] sm:$0xf]
        %v453 = vld [vmem:[%s1 + $0x27c] sm:$0xf]
        %v454 = vld [vmem:[%s1 + $0x280] sm:$0xf]
        %v455 = vld [vmem:[%s1 + $0x284] sm:$0xf]
        %v456 = vld [vmem:[%s1 + $0x288] sm:$0xf]
        %v457 = vld [vmem:[%s1 + $0x28c] sm:$0xf]
        %v458 = vld [vmem:[%s1 + $0x290] sm:$0xf]
        %v459 = vld [vmem:[%s1 + $0x294] sm:$0xf]
        %v460 = vld [vmem:[%s1 + $0x298] sm:$0xf]
        %v461 = vld [vmem:[%s1 + $0x29c] sm:$0xf]
        %v462 = vld [vmem:[%s1 + $0x2a0] sm:$0xf]
        %v463 = vld [vmem:[%s1 + $0x2a4] sm:$0xf]
        %v464 = vld [vmem:[%s1 + $0x2a8] sm:$0xf]
        %v465 = vld [vmem:[%s1 + $0x2ac] sm:$0xf]
        %v466 = vld [vmem:[%s1 + $0x2b0] sm:$0xf]
        %v467 = vld [vmem:[%s1 + $0x2b4] sm:$0xf]
        %v468 = vld [vmem:[%s1 + $0x2b8] sm:$0xf]
        %v469 = vld [vmem:[%s1 + $0x2bc] sm:$0xf]
        %v470 = vld [vmem:[%s1 + $0x2c0] sm:$0xf]
        %v471 = vld [vmem:[%s1 + $0x2c4] sm:$0xf]
        %v472 = vld [vmem:[%s1 + $0x2c8] sm:$0xf]
        %v473 = vld [vmem:[%s1 + $0x2cc] sm:$0xf]
        %v474 = vld [vmem:[%s1 + $0x2d0] sm:$0xf]
        %v475 = vld [vmem:[%s1 + $0x2d4] sm:$0xf]
        %v476 = vld [vmem:[%s1 + $0x2d8] sm:$0xf]
        %v477 = vld [vmem:[%s1 + $0x2dc] sm:$0xf]
        %v478 = vld [vmem:[%s1 + $0x2e0] sm:$0xf]
        %v479 = vld [vmem:[%s1 + $0x2e4] sm:$0xf]
        %v480 = vld [vmem:[%s1 + $0x2e8] sm:$0xf]
        %v481 = vld [vmem:[%s1 + $0x2ec] sm:$0xf]
        %v482 = vld [vmem:[%s1 + $0x2f0] sm:$0xf]
        %v483 = vld [vmem:[%s1 + $0x2f4] sm:$0xf]
        %v484 = vld [vmem:[%s1 + $0x2f8] sm:$0xf]
        %v485 = vld [vmem:[%s1 + $0x2fc] sm:$0xf]
        %v486 = vld [vmem:[%s1 + $0x300] sm:$0xf]
        %v487 = vld [vmem:[%s1 + $0x304] sm:$0xf]
        %v488 = vld [vmem:[%s1 + $0x308] sm:$0xf]
        %v489 = vld [vmem:[%s1 + $0x30c] sm:$0xf]
        %v490 = vld [vmem:[%s1 + $0x310] sm:$0xf]
        %v491 = vld [vmem:[%s1 + $0x314] sm:$0xf]
        %v492 = vld [vmem:[%s1 + $0x318] sm:$0xf]
        %v493 = vld [vmem:[%s1 + $0x31c] sm:$0xf]
        %v494 = vld [vmem:[%s1 + $0x320] sm:$0xf]
        %v495 = vld [vmem:[%s1 + $0x324] sm:$0xf]
        %v496 = vld [vmem:[%s1 + $0x328] sm:$0xf]
        %v497 = vld [vmem:[%s1 + $0x32c] sm:$0xf]
        %v498 = vld [vmem:[%s1 + $0x330] sm:$0xf]
        %v499 = vld [vmem:[%s1 + $0x334] sm:$0xf]
        %v500 = vld [vmem:[%s1 + $0x338] sm:$0xf]
        %v501 = vld [vmem:[%s1 + $0x33c] sm:$0xf]
        %v502 = vld [vmem:[%s1 + $0x340] sm:$0xf]
        %v503 = vld [vmem:[%s1 + $0x344] sm:$0xf]
        %v504 = vld [vmem:[%s1 + $0x348] sm:$0xf]
        %v505 = vld [vmem:[%s1 + $0x34c] sm:$0xf]
        %v506 = vld [vmem:[%s1 + $0x350] sm:$0xf]
        %v507 = vld [vmem:[%s1 + $0x354] sm:$0xf]
        %v508 = vld [vmem:[%s1 + $0x358] sm:$0xf]
        %v509 = vld [vmem:[%s1 + $0x35c] sm:$0xf]
        %v510 = vld [vmem:[%s1 + $0x360] sm:$0xf]
        %v511 = vld [vmem:[%s1 + $0x364] sm:$0xf]
        %v512 = vld [vmem:[%s1 + $0x368] sm:$0xf]
        %v513 = vld [vmem:[%s1 + $0x36c] sm:$0xf]
        %v514 = vld [vmem:[%s1 + $0x370] sm:$0xf]
        %v515 = vld [vmem:[%s1 + $0x374] sm:$0xf]
        %v516 = vld [vmem:[%s1 + $0x378] sm:$0xf]
        %v517 = vld [vmem:[%s1 + $0x37c] sm:$0xf]
        %v518 = vld [vmem:[%s1 + $0x380] sm:$0xf]
        %v519 = vld [vmem:[%s1 + $0x384] sm:$0xf]
        %v520 = vld [vmem:[%s1 + $0x388] sm:$0xf]
        %v521 = vld [vmem:[%s1 + $0x38c] sm:$0xf]
        %v522 = vld [vmem:[%s1 + $0x390] sm:$0xf]
        %v523 = vld [vmem:[%s1 + $0x394] sm:$0xf]
        %v524 = vld [vmem:[%s1 + $0x398] sm:$0xf]
        %v525 = vld [vmem:[%s1 + $0x39c] sm:$0xf]
        %v526 = vld [vmem:[%s1 + $0x3a0] sm:$0xf]
        %v527 = vld [vmem:[%s1 + $0x3a4] sm:$0xf]
        %v528 = vld [vmem:[%s1 + $0x3a8] sm:$0xf]
        %v529 = vld [vmem:[%s1 + $0x3ac] sm:$0xf]
        %v530 = vld [vmem:[%s1 + $0x3b0] sm:$0xf]
        %v531 = vld [vmem:[%s1 + $0x3b4] sm:$0xf]
        %v532 = vld [vmem:[%s1 + $0x3b8] sm:$0xf]
        %v533 = vld [vmem:[%s1 + $0x3bc] sm:$0xf]
        %v534 = vld [vmem:[%s1 + $0x3c0] sm:$0xf]
        %v535 = vld [vmem:[%s1 + $0x3c4] sm:$0xf]
        %v536 = vld [vmem:[%s1 + $0x3c8] sm:$0xf]
        %v537 = vld [vmem:[%s1 + $0x3cc] sm:$0xf]
        %v538 = vld [vmem:[%s1 + $0x3d0] sm:$0xf]
        %v539 = vld [vmem:[%s1 + $0x3d4] sm:$0xf]
        %v540 = vld [vmem:[%s1 + $0x3d8] sm:$0xf]
        %v541 = vld [vmem:[%s1 + $0x3dc] sm:$0xf]
        %v542 = vld [vmem:[%s1 + $0x3e0] sm:$0xf]
        %v543 = vld [vmem:[%s1 + $0x3e4] sm:$0xf]
        %v544 = vld [vmem:[%s1 + $0x3e8] sm:$0xf]
        %v545 = vld [vmem:[%s1 + $0x3ec] sm:$0xf]
        %v546 = vld [vmem:[%s1 + $0x3f0] sm:$0xf]
        %v547 = vld [vmem:[%s1 + $0x3f4] sm:$0xf]
        %v548 = vld [vmem:[%s1 + $0x3f8] sm:$0xf]
        %v549 = vld [vmem:[%s1 + $0x3fc] sm:$0xf]
        %v550 = vld [vmem:[%s1 + $0x400] sm:$0xf]
        %v551 = vld [vmem:[%s1 + $0x404] sm:$0xf]
        %v552 = vld [vmem:[%s1 + $0x408] sm:$0xf]
        %v553 = vld [vmem:[%s1 + $0x40c] sm:$0xf]
        %v554 = vld [vmem:[%s1 + $0x410] sm:$0xf]
        %v555 = vld [vmem:[%s1 + $0x414] sm:$0xf]
        %v556 = vld [vmem:[%s1 + $0x418] sm:$0xf]
        %v557 = vld [vmem:[%s1 + $0x41c] sm:$0xf]
        %v558 = vld [vmem:[%s1 + $0x420] sm:$0xf]
        %v559 = vld [vmem:[%s1 + $0x424] sm:$0xf]
        %v560 = vld [vmem:[%s1 + $0x428] sm:$0xf]
        %v561 = vld [vmem:[%s1 + $0x42c] sm:$0xf]
        %v562 = vld [vmem:[%s1 + $0x430] sm:$0xf]
        %v563 = vld [vmem:[%s1 + $0x434] sm:$0xf]
        %v564 = vld [vmem:[%s1 + $0x438] sm:$0xf]
        %v565 = vld [vmem:[%s1 + $0x43c] sm:$0xf]
        %v566 = vld [vmem:[%s1 + $0x440] sm:$0xf]
        %v567 = vld [vmem:[%s1 + $0x444] sm:$0xf]
        %v568 = vld [vmem:[%s1 + $0x448] sm:$0xf]
        %v569 = vld [vmem:[%s1 + $0x44c] sm:$0xf]
        %v570 = vld [vmem:[%s1 + $0x450] sm:$0xf]
        %v571 = vld [vmem:[%s1 + $0x454] sm:$0xf]
        %v572 = vld [vmem:[%s1 + $0x458] sm:$0xf]
        %v573 = vld [vmem:[%s1 + $0x45c] sm:$0xf]
        %v574 = vld [vmem:[%s1 + $0x460] sm:$0xf]
        %v575 = vld [vmem:[%s1 + $0x464] sm:$0xf]
        %v576 = vld [vmem:[%s1 + $0x468] sm:$0xf]
        %v577 = vld [vmem:[%s1 + $0x46c] sm:$0xf]
        %v578 = vld [vmem:[%s1 + $0x470] sm:$0xf]
        %v579 = vld [vmem:[%s1 + $0x474] sm:$0xf]
        %v580 = vld [vmem:[%s1 + $0x478] sm:$0xf]
        %v581 = vld [vmem:[%s1 + $0x47c] sm:$0xf]
        %v582 = vld [vmem:[%s1 + $0x480] sm:$0xf]
        %v583 = vld [vmem:[%s1 + $0x484] sm:$0xf]
        %v584 = vld [vmem:[%s1 + $0x488] sm:$0xf]
        %v585 = vld [vmem:[%s1 + $0x48c] sm:$0xf]
        %v586 = vld [vmem:[%s1 + $0x490] sm:$0xf]
        %v587 = vld [vmem:[%s1 + $0x494] sm:$0xf]
        %v588 = vld [vmem:[%s1 + $0x498] sm:$0xf]
        %v589 = vld [vmem:[%s1 + $0x49c] sm:$0xf]
        %v590 = vld [vmem:[%s1 + $0x4a0] sm:$0xf]
        %v591 = vld [vmem:[%s1 + $0x4a4] sm:$0xf]
        %v592 = vld [vmem:[%s1 + $0x4a8] sm:$0xf]
        %v593 = vld [vmem:[%s1 + $0x4ac] sm:$0xf]
        %v594 = vld [vmem:[%s1 + $0x4b0] sm:$0xf]
        %v595 = vld [vmem:[%s1 + $0x4b4] sm:$0xf]
        %v596 = vld [vmem:[%s1 + $0x4b8] sm:$0xf]
        %v597 = vld [vmem:[%s1 + $0x4bc] sm:$0xf]
        %v598 = vld [vmem:[%s1 + $0x4c0] sm:$0xf]
        %v599 = vld [vmem:[%s1 + $0x4c4] sm:$0xf]
        %v600 = vld [vmem:[%s1 + $0x4c8] sm:$0xf]
        %v601 = vld [vmem:[%s1 + $0x4cc] sm:$0xf]
        %v602 = vld [vmem:[%s1 + $0x4d0] sm:$0xf]
        %v603 = vld [vmem:[%s1 + $0x4d4] sm:$0xf]
        %v604 = vld [vmem:[%s1 + $0x4d8] sm:$0xf]
        %v605 = vld [vmem:[%s1 + $0x4dc] sm:$0xf]
        %v606 = vld [vmem:[%s1 + $0x4e0] sm:$0xf]
        %v607 = vld [vmem:[%s1 + $0x4e4] sm:$0xf]
        %v608 = vld [vmem:[%s1 + $0x4e8] sm:$0xf]
        %v609 = vld [vmem:[%s1 + $0x4ec] sm:$0xf]
        %v610 = vld [vmem:[%s1 + $0x4f0] sm:$0xf]
        %v611 = vld [vmem:[%s1 + $0x4f4] sm:$0xf]
        %v612 = vld [vmem:[%s1 + $0x4f8] sm:$0xf]
        %v613 = vld [vmem:[%s1 + $0x4fc] sm:$0xf]
        %v614 = vld [vmem:[%s1 + $0x500] sm:$0xf]
        %v615 = vld [vmem:[%s1 + $0x504] sm:$0xf]
        %v616 = vld [vmem:[%s1 + $0x508] sm:$0xf]
        %v617 = vld [vmem:[%s1 + $0x50c] sm:$0xf]
        %v618 = vld [vmem:[%s1 + $0x510] sm:$0xf]
        %v619 = vld [vmem:[%s1 + $0x514] sm:$0xf]
        %v620 = vld [vmem:[%s1 + $0x518] sm:$0xf]
        %v621 = vld [vmem:[%s1 + $0x51c] sm:$0xf]
        %v622 = vld [vmem:[%s1 + $0x520] sm:$0xf]
        %v623 = vld [vmem:[%s1 + $0x524] sm:$0xf]
        %v624 = vld [vmem:[%s1 + $0x528] sm:$0xf]
        %v625 = vld [vmem:[%s1 + $0x52c] sm:$0xf]
        %v626 = vld [vmem:[%s1 + $0x530] sm:$0xf]
        %v627 = vld [vmem:[%s1 + $0x534] sm:$0xf]
        %v628 = vld [vmem:[%s1 + $0x538] sm:$0xf]
        %v629 = vld [vmem:[%s1 + $0x53c] sm:$0xf]
        %v630 = vld [vmem:[%s1 + $0x540] sm:$0xf]
        %v631 = vld [vmem:[%s1 + $0x544] sm:$0xf]
        %v632 = vld [vmem:[%s1 + $0x548] sm:$0xf]
        %v633 = vld [vmem:[%s1 + $0x54c] sm:$0xf]
        %v634 = vld [vmem:[%s1 + $0x550] sm:$0xf]
        %v635 = vld [vmem:[%s1 + $0x554] sm:$0xf]
        %v636 = vld [vmem:[%s1 + $0x558] sm:$0xf]
        %v637 = vld [vmem:[%s1 + $0x55c] sm:$0xf]
        %v638 = vld [vmem:[%s1 + $0x560] sm:$0xf]
        %v639 = vld [vmem:[%s1 + $0x564] sm:$0xf]
        %v640 = vld [vmem:[%s1 + $0x568] sm:$0xf]
        %v641 = vld [vmem:[%s1 + $0x56c] sm:$0xf]
        %v642 = vld [vmem:[%s1 + $0x570] sm:$0xf]
        %v643 = vld [vmem:[%s1 + $0x574] sm:$0xf]
        %v644 = vld [vmem:[%s1 + $0x578] sm:$0xf]
        %v645 = vld [vmem:[%s1 + $0x57c] sm:$0xf]
        %v646 = vld [vmem:[%s1 + $0x580] sm:$0xf]
        %v647 = vld [vmem:[%s1 + $0x584] sm:$0xf]
        %v648 = vld [vmem:[%s1 + $0x588] sm:$0xf]
        %v649 = vld [vmem:[%s1 + $0x58c] sm:$0xf]
        %v650 = vld [vmem:[%s1 + $0x590] sm:$0xf]
        %v651 = vld [vmem:[%s1 + $0x594] sm:$0xf]
        %v652 = vld [vmem:[%s1 + $0x598] sm:$0xf]
        %v653 = vld [vmem:[%s1 + $0x59c] sm:$0xf]
        %v654 = vld [vmem:[%s1 + $0x5a0] sm:$0xf]
        %v655 = vld [vmem:[%s1 + $0x5a4] sm:$0xf]
        %v656 = vld [vmem:[%s1 + $0x5a8] sm:$0xf]
        %v657 = vld [vmem:[%s1 + $0x5ac] sm:$0xf]
        %v658 = vld [vmem:[%s1 + $0x5b0] sm:$0xf]
        %v659 = vld [vmem:[%s1 + $0x5b4] sm:$0xf]
        %v660 = vld [vmem:[%s1 + $0x5b8] sm:$0xf]
        %v661 = vld [vmem:[%s1 + $0x5bc] sm:$0xf]
        %v662 = vld [vmem:[%s1 + $0x5c0] sm:$0xf]
        %v663 = vld [vmem:[%s1 + $0x5c4] sm:$0xf]
        %v664 = vld [vmem:[%s1 + $0x5c8] sm:$0xf]
        %v665 = vld [vmem:[%s1 + $0x5cc] sm:$0xf]
        %v666 = vld [vmem:[%s1 + $0x5d0] sm:$0xf]
        %v667 = vld [vmem:[%s1 + $0x5d4] sm:$0xf]
        %v668 = vld [vmem:[%s1 + $0x5d8] sm:$0xf]
        %v669 = vld [vmem:[%s1 + $0x5dc] sm:$0xf]
        %v670 = vld [vmem:[%s1 + $0x5e0] sm:$0xf]
        %v671 = vld [vmem:[%s1 + $0x5e4] sm:$0xf]
        %v672 = vld [vmem:[%s1 + $0x5e8] sm:$0xf]
        %v673 = vld [vmem:[%s1 + $0x5ec] sm:$0xf]
        %v674 = vld [vmem:[%s1 + $0x5f0] sm:$0xf]
        %v675 = vld [vmem:[%s1 + $0x5f4] sm:$0xf]
        %v676 = vld [vmem:[%s1 + $0x5f8] sm:$0xf]
        %v677 = vld [vmem:[%s1 + $0x5fc] sm:$0xf]
        %v678 = vld [vmem:[%s1 + $0x600] sm:$0xf]
        %v679 = vld [vmem:[%s1 + $0x604] sm:$0xf]
        %v680 = vld [vmem:[%s1 + $0x608] sm:$0xf]
        %v681 = vld [vmem:[%s1 + $0x60c] sm:$0xf]
        %v682 = vld [vmem:[%s1 + $0x610] sm:$0xf]
        %v683 = vld [vmem:[%s1 + $0x614] sm:$0xf]
        %v684 = vld [vmem:[%s1 + $0x618] sm:$0xf]
        %v685 = vld [vmem:[%s1 + $0x61c] sm:$0xf]
        %v686 = vld [vmem:[%s1 + $0x620] sm:$0xf]
        %v687 = vld [vmem:[%s1 + $0x624] sm:$0xf]
        %v688 = vld [vmem:[%s1 + $0x628] sm:$0xf]
        %v689 = vld [vmem:[%s1 + $0x62c] sm:$0xf]
        %v690 = vld [vmem:[%s1 + $0x630] sm:$0xf]
        %v691 = vld [vmem:[%s1 + $0x634] sm:$0xf]
        %v692 = vld [vmem:[%s1 + $0x638] sm:$0xf]
        %v693 = vld [vmem:[%s1 + $0x63c] sm:$0xf]
        %v694 = vld [vmem:[%s1 + $0x640] sm:$0xf]
        %v695 = vld [vmem:[%s1 + $0x644] sm:$0xf]
        %v696 = vld [vmem:[%s1 + $0x648] sm:$0xf]
        %v697 = vld [vmem:[%s1 + $0x64c] sm:$0xf]
        %v698 = vld [vmem:[%s1 + $0x650] sm:$0xf]
        %v699 = vld [vmem:[%s1 + $0x654] sm:$0xf]
        %v700 = vld [vmem:[%s1 + $0x658] sm:$0xf]
        %v701 = vld [vmem:[%s1 + $0x65c] sm:$0xf]
        %v702 = vld [vmem:[%s1 + $0x660] sm:$0xf]
        %v703 = vld [vmem:[%s1 + $0x664] sm:$0xf]
        %v704 = vld [vmem:[%s1 + $0x668] sm:$0xf]
        %v705 = vld [vmem:[%s1 + $0x66c] sm:$0xf]
        %v706 = vld [vmem:[%s1 + $0x670] sm:$0xf]
        %v707 = vld [vmem:[%s1 + $0x674] sm:$0xf]
        %v708 = vld [vmem:[%s1 + $0x678] sm:$0xf]
        %v709 = vld [vmem:[%s1 + $0x67c] sm:$0xf]
        %v710 = vld [vmem:[%s1 + $0x680] sm:$0xf]
        %v711 = vld [vmem:[%s1 + $0x684] sm:$0xf]
        %v712 = vld [vmem:[%s1 + $0x688] sm:$0xf]
        %v713 = vld [vmem:[%s1 + $0x68c] sm:$0xf]
        %v714 = vld [vmem:[%s1 + $0x690] sm:$0xf]
        %v715 = vld [vmem:[%s1 + $0x694] sm:$0xf]
        %v716 = vld [vmem:[%s1 + $0x698] sm:$0xf]
        %v717 = vld [vmem:[%s1 + $0x69c] sm:$0xf]
        %v718 = vld [vmem:[%s1 + $0x6a0] sm:$0xf]
        %v719 = vld [vmem:[%s1 + $0x6a4] sm:$0xf]
        %v720 = vld [vmem:[%s1 + $0x6a8] sm:$0xf]
        %v721 = vld [vmem:[%s1 + $0x6ac] sm:$0xf]
        %v722 = vld [vmem:[%s1 + $0x6b0] sm:$0xf]
        %v723 = vld [vmem:[%s1 + $0x6b4] sm:$0xf]
        %v724 = vld [vmem:[%s1 + $0x6b8] sm:$0xf]
        %v725 = vld [vmem:[%s1 + $0x6bc] sm:$0xf]
        %v726 = vld [vmem:[%s234] sm:$0xff]
        %v727 = vld [vmem:[%s234 + $0x8] sm:$0xff]
        %v728 = vld [vmem:[%s234 + $0x10] sm:$0xff]
        %v729 = vld [vmem:[%s234 + $0x18] sm:$0xff]
        %v730 = vld [vmem:[%s234 + $0x20] sm:$0xff]
        %v731 = vld [vmem:[%s234 + $0x28] sm:$0xff]
        %v732 = vld [vmem:[%s234 + $0x30] sm:$0xff]
        %v733 = vld [vmem:[%s234 + $0x38] sm:$0xff]
        %v734 = vld [vmem:[%s234 + $0x40] sm:$0xff]
        %v735 = vld [vmem:[%s234 + $0x48] sm:$0xff]
        %v736 = vld [vmem:[%s234 + $0x50] sm:$0xff]
        %v737 = vld [vmem:[%s234 + $0x58] sm:$0xff]
        %v738 = vld [vmem:[%s234 + $0x60] sm:$0xff]
        %v739 = vld [vmem:[%s234 + $0x68] sm:$0xf]
        %v740 = vld [vmem:[%s234 + $0x6c] sm:$0xff]
        %v741 = vld [vmem:[%s234 + $0x74] sm:$0xff]
        %v742 = vld [vmem:[%s234 + $0x7c] sm:$0xff]
        %v743 = vld [vmem:[%s234 + $0x84] sm:$0xff]
        %v744 = vld [vmem:[%s234 + $0x8c] sm:$0xff]
        %v745 = vld [vmem:[%s234 + $0x94] sm:$0xff]
        %v746 = vld [vmem:[%s234 + $0x9c] sm:$0xff]
        %v747 = vld [vmem:[%s234 + $0xa4] sm:$0xff]
        %v748 = vld [vmem:[%s234 + $0xac] sm:$0xff]
        %v749 = vld [vmem:[%s234 + $0xb4] sm:$0xff]
        %v750 = vld [vmem:[%s234 + $0xbc] sm:$0xff]
        %v751 = vld [vmem:[%s234 + $0xc4] sm:$0xff]
        %v752 = vld [vmem:[%s234 + $0xcc] sm:$0xff]
        %v753 = vld [vmem:[%s234 + $0xd4] sm:$0xf]
        %v754 = vld [vmem:[%s234 + $0xd8] sm:$0xff]
        %v755 = vld [vmem:[%s234 + $0xe0] sm:$0xff]
        %v756 = vld [vmem:[%s234 + $0xe8] sm:$0xff]
        %v757 = vld [vmem:[%s234 + $0xf0] sm:$0xff]
        %v758 = vld [vmem:[%s234 + $0xf8] sm:$0xff]
        %v759 = vld [vmem:[%s234 + $0x100] sm:$0xff]
        %v760 = vld [vmem:[%s234 + $0x108] sm:$0xff]
        %v761 = vld [vmem:[%s234 + $0x110] sm:$0xff]
        %v762 = vld [vmem:[%s234 + $0x118] sm:$0xff]
        %v763 = vld [vmem:[%s234 + $0x120] sm:$0xff]
        %v764 = vld [vmem:[%s234 + $0x128] sm:$0xff]
        %v765 = vld [vmem:[%s234 + $0x130] sm:$0xff]
        %v766 = vld [vmem:[%s234 + $0x138] sm:$0xff]
        %v767 = vld [vmem:[%s234 + $0x140] sm:$0xf]
        %v768 = vld [vmem:[%s234 + $0x144] sm:$0xff]
        %v769 = vld [vmem:[%s234 + $0x14c] sm:$0xff]
        %v770 = vld [vmem:[%s234 + $0x154] sm:$0xff]
        %v771 = vld [vmem:[%s234 + $0x15c] sm:$0xff]
        %v772 = vld [vmem:[%s234 + $0x164] sm:$0xff]
        %v773 = vld [vmem:[%s234 + $0x16c] sm:$0xff]
        %v774 = vld [vmem:[%s234 + $0x174] sm:$0xff]
        %v775 = vld [vmem:[%s234 + $0x17c] sm:$0xff]
        %v776 = vld [vmem:[%s234 + $0x184] sm:$0xff]
        %v777 = vld [vmem:[%s234 + $0x18c] sm:$0xff]
        %v778 = vld [vmem:[%s234 + $0x194] sm:$0xff]
        %v779 = vld [vmem:[%s234 + $0x19c] sm:$0xff]
        %v780 = vld [vmem:[%s234 + $0x1a4] sm:$0xff]
        %v781 = vld [vmem:[%s234 + $0x1ac] sm:$0xf]
        %v782 = vld [vmem:[%s234 + $0x1b0] sm:$0xff]
        %v783 = vld [vmem:[%s234 + $0x1b8] sm:$0xff]
        %v784 = vld [vmem:[%s234 + $0x1c0] sm:$0xff]
        %v785 = vld [vmem:[%s234 + $0x1c8] sm:$0xff]
        %v786 = vld [vmem:[%s234 + $0x1d0] sm:$0xff]
        %v787 = vld [vmem:[%s234 + $0x1d8] sm:$0xff]
        %v788 = vld [vmem:[%s234 + $0x1e0] sm:$0xff]
        %v789 = vld [vmem:[%s234 + $0x1e8] sm:$0xff]
        %v790 = vld [vmem:[%s234 + $0x1f0] sm:$0xff]
        %v791 = vld [vmem:[%s234 + $0x1f8] sm:$0xff]
        %v792 = vld [vmem:[%s234 + $0x200] sm:$0xff]
        %v793 = vld [vmem:[%s234 + $0x208] sm:$0xff]
        %v794 = vld [vmem:[%s234 + $0x210] sm:$0xff]
        %v795 = vld [vmem:[%s234 + $0x218] sm:$0xf]
        %v796 = vld [vmem:[%s234 + $0x21c] sm:$0xff]
        %v797 = vld [vmem:[%s234 + $0x224] sm:$0xff]
        %v798 = vld [vmem:[%s234 + $0x22c] sm:$0xff]
        %v799 = vld [vmem:[%s234 + $0x234] sm:$0xff]
        %v800 = vld [vmem:[%s234 + $0x23c] sm:$0xff]
        %v801 = vld [vmem:[%s234 + $0x244] sm:$0xff]
        %v802 = vld [vmem:[%s234 + $0x24c] sm:$0xff]
        %v803 = vld [vmem:[%s234 + $0x254] sm:$0xff]
        %v804 = vld [vmem:[%s234 + $0x25c] sm:$0xff]
        %v805 = vld [vmem:[%s234 + $0x264] sm:$0xff]
        %v806 = vld [vmem:[%s234 + $0x26c] sm:$0xff]
        %v807 = vld [vmem:[%s234 + $0x274] sm:$0xff]
        %v808 = vld [vmem:[%s234 + $0x27c] sm:$0xff]
        %v809 = vld [vmem:[%s234 + $0x284] sm:$0xf]
        %v810 = vld [vmem:[%s234 + $0x288] sm:$0xff]
        %v811 = vld [vmem:[%s234 + $0x290] sm:$0xff]
        %v812 = vld [vmem:[%s234 + $0x298] sm:$0xff]
        %v813 = vld [vmem:[%s234 + $0x2a0] sm:$0xff]
        %v814 = vld [vmem:[%s234 + $0x2a8] sm:$0xff]
        %v815 = vld [vmem:[%s234 + $0x2b0] sm:$0xff]
        %v816 = vld [vmem:[%s234 + $0x2b8] sm:$0xff]
        %v817 = vld [vmem:[%s234 + $0x2c0] sm:$0xff]
        %v818 = vld [vmem:[%s234 + $0x2c8] sm:$0xff]
        %v819 = vld [vmem:[%s234 + $0x2d0] sm:$0xff]
        %v820 = vld [vmem:[%s234 + $0x2d8] sm:$0xff]
        %v821 = vld [vmem:[%s234 + $0x2e0] sm:$0xff]
        %v822 = vld [vmem:[%s234 + $0x2e8] sm:$0xff]
        %v823 = vld [vmem:[%s234 + $0x2f0] sm:$0xf]
        %v824 = vld [vmem:[%s234 + $0x2f4] sm:$0xff]
        %v825 = vld [vmem:[%s234 + $0x2fc] sm:$0xff]
        %v826 = vld [vmem:[%s234 + $0x304] sm:$0xff]
        %v827 = vld [vmem:[%s234 + $0x30c] sm:$0xff]
        %v828 = vld [vmem:[%s234 + $0x314] sm:$0xff]
        %v829 = vld [vmem:[%s234 + $0x31c] sm:$0xff]
        %v830 = vld [vmem:[%s234 + $0x324] sm:$0xff]
        %v831 = vld [vmem:[%s234 + $0x32c] sm:$0xff]
        %v832 = vld [vmem:[%s234 + $0x334] sm:$0xff]
        %v833 = vld [vmem:[%s234 + $0x33c] sm:$0xff]
        %v834 = vld [vmem:[%s234 + $0x344] sm:$0xff]
        %v835 = vld [vmem:[%s234 + $0x34c] sm:$0xff]
        %v836 = vld [vmem:[%s234 + $0x354] sm:$0xff]
        %v837 = vld [vmem:[%s234 + $0x35c] sm:$0xf]
        %v838 = vld [vmem:[%s234 + $0x360] sm:$0xff]
        %v839 = vld [vmem:[%s234 + $0x368] sm:$0xff]
        %v840 = vld [vmem:[%s234 + $0x370] sm:$0xff]
        %v841 = vld [vmem:[%s234 + $0x378] sm:$0xff]
        %v842 = vld [vmem:[%s234 + $0x380] sm:$0xff]
        %v843 = vld [vmem:[%s234 + $0x388] sm:$0xff]
        %v844 = vld [vmem:[%s234 + $0x390] sm:$0xff]
        %v845 = vld [vmem:[%s234 + $0x398] sm:$0xff]
        %v846 = vld [vmem:[%s234 + $0x3a0] sm:$0xff]
        %v847 = vld [vmem:[%s234 + $0x3a8] sm:$0xff]
        %v848 = vld [vmem:[%s234 + $0x3b0] sm:$0xff]
        %v849 = vld [vmem:[%s234 + $0x3b8] sm:$0xff]
        %v850 = vld [vmem:[%s234 + $0x3c0] sm:$0xff]
        %v851 = vld [vmem:[%s234 + $0x3c8] sm:$0xf]
        %v852 = vld [vmem:[%s234 + $0x3cc] sm:$0xff]
        %v853 = vld [vmem:[%s234 + $0x3d4] sm:$0xff]
        %v854 = vld [vmem:[%s234 + $0x3dc] sm:$0xff]
        %v855 = vld [vmem:[%s234 + $0x3e4] sm:$0xff]
        %v856 = vld [vmem:[%s234 + $0x3ec] sm:$0xff]
        %v857 = vld [vmem:[%s234 + $0x3f4] sm:$0xff]
        %v858 = vld [vmem:[%s234 + $0x3fc] sm:$0xff]
        %v859 = vld [vmem:[%s234 + $0x404] sm:$0xff]
        %v860 = vld [vmem:[%s234 + $0x40c] sm:$0xff]
        %v861 = vld [vmem:[%s234 + $0x414] sm:$0xff]
        %v862 = vld [vmem:[%s234 + $0x41c] sm:$0xff]
        %v863 = vld [vmem:[%s234 + $0x424] sm:$0xff]
        %v864 = vld [vmem:[%s234 + $0x42c] sm:$0xff]
        %v865 = vld [vmem:[%s234 + $0x434] sm:$0xf]
        %v866 = vld [vmem:[%s234 + $0x438] sm:$0xff]
        %v867 = vld [vmem:[%s234 + $0x440] sm:$0xff]
        %v868 = vld [vmem:[%s234 + $0x448] sm:$0xff]
        %v869 = vld [vmem:[%s234 + $0x450] sm:$0xff]
        %v870 = vld [vmem:[%s234 + $0x458] sm:$0xff]
        %v871 = vld [vmem:[%s234 + $0x460] sm:$0xff]
        %v872 = vld [vmem:[%s234 + $0x468] sm:$0xff]
        %v873 = vld [vmem:[%s234 + $0x470] sm:$0xff]
        %v874 = vld [vmem:[%s234 + $0x478] sm:$0xff]
        %v875 = vld [vmem:[%s234 + $0x480] sm:$0xff]
        %v876 = vld [vmem:[%s234 + $0x488] sm:$0xff]
        %v877 = vld [vmem:[%s234 + $0x490] sm:$0xff]
        %v878 = vld [vmem:[%s234 + $0x498] sm:$0xff]
        %v879 = vld [vmem:[%s234 + $0x4a0] sm:$0xf]
        %v880 = vld [vmem:[%s234 + $0x4a4] sm:$0xff]
        %v881 = vld [vmem:[%s234 + $0x4ac] sm:$0xff]
        %v882 = vld [vmem:[%s234 + $0x4b4] sm:$0xff]
        %v883 = vld [vmem:[%s234 + $0x4bc] sm:$0xff]
        %v884 = vld [vmem:[%s234 + $0x4c4] sm:$0xff]
        %v885 = vld [vmem:[%s234 + $0x4cc] sm:$0xff]
        %v886 = vld [vmem:[%s234 + $0x4d4] sm:$0xff]
        %v887 = vld [vmem:[%s234 + $0x4dc] sm:$0xff]
        %v888 = vld [vmem:[%s234 + $0x4e4] sm:$0xff]
        %v889 = vld [vmem:[%s234 + $0x4ec] sm:$0xff]
        %v890 = vld [vmem:[%s234 + $0x4f4] sm:$0xff]
        %v891 = vld [vmem:[%s234 + $0x4fc] sm:$0xff]
        %v892 = vld [vmem:[%s234 + $0x504] sm:$0xff]
        %v893 = vld [vmem:[%s234 + $0x50c] sm:$0xf]
        %v894 = vld [vmem:[%s234 + $0x510] sm:$0xff]
        %v895 = vld [vmem:[%s234 + $0x518] sm:$0xff]
        %v896 = vld [vmem:[%s234 + $0x520] sm:$0xff]
        %v897 = vld [vmem:[%s234 + $0x528] sm:$0xff]
        %v898 = vld [vmem:[%s234 + $0x530] sm:$0xff]
        %v899 = vld [vmem:[%s234 + $0x538] sm:$0xff]
        %v900 = vld [vmem:[%s234 + $0x540] sm:$0xff]
        %v901 = vld [vmem:[%s234 + $0x548] sm:$0xff]
        %v902 = vld [vmem:[%s234 + $0x550] sm:$0xff]
        %v903 = vld [vmem:[%s234 + $0x558] sm:$0xff]
        %v904 = vld [vmem:[%s234 + $0x560] sm:$0xff]
        %v905 = vld [vmem:[%s234 + $0x568] sm:$0xff]
        %v906 = vld [vmem:[%s234 + $0x570] sm:$0xff]
        %v907 = vld [vmem:[%s234 + $0x578] sm:$0xf]
        %v908 = vld [vmem:[%s234 + $0x57c] sm:$0xff]
        %v909 = vld [vmem:[%s234 + $0x584] sm:$0xff]
        %v910 = vld [vmem:[%s234 + $0x58c] sm:$0xff]
        %v911 = vld [vmem:[%s234 + $0x594] sm:$0xff]
        %v912 = vld [vmem:[%s234 + $0x59c] sm:$0xff]
        %v913 = vld [vmem:[%s234 + $0x5a4] sm:$0xff]
        %v914 = vld [vmem:[%s234 + $0x5ac] sm:$0xff]
        %v915 = vld [vmem:[%s234 + $0x5b4] sm:$0xff]
        %v916 = vld [vmem:[%s234 + $0x5bc] sm:$0xff]
        %v917 = vld [vmem:[%s234 + $0x5c4] sm:$0xff]
        %v918 = vld [vmem:[%s234 + $0x5cc] sm:$0xff]
        %v919 = vld [vmem:[%s234 + $0x5d4] sm:$0xff]
        %v920 = vld [vmem:[%s234 + $0x5dc] sm:$0xff]
        %v921 = vld [vmem:[%s234 + $0x5e4] sm:$0xf]
        %v922 = vld [vmem:[%s234 + $0x5e8] sm:$0xff]
        %v923 = vld [vmem:[%s234 + $0x5f0] sm:$0xff]
        %v924 = vld [vmem:[%s234 + $0x5f8] sm:$0xff]
        %v925 = vld [vmem:[%s234 + $0x600] sm:$0xff]
        %v926 = vld [vmem:[%s234 + $0x608] sm:$0xff]
        %v927 = vld [vmem:[%s234 + $0x610] sm:$0xff]
        %v928 = vld [vmem:[%s234 + $0x618] sm:$0xff]
        %v929 = vld [vmem:[%s234 + $0x620] sm:$0xff]
        %v930 = vld [vmem:[%s234 + $0x628] sm:$0xff]
        %v931 = vld [vmem:[%s234 + $0x630] sm:$0xff]
        %v932 = vld [vmem:[%s234 + $0x638] sm:$0xff]
        %v933 = vld [vmem:[%s234 + $0x640] sm:$0xff]
        %v934 = vld [vmem:[%s234 + $0x648] sm:$0xff]
        %v935 = vld [vmem:[%s234 + $0x650] sm:$0xf]
        %v936 = vld [vmem:[%s234 + $0x654] sm:$0xff]
        %v937 = vld [vmem:[%s234 + $0x65c] sm:$0xff]
        %v938 = vld [vmem:[%s234 + $0x664] sm:$0xff]
        %v939 = vld [vmem:[%s234 + $0x66c] sm:$0xff]
        %v940 = vld [vmem:[%s234 + $0x674] sm:$0xff]
        %v941 = vld [vmem:[%s234 + $0x67c] sm:$0xff]
        %v942 = vld [vmem:[%s234 + $0x684] sm:$0xff]
        %v943 = vld [vmem:[%s234 + $0x68c] sm:$0xff]
        %v944 = vld [vmem:[%s234 + $0x694] sm:$0xff]
        %v945 = vld [vmem:[%s234 + $0x69c] sm:$0xff]
        %v946 = vld [vmem:[%s234 + $0x6a4] sm:$0xff]
        %v947 = vld [vmem:[%s234 + $0x6ac] sm:$0xff]
        %v948 = vld [vmem:[%s234 + $0x6b4] sm:$0xff]
        %v949 = vld [vmem:[%s234 + $0x6bc] sm:$0xf]
        %v950 = vld [vmem:[%s234 + $0x6c0] sm:$0xff]
        %v951 = vld [vmem:[%s234 + $0x6c8] sm:$0xff]
        %v952 = vld [vmem:[%s234 + $0x6d0] sm:$0xff]
        %v953 = vld [vmem:[%s234 + $0x6d8] sm:$0xff]
        %v954 = vld [vmem:[%s234 + $0x6e0] sm:$0xff]
        %v955 = vld [vmem:[%s234 + $0x6e8] sm:$0xff]
        %v956 = vld [vmem:[%s234 + $0x6f0] sm:$0xff]
        %v957 = vld [vmem:[%s234 + $0x6f8] sm:$0xff]
        %v958 = vld [vmem:[%s234 + $0x700] sm:$0xff]
        %v959 = vld [vmem:[%s234 + $0x708] sm:$0xff]
        %v960 = vld [vmem:[%s234 + $0x710] sm:$0xff]
        %v961 = vld [vmem:[%s234 + $0x718] sm:$0xff]
        %v962 = vld [vmem:[%s234 + $0x720] sm:$0xff]
        %v963 = vld [vmem:[%s234 + $0x728] sm:$0xf]
        %v964 = vld [vmem:[%s234 + $0x72c] sm:$0xff]
        %v965 = vld [vmem:[%s234 + $0x734] sm:$0xff]
        %v966 = vld [vmem:[%s234 + $0x73c] sm:$0xff]
        %v967 = vld [vmem:[%s234 + $0x744] sm:$0xff]
        %v968 = vld [vmem:[%s234 + $0x74c] sm:$0xff]
        %v969 = vld [vmem:[%s234 + $0x754] sm:$0xff]
        %v970 = vld [vmem:[%s234 + $0x75c] sm:$0xff]
        %v971 = vld [vmem:[%s234 + $0x764] sm:$0xff]
        %v972 = vld [vmem:[%s234 + $0x76c] sm:$0xff]
        %v973 = vld [vmem:[%s234 + $0x774] sm:$0xff]
        %v974 = vld [vmem:[%s234 + $0x77c] sm:$0xff]
        %v975 = vld [vmem:[%s234 + $0x784] sm:$0xff]
        %v976 = vld [vmem:[%s234 + $0x78c] sm:$0xff]
        %v977 = vld [vmem:[%s234 + $0x794] sm:$0xf]
        %v1410 = vunpack.c.l.b16 %v294
        %v1411 = vunpack.c.l.b16 %v295
        %v1412 = vunpack.c.l.b16 %v296
        %v1413 = vunpack.c.l.b16 %v297
        %v1414 = vunpack.c.l.b16 %v298
        %v1415 = vunpack.c.l.b16 %v299
        %v1416 = vunpack.c.l.b16 %v300
        %v1417 = vunpack.c.l.b16 %v301
        %v1418 = vunpack.c.l.b16 %v302
        %v1419 = vunpack.c.l.b16 %v303
        %v1420 = vunpack.c.l.b16 %v304
        %v1421 = vunpack.c.l.b16 %v305
        %v1422 = vunpack.c.l.b16 %v306
        %v1423 = vunpack.c.l.b16 %v307
        %v1424 = vunpack.c.l.b16 %v308
        %v1425 = vunpack.c.l.b16 %v309
        %v1426 = vunpack.c.l.b16 %v310
        %v1427 = vunpack.c.l.b16 %v311
        %v1428 = vunpack.c.l.b16 %v312
        %v1429 = vunpack.c.l.b16 %v313
        %v1430 = vunpack.c.l.b16 %v314
        %v1431 = vunpack.c.l.b16 %v315
        %v1432 = vunpack.c.l.b16 %v316
        %v1433 = vunpack.c.l.b16 %v317
        %v1434 = vunpack.c.l.b16 %v318
        %v1435 = vunpack.c.l.b16 %v319
        %v1436 = vunpack.c.l.b16 %v320
        %v1437 = vunpack.c.l.b16 %v321
        %v1438 = vunpack.c.l.b16 %v322
        %v1439 = vunpack.c.l.b16 %v323
        %v1440 = vunpack.c.l.b16 %v324
        %v1441 = vunpack.c.l.b16 %v325
        %v1442 = vunpack.c.l.b16 %v326
        %v1443 = vunpack.c.l.b16 %v327
        %v1444 = vunpack.c.l.b16 %v328
        %v1445 = vunpack.c.l.b16 %v329
        %v1446 = vunpack.c.l.b16 %v330
        %v1447 = vunpack.c.l.b16 %v331
        %v1448 = vunpack.c.l.b16 %v332
        %v1449 = vunpack.c.l.b16 %v333
        %v1450 = vunpack.c.l.b16 %v334
        %v1451 = vunpack.c.l.b16 %v335
        %v1452 = vunpack.c.l.b16 %v336
        %v1453 = vunpack.c.l.b16 %v337
        %v1454 = vunpack.c.l.b16 %v338
        %v1455 = vunpack.c.l.b16 %v339
        %v1456 = vunpack.c.l.b16 %v340
        %v1457 = vunpack.c.l.b16 %v341
        %v1458 = vunpack.c.l.b16 %v342
        %v1459 = vunpack.c.l.b16 %v343
        %v1460 = vunpack.c.l.b16 %v344
        %v1461 = vunpack.c.l.b16 %v345
        %v1462 = vunpack.c.l.b16 %v346
        %v1463 = vunpack.c.l.b16 %v347
        %v1464 = vunpack.c.l.b16 %v348
        %v1465 = vunpack.c.l.b16 %v349
        %v1466 = vunpack.c.l.b16 %v350
        %v1467 = vunpack.c.l.b16 %v351
        %v1468 = vunpack.c.l.b16 %v352
        %v1469 = vunpack.c.l.b16 %v353
        %v1470 = vunpack.c.l.b16 %v354
        %v1471 = vunpack.c.l.b16 %v355
        %v1472 = vunpack.c.l.b16 %v356
        %v1473 = vunpack.c.l.b16 %v357
        %v1474 = vunpack.c.l.b16 %v358
        %v1475 = vunpack.c.l.b16 %v359
        %v1476 = vunpack.c.l.b16 %v360
        %v1477 = vunpack.c.l.b16 %v361
        %v1478 = vunpack.c.l.b16 %v362
        %v1479 = vunpack.c.l.b16 %v363
        %v1480 = vunpack.c.l.b16 %v364
        %v1481 = vunpack.c.l.b16 %v365
        %v1482 = vunpack.c.l.b16 %v366
        %v1483 = vunpack.c.l.b16 %v367
        %v1484 = vunpack.c.l.b16 %v368
        %v1485 = vunpack.c.l.b16 %v369
        %v1486 = vunpack.c.l.b16 %v370
        %v1487 = vunpack.c.l.b16 %v371
        %v1488 = vunpack.c.l.b16 %v372
        %v1489 = vunpack.c.l.b16 %v373
        %v1490 = vunpack.c.l.b16 %v374
        %v1491 = vunpack.c.l.b16 %v375
        %v1492 = vunpack.c.l.b16 %v376
        %v1493 = vunpack.c.l.b16 %v377
        %v1494 = vunpack.c.l.b16 %v378
        %v1495 = vunpack.c.l.b16 %v379
        %v1496 = vunpack.c.l.b16 %v380
        %v1497 = vunpack.c.l.b16 %v381
        %v1498 = vunpack.c.l.b16 %v382
        %v1499 = vunpack.c.l.b16 %v383
        %v1500 = vunpack.c.l.b16 %v384
        %v1501 = vunpack.c.l.b16 %v385
        %v1502 = vunpack.c.l.b16 %v386
        %v1503 = vunpack.c.l.b16 %v387
        %v1504 = vunpack.c.l.b16 %v388
        %v1505 = vunpack.c.l.b16 %v389
        %v1506 = vunpack.c.l.b16 %v390
        %v1507 = vunpack.c.l.b16 %v391
        %v1508 = vunpack.c.l.b16 %v392
        %v1509 = vunpack.c.l.b16 %v393
        %v1510 = vunpack.c.l.b16 %v394
        %v1511 = vunpack.c.l.b16 %v395
        %v1512 = vunpack.c.l.b16 %v396
        %v1513 = vunpack.c.l.b16 %v397
        %v1514 = vunpack.c.l.b16 %v398
        %v1515 = vunpack.c.l.b16 %v399
        %v1516 = vunpack.c.l.b16 %v400
        %v1517 = vunpack.c.l.b16 %v401
        %v1518 = vunpack.c.l.b16 %v402
        %v1519 = vunpack.c.l.b16 %v403
        %v1520 = vunpack.c.l.b16 %v404
        %v1521 = vunpack.c.l.b16 %v405
        %v1522 = vunpack.c.l.b16 %v406
        %v1523 = vunpack.c.l.b16 %v407
        %v1524 = vunpack.c.l.b16 %v408
        %v1525 = vunpack.c.l.b16 %v409
        %v1526 = vunpack.c.l.b16 %v410
        %v1527 = vunpack.c.l.b16 %v411
        %v1528 = vunpack.c.l.b16 %v412
        %v1529 = vunpack.c.l.b16 %v413
        %v1530 = vunpack.c.l.b16 %v414
        %v1531 = vunpack.c.l.b16 %v415
        %v1532 = vunpack.c.l.b16 %v416
        %v1533 = vunpack.c.l.b16 %v417
        %v1534 = vunpack.c.l.b16 %v418
        %v1535 = vunpack.c.l.b16 %v419
        %v1536 = vunpack.c.l.b16 %v420
        %v1537 = vunpack.c.l.b16 %v421
        %v1538 = vunpack.c.l.b16 %v422
        %v1539 = vunpack.c.l.b16 %v423
        %v1540 = vunpack.c.l.b16 %v424
        %v1541 = vunpack.c.l.b16 %v425
        %v1542 = vunpack.c.l.b16 %v426
        %v1543 = vunpack.c.l.b16 %v427
        %v1544 = vunpack.c.l.b16 %v428
        %v1545 = vunpack.c.l.b16 %v429
        %v1546 = vunpack.c.l.b16 %v430
        %v1547 = vunpack.c.l.b16 %v431
        %v1548 = vunpack.c.l.b16 %v432
        %v1549 = vunpack.c.l.b16 %v433
        %v1550 = vunpack.c.l.b16 %v434
        %v1551 = vunpack.c.l.b16 %v435
        %v1552 = vunpack.c.l.b16 %v436
        %v1553 = vunpack.c.l.b16 %v437
        %v1554 = vunpack.c.l.b16 %v438
        %v1555 = vunpack.c.l.b16 %v439
        %v1556 = vunpack.c.l.b16 %v440
        %v1557 = vunpack.c.l.b16 %v441
        %v1558 = vunpack.c.l.b16 %v442
        %v1559 = vunpack.c.l.b16 %v443
        %v1560 = vunpack.c.l.b16 %v444
        %v1561 = vunpack.c.l.b16 %v445
        %v1562 = vunpack.c.l.b16 %v446
        %v1563 = vunpack.c.l.b16 %v447
        %v1564 = vunpack.c.l.b16 %v448
        %v1565 = vunpack.c.l.b16 %v449
        %v1566 = vunpack.c.l.b16 %v450
        %v1567 = vunpack.c.l.b16 %v451
        %v1568 = vunpack.c.l.b16 %v452
        %v1569 = vunpack.c.l.b16 %v453
        %v1570 = vunpack.c.l.b16 %v454
        %v1571 = vunpack.c.l.b16 %v455
        %v1572 = vunpack.c.l.b16 %v456
        %v1573 = vunpack.c.l.b16 %v457
        %v1574 = vunpack.c.l.b16 %v458
        %v1575 = vunpack.c.l.b16 %v459
        %v1576 = vunpack.c.l.b16 %v460
        %v1577 = vunpack.c.l.b16 %v461
        %v1578 = vunpack.c.l.b16 %v462
        %v1579 = vunpack.c.l.b16 %v463
        %v1580 = vunpack.c.l.b16 %v464
        %v1581 = vunpack.c.l.b16 %v465
        %v1582 = vunpack.c.l.b16 %v466
        %v1583 = vunpack.c.l.b16 %v467
        %v1584 = vunpack.c.l.b16 %v468
        %v1585 = vunpack.c.l.b16 %v469
        %v1586 = vunpack.c.l.b16 %v470
        %v1587 = vunpack.c.l.b16 %v471
        %v1588 = vunpack.c.l.b16 %v472
        %v1589 = vunpack.c.l.b16 %v473
        %v1590 = vunpack.c.l.b16 %v474
        %v1591 = vunpack.c.l.b16 %v475
        %v1592 = vunpack.c.l.b16 %v476
        %v1593 = vunpack.c.l.b16 %v477
        %v1594 = vunpack.c.l.b16 %v478
        %v1595 = vunpack.c.l.b16 %v479
        %v1596 = vunpack.c.l.b16 %v480
        %v1597 = vunpack.c.l.b16 %v481
        %v1598 = vunpack.c.l.b16 %v482
        %v1599 = vunpack.c.l.b16 %v483
        %v1600 = vunpack.c.l.b16 %v484
        %v1601 = vunpack.c.l.b16 %v485
        %v1602 = vunpack.c.l.b16 %v486
        %v1603 = vunpack.c.l.b16 %v487
        %v1604 = vunpack.c.l.b16 %v488
        %v1605 = vunpack.c.l.b16 %v489
        %v1606 = vunpack.c.l.b16 %v490
        %v1607 = vunpack.c.l.b16 %v491
        %v1608 = vunpack.c.l.b16 %v492
        %v1609 = vunpack.c.l.b16 %v493
        %v1610 = vunpack.c.l.b16 %v494
        %v1611 = vunpack.c.l.b16 %v495
        %v1612 = vunpack.c.l.b16 %v496
        %v1613 = vunpack.c.l.b16 %v497
        %v1614 = vunpack.c.l.b16 %v498
        %v1615 = vunpack.c.l.b16 %v499
        %v1616 = vunpack.c.l.b16 %v500
        %v1617 = vunpack.c.l.b16 %v501
        %v1618 = vunpack.c.l.b16 %v502
        %v1619 = vunpack.c.l.b16 %v503
        %v1620 = vunpack.c.l.b16 %v504
        %v1621 = vunpack.c.l.b16 %v505
        %v1622 = vunpack.c.l.b16 %v506
        %v1623 = vunpack.c.l.b16 %v507
        %v1624 = vunpack.c.l.b16 %v508
        %v1625 = vunpack.c.l.b16 %v509
        %v1626 = vunpack.c.l.b16 %v510
        %v1627 = vunpack.c.l.b16 %v511
        %v1628 = vunpack.c.l.b16 %v512
        %v1629 = vunpack.c.l.b16 %v513
        %v1630 = vunpack.c.l.b16 %v514
        %v1631 = vunpack.c.l.b16 %v515
        %v1632 = vunpack.c.l.b16 %v516
        %v1633 = vunpack.c.l.b16 %v517
        %v1634 = vunpack.c.l.b16 %v518
        %v1635 = vunpack.c.l.b16 %v519
        %v1636 = vunpack.c.l.b16 %v520
        %v1637 = vunpack.c.l.b16 %v521
        %v1638 = vunpack.c.l.b16 %v522
        %v1639 = vunpack.c.l.b16 %v523
        %v1640 = vunpack.c.l.b16 %v524
        %v1641 = vunpack.c.l.b16 %v525
        %v1642 = vunpack.c.l.b16 %v526
        %v1643 = vunpack.c.l.b16 %v527
        %v1644 = vunpack.c.l.b16 %v528
        %v1645 = vunpack.c.l.b16 %v529
        %v1646 = vunpack.c.l.b16 %v530
        %v1647 = vunpack.c.l.b16 %v531
        %v1648 = vunpack.c.l.b16 %v532
        %v1649 = vunpack.c.l.b16 %v533
        %v1650 = vunpack.c.l.b16 %v534
        %v1651 = vunpack.c.l.b16 %v535
        %v1652 = vunpack.c.l.b16 %v536
        %v1653 = vunpack.c.l.b16 %v537
        %v1654 = vunpack.c.l.b16 %v538
        %v1655 = vunpack.c.l.b16 %v539
        %v1656 = vunpack.c.l.b16 %v540
        %v1657 = vunpack.c.l.b16 %v541
        %v1658 = vunpack.c.l.b16 %v542
        %v1659 = vunpack.c.l.b16 %v543
        %v1660 = vunpack.c.l.b16 %v544
        %v1661 = vunpack.c.l.b16 %v545
        %v1662 = vunpack.c.l.b16 %v546
        %v1663 = vunpack.c.l.b16 %v547
        %v1664 = vunpack.c.l.b16 %v548
        %v1665 = vunpack.c.l.b16 %v549
        %v1666 = vunpack.c.l.b16 %v550
        %v1667 = vunpack.c.l.b16 %v551
        %v1668 = vunpack.c.l.b16 %v552
        %v1669 = vunpack.c.l.b16 %v553
        %v1670 = vunpack.c.l.b16 %v554
        %v1671 = vunpack.c.l.b16 %v555
        %v1672 = vunpack.c.l.b16 %v556
        %v1673 = vunpack.c.l.b16 %v557
        %v1674 = vunpack.c.l.b16 %v558
        %v1675 = vunpack.c.l.b16 %v559
        %v1676 = vunpack.c.l.b16 %v560
        %v1677 = vunpack.c.l.b16 %v561
        %v1678 = vunpack.c.l.b16 %v562
        %v1679 = vunpack.c.l.b16 %v563
        %v1680 = vunpack.c.l.b16 %v564
        %v1681 = vunpack.c.l.b16 %v565
        %v1682 = vunpack.c.l.b16 %v566
        %v1683 = vunpack.c.l.b16 %v567
        %v1684 = vunpack.c.l.b16 %v568
        %v1685 = vunpack.c.l.b16 %v569
        %v1686 = vunpack.c.l.b16 %v570
        %v1687 = vunpack.c.l.b16 %v571
        %v1688 = vunpack.c.l.b16 %v572
        %v1689 = vunpack.c.l.b16 %v573
        %v1690 = vunpack.c.l.b16 %v574
        %v1691 = vunpack.c.l.b16 %v575
        %v1692 = vunpack.c.l.b16 %v576
        %v1693 = vunpack.c.l.b16 %v577
        %v1694 = vunpack.c.l.b16 %v578
        %v1695 = vunpack.c.l.b16 %v579
        %v1696 = vunpack.c.l.b16 %v580
        %v1697 = vunpack.c.l.b16 %v581
        %v1698 = vunpack.c.l.b16 %v582
        %v1699 = vunpack.c.l.b16 %v583
        %v1700 = vunpack.c.l.b16 %v584
        %v1701 = vunpack.c.l.b16 %v585
        %v1702 = vunpack.c.l.b16 %v586
        %v1703 = vunpack.c.l.b16 %v587
        %v1704 = vunpack.c.l.b16 %v588
        %v1705 = vunpack.c.l.b16 %v589
        %v1706 = vunpack.c.l.b16 %v590
        %v1707 = vunpack.c.l.b16 %v591
        %v1708 = vunpack.c.l.b16 %v592
        %v1709 = vunpack.c.l.b16 %v593
        %v1710 = vunpack.c.l.b16 %v594
        %v1711 = vunpack.c.l.b16 %v595
        %v1712 = vunpack.c.l.b16 %v596
        %v1713 = vunpack.c.l.b16 %v597
        %v1714 = vunpack.c.l.b16 %v598
        %v1715 = vunpack.c.l.b16 %v599
        %v1716 = vunpack.c.l.b16 %v600
        %v1717 = vunpack.c.l.b16 %v601
        %v1718 = vunpack.c.l.b16 %v602
        %v1719 = vunpack.c.l.b16 %v603
        %v1720 = vunpack.c.l.b16 %v604
        %v1721 = vunpack.c.l.b16 %v605
        %v1722 = vunpack.c.l.b16 %v606
        %v1723 = vunpack.c.l.b16 %v607
        %v1724 = vunpack.c.l.b16 %v608
        %v1725 = vunpack.c.l.b16 %v609
        %v1726 = vunpack.c.l.b16 %v610
        %v1727 = vunpack.c.l.b16 %v611
        %v1728 = vunpack.c.l.b16 %v612
        %v1729 = vunpack.c.l.b16 %v613
        %v1730 = vunpack.c.l.b16 %v614
        %v1731 = vunpack.c.l.b16 %v615
        %v1732 = vunpack.c.l.b16 %v616
        %v1733 = vunpack.c.l.b16 %v617
        %v1734 = vunpack.c.l.b16 %v618
        %v1735 = vunpack.c.l.b16 %v619
        %v1736 = vunpack.c.l.b16 %v620
        %v1737 = vunpack.c.l.b16 %v621
        %v1738 = vunpack.c.l.b16 %v622
        %v1739 = vunpack.c.l.b16 %v623
        %v1740 = vunpack.c.l.b16 %v624
        %v1741 = vunpack.c.l.b16 %v625
        %v1742 = vunpack.c.l.b16 %v626
        %v1743 = vunpack.c.l.b16 %v627
        %v1744 = vunpack.c.l.b16 %v628
        %v1745 = vunpack.c.l.b16 %v629
        %v1746 = vunpack.c.l.b16 %v630
        %v1747 = vunpack.c.l.b16 %v631
        %v1748 = vunpack.c.l.b16 %v632
        %v1749 = vunpack.c.l.b16 %v633
        %v1750 = vunpack.c.l.b16 %v634
        %v1751 = vunpack.c.l.b16 %v635
        %v1752 = vunpack.c.l.b16 %v636
        %v1753 = vunpack.c.l.b16 %v637
        %v1754 = vunpack.c.l.b16 %v638
        %v1755 = vunpack.c.l.b16 %v639
        %v1756 = vunpack.c.l.b16 %v640
        %v1757 = vunpack.c.l.b16 %v641
        %v1758 = vunpack.c.l.b16 %v642
        %v1759 = vunpack.c.l.b16 %v643
        %v1760 = vunpack.c.l.b16 %v644
        %v1761 = vunpack.c.l.b16 %v645
        %v1762 = vunpack.c.l.b16 %v646
        %v1763 = vunpack.c.l.b16 %v647
        %v1764 = vunpack.c.l.b16 %v648
        %v1765 = vunpack.c.l.b16 %v649
        %v1766 = vunpack.c.l.b16 %v650
        %v1767 = vunpack.c.l.b16 %v651
        %v1768 = vunpack.c.l.b16 %v652
        %v1769 = vunpack.c.l.b16 %v653
        %v1770 = vunpack.c.l.b16 %v654
        %v1771 = vunpack.c.l.b16 %v655
        %v1772 = vunpack.c.l.b16 %v656
        %v1773 = vunpack.c.l.b16 %v657
        %v1774 = vunpack.c.l.b16 %v658
        %v1775 = vunpack.c.l.b16 %v659
        %v1776 = vunpack.c.l.b16 %v660
        %v1777 = vunpack.c.l.b16 %v661
        %v1778 = vunpack.c.l.b16 %v662
        %v1779 = vunpack.c.l.b16 %v663
        %v1780 = vunpack.c.l.b16 %v664
        %v1781 = vunpack.c.l.b16 %v665
        %v1782 = vunpack.c.l.b16 %v666
        %v1783 = vunpack.c.l.b16 %v667
        %v1784 = vunpack.c.l.b16 %v668
        %v1785 = vunpack.c.l.b16 %v669
        %v1786 = vunpack.c.l.b16 %v670
        %v1787 = vunpack.c.l.b16 %v671
        %v1788 = vunpack.c.l.b16 %v672
        %v1789 = vunpack.c.l.b16 %v673
        %v1790 = vunpack.c.l.b16 %v674
        %v1791 = vunpack.c.l.b16 %v675
        %v1792 = vunpack.c.l.b16 %v676
        %v1793 = vunpack.c.l.b16 %v677
        %v1794 = vunpack.c.l.b16 %v678
        %v1795 = vunpack.c.l.b16 %v679
        %v1796 = vunpack.c.l.b16 %v680
        %v1797 = vunpack.c.l.b16 %v681
        %v1798 = vunpack.c.l.b16 %v682
        %v1799 = vunpack.c.l.b16 %v683
        %v1800 = vunpack.c.l.b16 %v684
        %v1801 = vunpack.c.l.b16 %v685
        %v1802 = vunpack.c.l.b16 %v686
        %v1803 = vunpack.c.l.b16 %v687
        %v1804 = vunpack.c.l.b16 %v688
        %v1805 = vunpack.c.l.b16 %v689
        %v1806 = vunpack.c.l.b16 %v690
        %v1807 = vunpack.c.l.b16 %v691
        %v1808 = vunpack.c.l.b16 %v692
        %v1809 = vunpack.c.l.b16 %v693
        %v1810 = vunpack.c.l.b16 %v694
        %v1811 = vunpack.c.l.b16 %v695
        %v1812 = vunpack.c.l.b16 %v696
        %v1813 = vunpack.c.l.b16 %v697
        %v1814 = vunpack.c.l.b16 %v698
        %v1815 = vunpack.c.l.b16 %v699
        %v1816 = vunpack.c.l.b16 %v700
        %v1817 = vunpack.c.l.b16 %v701
        %v1818 = vunpack.c.l.b16 %v702
        %v1819 = vunpack.c.l.b16 %v703
        %v1820 = vunpack.c.l.b16 %v704
        %v1821 = vunpack.c.l.b16 %v705
        %v1822 = vunpack.c.l.b16 %v706
        %v1823 = vunpack.c.l.b16 %v707
        %v1824 = vunpack.c.l.b16 %v708
        %v1825 = vunpack.c.l.b16 %v709
        %v1826 = vunpack.c.l.b16 %v710
        %v1827 = vunpack.c.l.b16 %v711
        %v1828 = vunpack.c.l.b16 %v712
        %v1829 = vunpack.c.l.b16 %v713
        %v1830 = vunpack.c.l.b16 %v714
        %v1831 = vunpack.c.l.b16 %v715
        %v1832 = vunpack.c.l.b16 %v716
        %v1833 = vunpack.c.l.b16 %v717
        %v1834 = vunpack.c.l.b16 %v718
        %v1835 = vunpack.c.l.b16 %v719
        %v1836 = vunpack.c.l.b16 %v720
        %v1837 = vunpack.c.l.b16 %v721
        %v1838 = vunpack.c.l.b16 %v722
        %v1839 = vunpack.c.l.b16 %v723
        %v1840 = vunpack.c.l.b16 %v724
        %v1841 = vunpack.c.l.b16 %v725
        %v1842 = vpack.c.b16 %v1411, %v1410
        %v1843 = vpack.c.b16 %v1413, %v1412
        %v1844 = vpack.c.b16 %v1415, %v1414
        %v1845 = vpack.c.b16 %v1417, %v1416
        %v1846 = vpack.c.b16 %v1419, %v1418
        %v1847 = vpack.c.b16 %v1421, %v1420
        %v1848 = vpack.c.b16 %v1423, %v1422
        %v1849 = vpack.c.b16 %v1425, %v1424
        %v1850 = vpack.c.b16 %v1427, %v1426
        %v1851 = vpack.c.b16 %v1429, %v1428
        %v1852 = vpack.c.b16 %v1431, %v1430
        %v1853 = vpack.c.b16 %v1433, %v1432
        %v1854 = vpack.c.b16 %v1435, %v1434
        %v1855 = vpack.c.b16 %v1437, %v1436
        %v1856 = vpack.c.b16 %v1439, %v1438
        %v1857 = vpack.c.b16 %v1441, %v1440
        %v1858 = vpack.c.b16 %v1443, %v1442
        %v1859 = vpack.c.b16 %v1445, %v1444
        %v1860 = vpack.c.b16 %v1447, %v1446
        %v1861 = vpack.c.b16 %v1449, %v1448
        %v1862 = vpack.c.b16 %v1451, %v1450
        %v1863 = vpack.c.b16 %v1453, %v1452
        %v1864 = vpack.c.b16 %v1455, %v1454
        %v1865 = vpack.c.b16 %v1457, %v1456
        %v1866 = vpack.c.b16 %v1459, %v1458
        %v1867 = vpack.c.b16 %v1461, %v1460
        %v1868 = vpack.c.b16 %v1463, %v1462
        %v1869 = vpack.c.b16 %v1465, %v1464
        %v1870 = vpack.c.b16 %v1467, %v1466
        %v1871 = vpack.c.b16 %v1469, %v1468
        %v1872 = vpack.c.b16 %v1471, %v1470
        %v1873 = vpack.c.b16 %v1473, %v1472
        %v1874 = vpack.c.b16 %v1475, %v1474
        %v1875 = vpack.c.b16 %v1477, %v1476
        %v1876 = vpack.c.b16 %v1479, %v1478
        %v1877 = vpack.c.b16 %v1481, %v1480
        %v1878 = vpack.c.b16 %v1483, %v1482
        %v1879 = vpack.c.b16 %v1485, %v1484
        %v1880 = vpack.c.b16 %v1487, %v1486
        %v1881 = vpack.c.b16 %v1489, %v1488
        %v1882 = vpack.c.b16 %v1491, %v1490
        %v1883 = vpack.c.b16 %v1493, %v1492
        %v1884 = vpack.c.b16 %v1495, %v1494
        %v1885 = vpack.c.b16 %v1497, %v1496
        %v1886 = vpack.c.b16 %v1499, %v1498
        %v1887 = vpack.c.b16 %v1501, %v1500
        %v1888 = vpack.c.b16 %v1503, %v1502
        %v1889 = vpack.c.b16 %v1505, %v1504
        %v1890 = vpack.c.b16 %v1507, %v1506
        %v1891 = vpack.c.b16 %v1509, %v1508
        %v1892 = vpack.c.b16 %v1511, %v1510
        %v1893 = vpack.c.b16 %v1513, %v1512
        %v1894 = vpack.c.b16 %v1515, %v1514
        %v1895 = vpack.c.b16 %v1517, %v1516
        %v1896 = vpack.c.b16 %v1519, %v1518
        %v1897 = vpack.c.b16 %v1521, %v1520
        %v1898 = vpack.c.b16 %v1523, %v1522
        %v1899 = vpack.c.b16 %v1525, %v1524
        %v1900 = vpack.c.b16 %v1527, %v1526
        %v1901 = vpack.c.b16 %v1529, %v1528
        %v1902 = vpack.c.b16 %v1531, %v1530
        %v1903 = vpack.c.b16 %v1533, %v1532
        %v1904 = vpack.c.b16 %v1535, %v1534
        %v1905 = vpack.c.b16 %v1537, %v1536
        %v1906 = vpack.c.b16 %v1539, %v1538
        %v1907 = vpack.c.b16 %v1541, %v1540
        %v1908 = vpack.c.b16 %v1543, %v1542
        %v1909 = vpack.c.b16 %v1545, %v1544
        %v1910 = vpack.c.b16 %v1547, %v1546
        %v1911 = vpack.c.b16 %v1549, %v1548
        %v1912 = vpack.c.b16 %v1551, %v1550
        %v1913 = vpack.c.b16 %v1553, %v1552
        %v1914 = vpack.c.b16 %v1555, %v1554
        %v1915 = vpack.c.b16 %v1557, %v1556
        %v1916 = vpack.c.b16 %v1559, %v1558
        %v1917 = vpack.c.b16 %v1561, %v1560
        %v1918 = vpack.c.b16 %v1563, %v1562
        %v1919 = vpack.c.b16 %v1565, %v1564
        %v1920 = vpack.c.b16 %v1567, %v1566
        %v1921 = vpack.c.b16 %v1569, %v1568
        %v1922 = vpack.c.b16 %v1571, %v1570
        %v1923 = vpack.c.b16 %v1573, %v1572
        %v1924 = vpack.c.b16 %v1575, %v1574
        %v1925 = vpack.c.b16 %v1577, %v1576
        %v1926 = vpack.c.b16 %v1579, %v1578
        %v1927 = vpack.c.b16 %v1581, %v1580
        %v1928 = vpack.c.b16 %v1583, %v1582
        %v1929 = vpack.c.b16 %v1585, %v1584
        %v1930 = vpack.c.b16 %v1587, %v1586
        %v1931 = vpack.c.b16 %v1589, %v1588
        %v1932 = vpack.c.b16 %v1591, %v1590
        %v1933 = vpack.c.b16 %v1593, %v1592
        %v1934 = vpack.c.b16 %v1595, %v1594
        %v1935 = vpack.c.b16 %v1597, %v1596
        %v1936 = vpack.c.b16 %v1599, %v1598
        %v1937 = vpack.c.b16 %v1601, %v1600
        %v1938 = vpack.c.b16 %v1603, %v1602
        %v1939 = vpack.c.b16 %v1605, %v1604
        %v1940 = vpack.c.b16 %v1607, %v1606
        %v1941 = vpack.c.b16 %v1609, %v1608
        %v1942 = vpack.c.b16 %v1611, %v1610
        %v1943 = vpack.c.b16 %v1613, %v1612
        %v1944 = vpack.c.b16 %v1615, %v1614
        %v1945 = vpack.c.b16 %v1617, %v1616
        %v1946 = vpack.c.b16 %v1619, %v1618
        %v1947 = vpack.c.b16 %v1621, %v1620
        %v1948 = vpack.c.b16 %v1623, %v1622
        %v1949 = vpack.c.b16 %v1625, %v1624
        %v1950 = vpack.c.b16 %v1627, %v1626
        %v1951 = vpack.c.b16 %v1629, %v1628
        %v1952 = vpack.c.b16 %v1631, %v1630
        %v1953 = vpack.c.b16 %v1633, %v1632
        %v1954 = vpack.c.b16 %v1635, %v1634
        %v1955 = vpack.c.b16 %v1637, %v1636
        %v1956 = vpack.c.b16 %v1639, %v1638
        %v1957 = vpack.c.b16 %v1641, %v1640
        %v1958 = vpack.c.b16 %v1643, %v1642
        %v1959 = vpack.c.b16 %v1645, %v1644
        %v1960 = vpack.c.b16 %v1647, %v1646
        %v1961 = vpack.c.b16 %v1649, %v1648
        %v1962 = vpack.c.b16 %v1651, %v1650
        %v1963 = vpack.c.b16 %v1653, %v1652
        %v1964 = vpack.c.b16 %v1655, %v1654
        %v1965 = vpack.c.b16 %v1657, %v1656
        %v1966 = vpack.c.b16 %v1659, %v1658
        %v1967 = vpack.c.b16 %v1661, %v1660
        %v1968 = vpack.c.b16 %v1663, %v1662
        %v1969 = vpack.c.b16 %v1665, %v1664
        %v1970 = vpack.c.b16 %v1667, %v1666
        %v1971 = vpack.c.b16 %v1669, %v1668
        %v1972 = vpack.c.b16 %v1671, %v1670
        %v1973 = vpack.c.b16 %v1673, %v1672
        %v1974 = vpack.c.b16 %v1675, %v1674
        %v1975 = vpack.c.b16 %v1677, %v1676
        %v1976 = vpack.c.b16 %v1679, %v1678
        %v1977 = vpack.c.b16 %v1681, %v1680
        %v1978 = vpack.c.b16 %v1683, %v1682
        %v1979 = vpack.c.b16 %v1685, %v1684
        %v1980 = vpack.c.b16 %v1687, %v1686
        %v1981 = vpack.c.b16 %v1689, %v1688
        %v1982 = vpack.c.b16 %v1691, %v1690
        %v1983 = vpack.c.b16 %v1693, %v1692
        %v1984 = vpack.c.b16 %v1695, %v1694
        %v1985 = vpack.c.b16 %v1697, %v1696
        %v1986 = vpack.c.b16 %v1699, %v1698
        %v1987 = vpack.c.b16 %v1701, %v1700
        %v1988 = vpack.c.b16 %v1703, %v1702
        %v1989 = vpack.c.b16 %v1705, %v1704
        %v1990 = vpack.c.b16 %v1707, %v1706
        %v1991 = vpack.c.b16 %v1709, %v1708
        %v1992 = vpack.c.b16 %v1711, %v1710
        %v1993 = vpack.c.b16 %v1713, %v1712
        %v1994 = vpack.c.b16 %v1715, %v1714
        %v1995 = vpack.c.b16 %v1717, %v1716
        %v1996 = vpack.c.b16 %v1719, %v1718
        %v1997 = vpack.c.b16 %v1721, %v1720
        %v1998 = vpack.c.b16 %v1723, %v1722
        %v1999 = vpack.c.b16 %v1725, %v1724
        %v2000 = vpack.c.b16 %v1727, %v1726
        %v2001 = vpack.c.b16 %v1729, %v1728
        %v2002 = vpack.c.b16 %v1731, %v1730
        %v2003 = vpack.c.b16 %v1733, %v1732
        %v2004 = vpack.c.b16 %v1735, %v1734
        %v2005 = vpack.c.b16 %v1737, %v1736
        %v2006 = vpack.c.b16 %v1739, %v1738
        %v2007 = vpack.c.b16 %v1741, %v1740
        %v2008 = vpack.c.b16 %v1743, %v1742
        %v2009 = vpack.c.b16 %v1745, %v1744
        %v2010 = vpack.c.b16 %v1747, %v1746
        %v2011 = vpack.c.b16 %v1749, %v1748
        %v2012 = vpack.c.b16 %v1751, %v1750
        %v2013 = vpack.c.b16 %v1753, %v1752
        %v2014 = vpack.c.b16 %v1755, %v1754
        %v2015 = vpack.c.b16 %v1757, %v1756
        %v2016 = vpack.c.b16 %v1759, %v1758
        %v2017 = vpack.c.b16 %v1761, %v1760
        %v2018 = vpack.c.b16 %v1763, %v1762
        %v2019 = vpack.c.b16 %v1765, %v1764
        %v2020 = vpack.c.b16 %v1767, %v1766
        %v2021 = vpack.c.b16 %v1769, %v1768
        %v2022 = vpack.c.b16 %v1771, %v1770
        %v2023 = vpack.c.b16 %v1773, %v1772
        %v2024 = vpack.c.b16 %v1775, %v1774
        %v2025 = vpack.c.b16 %v1777, %v1776
        %v2026 = vpack.c.b16 %v1779, %v1778
        %v2027 = vpack.c.b16 %v1781, %v1780
        %v2028 = vpack.c.b16 %v1783, %v1782
        %v2029 = vpack.c.b16 %v1785, %v1784
        %v2030 = vpack.c.b16 %v1787, %v1786
        %v2031 = vpack.c.b16 %v1789, %v1788
        %v2032 = vpack.c.b16 %v1791, %v1790
        %v2033 = vpack.c.b16 %v1793, %v1792
        %v2034 = vpack.c.b16 %v1795, %v1794
        %v2035 = vpack.c.b16 %v1797, %v1796
        %v2036 = vpack.c.b16 %v1799, %v1798
        %v2037 = vpack.c.b16 %v1801, %v1800
        %v2038 = vpack.c.b16 %v1803, %v1802
        %v2039 = vpack.c.b16 %v1805, %v1804
        %v2040 = vpack.c.b16 %v1807, %v1806
        %v2041 = vpack.c.b16 %v1809, %v1808
        %v2042 = vpack.c.b16 %v1811, %v1810
        %v2043 = vpack.c.b16 %v1813, %v1812
        %v2044 = vpack.c.b16 %v1815, %v1814
        %v2045 = vpack.c.b16 %v1817, %v1816
        %v2046 = vpack.c.b16 %v1819, %v1818
        %v2047 = vpack.c.b16 %v1821, %v1820
        %v2048 = vpack.c.b16 %v1823, %v1822
        %v2049 = vpack.c.b16 %v1825, %v1824
        %v2050 = vpack.c.b16 %v1827, %v1826
        %v2051 = vpack.c.b16 %v1829, %v1828
        %v2052 = vpack.c.b16 %v1831, %v1830
        %v2053 = vpack.c.b16 %v1833, %v1832
        %v2054 = vpack.c.b16 %v1835, %v1834
        %v2055 = vpack.c.b16 %v1837, %v1836
        %v2056 = vpack.c.b16 %v1839, %v1838
        %v2057 = vpack.c.b16 %v1841, %v1840
        %2274 = vxpose.xlu0.c.b16.start [1/8] %v1842, 128
        %2275 = vxpose.xlu0.c.b16.cont [2/8] %v1843, 128
        %2276 = vxpose.xlu0.c.b16.cont [3/8] %v1844, 128
        %2277 = vxpose.xlu0.c.b16.cont [4/8] %v1845, 128
        %2278 = vxpose.xlu0.c.b16.cont [5/8] %v1846, 128
        %2279 = vxpose.xlu0.c.b16.cont [6/8] %v1847, 128
        %2280 = vxpose.xlu0.c.b16.cont [7/8] %v1848, 128
        %2281 = vxpose.xlu0.c.b16.end [8/8] %v1849, 128
        %v2282 = vpop.trf.xlu0
        %v2283 = vpop.trf.xlu0
        %v2284 = vpop.trf.xlu0
        %v2285 = vpop.trf.xlu0
        %v2286 = vpop.trf.xlu0
        %v2287 = vpop.trf.xlu0
        %v2288 = vpop.trf.xlu0
        %v2289 = vpop.trf.xlu0
        %2290 = vxpose.xlu0.c.b16.start [1/8] %v1850, 128
        %2291 = vxpose.xlu0.c.b16.cont [2/8] %v1851, 128
        %2292 = vxpose.xlu0.c.b16.cont [3/8] %v1852, 128
        %2293 = vxpose.xlu0.c.b16.cont [4/8] %v1853, 128
        %2294 = vxpose.xlu0.c.b16.cont [5/8] %v1854, 128
        %2295 = vxpose.xlu0.c.b16.cont [6/8] %v1855, 128
        %2296 = vxpose.xlu0.c.b16.cont [7/8] %v1856, 128
        %2297 = vxpose.xlu0.c.b16.end [8/8] %v1857, 128
        %v2298 = vpop.trf.xlu0
        %v2299 = vpop.trf.xlu0
        %v2300 = vpop.trf.xlu0
        %v2301 = vpop.trf.xlu0
        %v2302 = vpop.trf.xlu0
        %v2303 = vpop.trf.xlu0
        %v2304 = vpop.trf.xlu0
        %v2305 = vpop.trf.xlu0
        %2306 = vxpose.xlu0.c.b16.start [1/8] %v1858, 128
        %2307 = vxpose.xlu0.c.b16.cont [2/8] %v1859, 128
        %2308 = vxpose.xlu0.c.b16.cont [3/8] %v1860, 128
        %2309 = vxpose.xlu0.c.b16.cont [4/8] %v1861, 128
        %2310 = vxpose.xlu0.c.b16.cont [5/8] %v1862, 128
        %2311 = vxpose.xlu0.c.b16.cont [6/8] %v1863, 128
        %2312 = vxpose.xlu0.c.b16.cont [7/8] %v1864, 128
        %2313 = vxpose.xlu0.c.b16.end [8/8] %v1865, 128
        %v2314 = vpop.trf.xlu0
        %v2315 = vpop.trf.xlu0
        %v2316 = vpop.trf.xlu0
        %v2317 = vpop.trf.xlu0
        %v2318 = vpop.trf.xlu0
        %v2319 = vpop.trf.xlu0
        %v2320 = vpop.trf.xlu0
        %v2321 = vpop.trf.xlu0
        %2322 = vxpose.xlu0.c.b16.start [1/8] %v1866, 128
        %2323 = vxpose.xlu0.c.b16.cont [2/8] %v1867, 128
        %2324 = vxpose.xlu0.c.b16.cont [3/8] %v1868, 128
        %2325 = vxpose.xlu0.c.b16.cont [4/8] %v1869, 128
        %2326 = vxpose.xlu0.c.b16.cont [5/8] %v1870, 128
        %2327 = vxpose.xlu0.c.b16.cont [6/8] %v1871, 128
        %2328 = vxpose.xlu0.c.b16.cont [7/8] %v1872, 128
        %2329 = vxpose.xlu0.c.b16.end [8/8] %v1873, 128
        %v2330 = vpop.trf.xlu0
        %v2331 = vpop.trf.xlu0
        %v2332 = vpop.trf.xlu0
        %v2333 = vpop.trf.xlu0
        %v2334 = vpop.trf.xlu0
        %v2335 = vpop.trf.xlu0
        %v2336 = vpop.trf.xlu0
        %v2337 = vpop.trf.xlu0
        %2338 = vxpose.xlu0.c.b16.start [1/8] %v1874, 128
        %2339 = vxpose.xlu0.c.b16.cont [2/8] %v1875, 128
        %2340 = vxpose.xlu0.c.b16.cont [3/8] %v1876, 128
        %2341 = vxpose.xlu0.c.b16.cont [4/8] %v1877, 128
        %2342 = vxpose.xlu0.c.b16.cont [5/8] %v1878, 128
        %2343 = vxpose.xlu0.c.b16.cont [6/8] %v1879, 128
        %2344 = vxpose.xlu0.c.b16.cont [7/8] %v1880, 128
        %2345 = vxpose.xlu0.c.b16.end [8/8] %v1881, 128
        %v2346 = vpop.trf.xlu0
        %v2347 = vpop.trf.xlu0
        %v2348 = vpop.trf.xlu0
        %v2349 = vpop.trf.xlu0
        %v2350 = vpop.trf.xlu0
        %v2351 = vpop.trf.xlu0
        %v2352 = vpop.trf.xlu0
        %v2353 = vpop.trf.xlu0
        %2354 = vxpose.xlu0.c.b16.start [1/8] %v1882, 128
        %2355 = vxpose.xlu0.c.b16.cont [2/8] %v1883, 128
        %2356 = vxpose.xlu0.c.b16.cont [3/8] %v1884, 128
        %2357 = vxpose.xlu0.c.b16.cont [4/8] %v1885, 128
        %2358 = vxpose.xlu0.c.b16.cont [5/8] %v1886, 128
        %2359 = vxpose.xlu0.c.b16.cont [6/8] %v1887, 128
        %2360 = vxpose.xlu0.c.b16.cont [7/8] %v1888, 128
        %2361 = vxpose.xlu0.c.b16.end [8/8] %v1889, 128
        %v2362 = vpop.trf.xlu0
        %v2363 = vpop.trf.xlu0
        %v2364 = vpop.trf.xlu0
        %v2365 = vpop.trf.xlu0
        %v2366 = vpop.trf.xlu0
        %v2367 = vpop.trf.xlu0
        %v2368 = vpop.trf.xlu0
        %v2369 = vpop.trf.xlu0
        %2370 = vxpose.xlu0.c.b16.start [1/8] %v1890, 128
        %2371 = vxpose.xlu0.c.b16.cont [2/8] %v1891, 128
        %2372 = vxpose.xlu0.c.b16.cont [3/8] %v1892, 128
        %2373 = vxpose.xlu0.c.b16.cont [4/8] %v1893, 128
        %2374 = vxpose.xlu0.c.b16.cont [5/8] %v1894, 128
        %2375 = vxpose.xlu0.c.b16.cont [6/8] %v1895, 128
        %2376 = vxpose.xlu0.c.b16.cont [7/8] %v1896, 128
        %2377 = vxpose.xlu0.c.b16.end [8/8] %v1897, 128
        %v2378 = vpop.trf.xlu0
        %v2379 = vpop.trf.xlu0
        %v2380 = vpop.trf.xlu0
        %v2381 = vpop.trf.xlu0
        %v2382 = vpop.trf.xlu0
        %v2383 = vpop.trf.xlu0
        %v2384 = vpop.trf.xlu0
        %v2385 = vpop.trf.xlu0
        %2386 = vxpose.xlu0.c.b16.start [1/8] %v1898, 128
        %2387 = vxpose.xlu0.c.b16.cont [2/8] %v1899, 128
        %2388 = vxpose.xlu0.c.b16.cont [3/8] %v1900, 128
        %2389 = vxpose.xlu0.c.b16.cont [4/8] %v1901, 128
        %2390 = vxpose.xlu0.c.b16.cont [5/8] %v1902, 128
        %2391 = vxpose.xlu0.c.b16.cont [6/8] %v1903, 128
        %2392 = vxpose.xlu0.c.b16.cont [7/8] %v1904, 128
        %2393 = vxpose.xlu0.c.b16.end [8/8] %v1905, 128
        %v2394 = vpop.trf.xlu0
        %v2395 = vpop.trf.xlu0
        %v2396 = vpop.trf.xlu0
        %v2397 = vpop.trf.xlu0
        %v2398 = vpop.trf.xlu0
        %v2399 = vpop.trf.xlu0
        %v2400 = vpop.trf.xlu0
        %v2401 = vpop.trf.xlu0
        %2402 = vxpose.xlu0.c.b16.start [1/8] %v1906, 128
        %2403 = vxpose.xlu0.c.b16.cont [2/8] %v1907, 128
        %2404 = vxpose.xlu0.c.b16.cont [3/8] %v1908, 128
        %2405 = vxpose.xlu0.c.b16.cont [4/8] %v1909, 128
        %2406 = vxpose.xlu0.c.b16.cont [5/8] %v1910, 128
        %2407 = vxpose.xlu0.c.b16.cont [6/8] %v1911, 128
        %2408 = vxpose.xlu0.c.b16.cont [7/8] %v1912, 128
        %2409 = vxpose.xlu0.c.b16.end [8/8] %v1913, 128
        %v2410 = vpop.trf.xlu0
        %v2411 = vpop.trf.xlu0
        %v2412 = vpop.trf.xlu0
        %v2413 = vpop.trf.xlu0
        %v2414 = vpop.trf.xlu0
        %v2415 = vpop.trf.xlu0
        %v2416 = vpop.trf.xlu0
        %v2417 = vpop.trf.xlu0
        %2418 = vxpose.xlu0.c.b16.start [1/8] %v1914, 128
        %2419 = vxpose.xlu0.c.b16.cont [2/8] %v1915, 128
        %2420 = vxpose.xlu0.c.b16.cont [3/8] %v1916, 128
        %2421 = vxpose.xlu0.c.b16.cont [4/8] %v1917, 128
        %2422 = vxpose.xlu0.c.b16.cont [5/8] %v1918, 128
        %2423 = vxpose.xlu0.c.b16.cont [6/8] %v1919, 128
        %2424 = vxpose.xlu0.c.b16.cont [7/8] %v1920, 128
        %2425 = vxpose.xlu0.c.b16.end [8/8] %v1921, 128
        %v2426 = vpop.trf.xlu0
        %v2427 = vpop.trf.xlu0
        %v2428 = vpop.trf.xlu0
        %v2429 = vpop.trf.xlu0
        %v2430 = vpop.trf.xlu0
        %v2431 = vpop.trf.xlu0
        %v2432 = vpop.trf.xlu0
        %v2433 = vpop.trf.xlu0
        %2434 = vxpose.xlu0.c.b16.start [1/8] %v1922, 128
        %2435 = vxpose.xlu0.c.b16.cont [2/8] %v1923, 128
        %2436 = vxpose.xlu0.c.b16.cont [3/8] %v1924, 128
        %2437 = vxpose.xlu0.c.b16.cont [4/8] %v1925, 128
        %2438 = vxpose.xlu0.c.b16.cont [5/8] %v1926, 128
        %2439 = vxpose.xlu0.c.b16.cont [6/8] %v1927, 128
        %2440 = vxpose.xlu0.c.b16.cont [7/8] %v1928, 128
        %2441 = vxpose.xlu0.c.b16.end [8/8] %v1929, 128
        %v2442 = vpop.trf.xlu0
        %v2443 = vpop.trf.xlu0
        %v2444 = vpop.trf.xlu0
        %v2445 = vpop.trf.xlu0
        %v2446 = vpop.trf.xlu0
        %v2447 = vpop.trf.xlu0
        %v2448 = vpop.trf.xlu0
        %v2449 = vpop.trf.xlu0
        %2450 = vxpose.xlu0.c.b16.start [1/8] %v1930, 128
        %2451 = vxpose.xlu0.c.b16.cont [2/8] %v1931, 128
        %2452 = vxpose.xlu0.c.b16.cont [3/8] %v1932, 128
        %2453 = vxpose.xlu0.c.b16.cont [4/8] %v1933, 128
        %2454 = vxpose.xlu0.c.b16.cont [5/8] %v1934, 128
        %2455 = vxpose.xlu0.c.b16.cont [6/8] %v1935, 128
        %2456 = vxpose.xlu0.c.b16.cont [7/8] %v1936, 128
        %2457 = vxpose.xlu0.c.b16.end [8/8] %v1937, 128
        %v2458 = vpop.trf.xlu0
        %v2459 = vpop.trf.xlu0
        %v2460 = vpop.trf.xlu0
        %v2461 = vpop.trf.xlu0
        %v2462 = vpop.trf.xlu0
        %v2463 = vpop.trf.xlu0
        %v2464 = vpop.trf.xlu0
        %v2465 = vpop.trf.xlu0
        %2466 = vxpose.xlu0.c.b16.start [1/8] %v1938, 128
        %2467 = vxpose.xlu0.c.b16.cont [2/8] %v1939, 128
        %2468 = vxpose.xlu0.c.b16.cont [3/8] %v1940, 128
        %2469 = vxpose.xlu0.c.b16.cont [4/8] %v1941, 128
        %2470 = vxpose.xlu0.c.b16.cont [5/8] %v1942, 128
        %2471 = vxpose.xlu0.c.b16.cont [6/8] %v1943, 128
        %2472 = vxpose.xlu0.c.b16.cont [7/8] %v1944, 128
        %2473 = vxpose.xlu0.c.b16.end [8/8] %v1945, 128
        %v2474 = vpop.trf.xlu0
        %v2475 = vpop.trf.xlu0
        %v2476 = vpop.trf.xlu0
        %v2477 = vpop.trf.xlu0
        %v2478 = vpop.trf.xlu0
        %v2479 = vpop.trf.xlu0
        %v2480 = vpop.trf.xlu0
        %v2481 = vpop.trf.xlu0
        %2482 = vxpose.xlu0.c.b16.start [1/8] %v1946, 128
        %2483 = vxpose.xlu0.c.b16.cont [2/8] %v1947, 128
        %2484 = vxpose.xlu0.c.b16.cont [3/8] %v1948, 128
        %2485 = vxpose.xlu0.c.b16.cont [4/8] %v1949, 128
        %2486 = vxpose.xlu0.c.b16.cont [5/8] %v1950, 128
        %2487 = vxpose.xlu0.c.b16.cont [6/8] %v1951, 128
        %2488 = vxpose.xlu0.c.b16.cont [7/8] %v1952, 128
        %2489 = vxpose.xlu0.c.b16.end [8/8] %v1953, 128
        %v2490 = vpop.trf.xlu0
        %v2491 = vpop.trf.xlu0
        %v2492 = vpop.trf.xlu0
        %v2493 = vpop.trf.xlu0
        %v2494 = vpop.trf.xlu0
        %v2495 = vpop.trf.xlu0
        %v2496 = vpop.trf.xlu0
        %v2497 = vpop.trf.xlu0
        %2498 = vxpose.xlu0.c.b16.start [1/8] %v1954, 128
        %2499 = vxpose.xlu0.c.b16.cont [2/8] %v1955, 128
        %2500 = vxpose.xlu0.c.b16.cont [3/8] %v1956, 128
        %2501 = vxpose.xlu0.c.b16.cont [4/8] %v1957, 128
        %2502 = vxpose.xlu0.c.b16.cont [5/8] %v1958, 128
        %2503 = vxpose.xlu0.c.b16.cont [6/8] %v1959, 128
        %2504 = vxpose.xlu0.c.b16.cont [7/8] %v1960, 128
        %2505 = vxpose.xlu0.c.b16.end [8/8] %v1961, 128
        %v2506 = vpop.trf.xlu0
        %v2507 = vpop.trf.xlu0
        %v2508 = vpop.trf.xlu0
        %v2509 = vpop.trf.xlu0
        %v2510 = vpop.trf.xlu0
        %v2511 = vpop.trf.xlu0
        %v2512 = vpop.trf.xlu0
        %v2513 = vpop.trf.xlu0
        %2514 = vxpose.xlu0.c.b16.start [1/8] %v1962, 128
        %2515 = vxpose.xlu0.c.b16.cont [2/8] %v1963, 128
        %2516 = vxpose.xlu0.c.b16.cont [3/8] %v1964, 128
        %2517 = vxpose.xlu0.c.b16.cont [4/8] %v1965, 128
        %2518 = vxpose.xlu0.c.b16.cont [5/8] %v1966, 128
        %2519 = vxpose.xlu0.c.b16.cont [6/8] %v1967, 128
        %2520 = vxpose.xlu0.c.b16.cont [7/8] %v1968, 128
        %2521 = vxpose.xlu0.c.b16.end [8/8] %v1969, 128
        %v2522 = vpop.trf.xlu0
        %v2523 = vpop.trf.xlu0
        %v2524 = vpop.trf.xlu0
        %v2525 = vpop.trf.xlu0
        %v2526 = vpop.trf.xlu0
        %v2527 = vpop.trf.xlu0
        %v2528 = vpop.trf.xlu0
        %v2529 = vpop.trf.xlu0
        %2530 = vxpose.xlu0.c.b16.start [1/8] %v1970, 128
        %2531 = vxpose.xlu0.c.b16.cont [2/8] %v1971, 128
        %2532 = vxpose.xlu0.c.b16.cont [3/8] %v1972, 128
        %2533 = vxpose.xlu0.c.b16.cont [4/8] %v1973, 128
        %2534 = vxpose.xlu0.c.b16.cont [5/8] %v1974, 128
        %2535 = vxpose.xlu0.c.b16.cont [6/8] %v1975, 128
        %2536 = vxpose.xlu0.c.b16.cont [7/8] %v1976, 128
        %2537 = vxpose.xlu0.c.b16.end [8/8] %v1977, 128
        %v2538 = vpop.trf.xlu0
        %v2539 = vpop.trf.xlu0
        %v2540 = vpop.trf.xlu0
        %v2541 = vpop.trf.xlu0
        %v2542 = vpop.trf.xlu0
        %v2543 = vpop.trf.xlu0
        %v2544 = vpop.trf.xlu0
        %v2545 = vpop.trf.xlu0
        %2546 = vxpose.xlu0.c.b16.start [1/8] %v1978, 128
        %2547 = vxpose.xlu0.c.b16.cont [2/8] %v1979, 128
        %2548 = vxpose.xlu0.c.b16.cont [3/8] %v1980, 128
        %2549 = vxpose.xlu0.c.b16.cont [4/8] %v1981, 128
        %2550 = vxpose.xlu0.c.b16.cont [5/8] %v1982, 128
        %2551 = vxpose.xlu0.c.b16.cont [6/8] %v1983, 128
        %2552 = vxpose.xlu0.c.b16.cont [7/8] %v1984, 128
        %2553 = vxpose.xlu0.c.b16.end [8/8] %v1985, 128
        %v2554 = vpop.trf.xlu0
        %v2555 = vpop.trf.xlu0
        %v2556 = vpop.trf.xlu0
        %v2557 = vpop.trf.xlu0
        %v2558 = vpop.trf.xlu0
        %v2559 = vpop.trf.xlu0
        %v2560 = vpop.trf.xlu0
        %v2561 = vpop.trf.xlu0
        %2562 = vxpose.xlu0.c.b16.start [1/8] %v1986, 128
        %2563 = vxpose.xlu0.c.b16.cont [2/8] %v1987, 128
        %2564 = vxpose.xlu0.c.b16.cont [3/8] %v1988, 128
        %2565 = vxpose.xlu0.c.b16.cont [4/8] %v1989, 128
        %2566 = vxpose.xlu0.c.b16.cont [5/8] %v1990, 128
        %2567 = vxpose.xlu0.c.b16.cont [6/8] %v1991, 128
        %2568 = vxpose.xlu0.c.b16.cont [7/8] %v1992, 128
        %2569 = vxpose.xlu0.c.b16.end [8/8] %v1993, 128
        %v2570 = vpop.trf.xlu0
        %v2571 = vpop.trf.xlu0
        %v2572 = vpop.trf.xlu0
        %v2573 = vpop.trf.xlu0
        %v2574 = vpop.trf.xlu0
        %v2575 = vpop.trf.xlu0
        %v2576 = vpop.trf.xlu0
        %v2577 = vpop.trf.xlu0
        %2578 = vxpose.xlu0.c.b16.start [1/8] %v1994, 128
        %2579 = vxpose.xlu0.c.b16.cont [2/8] %v1995, 128
        %2580 = vxpose.xlu0.c.b16.cont [3/8] %v1996, 128
        %2581 = vxpose.xlu0.c.b16.cont [4/8] %v1997, 128
        %2582 = vxpose.xlu0.c.b16.cont [5/8] %v1998, 128
        %2583 = vxpose.xlu0.c.b16.cont [6/8] %v1999, 128
        %2584 = vxpose.xlu0.c.b16.cont [7/8] %v2000, 128
        %2585 = vxpose.xlu0.c.b16.end [8/8] %v2001, 128
        %v2586 = vpop.trf.xlu0
        %v2587 = vpop.trf.xlu0
        %v2588 = vpop.trf.xlu0
        %v2589 = vpop.trf.xlu0
        %v2590 = vpop.trf.xlu0
        %v2591 = vpop.trf.xlu0
        %v2592 = vpop.trf.xlu0
        %v2593 = vpop.trf.xlu0
        %2594 = vxpose.xlu0.c.b16.start [1/8] %v2002, 128
        %2595 = vxpose.xlu0.c.b16.cont [2/8] %v2003, 128
        %2596 = vxpose.xlu0.c.b16.cont [3/8] %v2004, 128
        %2597 = vxpose.xlu0.c.b16.cont [4/8] %v2005, 128
        %2598 = vxpose.xlu0.c.b16.cont [5/8] %v2006, 128
        %2599 = vxpose.xlu0.c.b16.cont [6/8] %v2007, 128
        %2600 = vxpose.xlu0.c.b16.cont [7/8] %v2008, 128
        %2601 = vxpose.xlu0.c.b16.end [8/8] %v2009, 128
        %v2602 = vpop.trf.xlu0
        %v2603 = vpop.trf.xlu0
        %v2604 = vpop.trf.xlu0
        %v2605 = vpop.trf.xlu0
        %v2606 = vpop.trf.xlu0
        %v2607 = vpop.trf.xlu0
        %v2608 = vpop.trf.xlu0
        %v2609 = vpop.trf.xlu0
        %2610 = vxpose.xlu0.c.b16.start [1/8] %v2010, 128
        %2611 = vxpose.xlu0.c.b16.cont [2/8] %v2011, 128
        %2612 = vxpose.xlu0.c.b16.cont [3/8] %v2012, 128
        %2613 = vxpose.xlu0.c.b16.cont [4/8] %v2013, 128
        %2614 = vxpose.xlu0.c.b16.cont [5/8] %v2014, 128
        %2615 = vxpose.xlu0.c.b16.cont [6/8] %v2015, 128
        %2616 = vxpose.xlu0.c.b16.cont [7/8] %v2016, 128
        %2617 = vxpose.xlu0.c.b16.end [8/8] %v2017, 128
        %v2618 = vpop.trf.xlu0
        %v2619 = vpop.trf.xlu0
        %v2620 = vpop.trf.xlu0
        %v2621 = vpop.trf.xlu0
        %v2622 = vpop.trf.xlu0
        %v2623 = vpop.trf.xlu0
        %v2624 = vpop.trf.xlu0
        %v2625 = vpop.trf.xlu0
        %2626 = vxpose.xlu0.c.b16.start [1/8] %v2018, 128
        %2627 = vxpose.xlu0.c.b16.cont [2/8] %v2019, 128
        %2628 = vxpose.xlu0.c.b16.cont [3/8] %v2020, 128
        %2629 = vxpose.xlu0.c.b16.cont [4/8] %v2021, 128
        %2630 = vxpose.xlu0.c.b16.cont [5/8] %v2022, 128
        %2631 = vxpose.xlu0.c.b16.cont [6/8] %v2023, 128
        %2632 = vxpose.xlu0.c.b16.cont [7/8] %v2024, 128
        %2633 = vxpose.xlu0.c.b16.end [8/8] %v2025, 128
        %v2634 = vpop.trf.xlu0
        %v2635 = vpop.trf.xlu0
        %v2636 = vpop.trf.xlu0
        %v2637 = vpop.trf.xlu0
        %v2638 = vpop.trf.xlu0
        %v2639 = vpop.trf.xlu0
        %v2640 = vpop.trf.xlu0
        %v2641 = vpop.trf.xlu0
        %2642 = vxpose.xlu0.c.b16.start [1/8] %v2026, 128
        %2643 = vxpose.xlu0.c.b16.cont [2/8] %v2027, 128
        %2644 = vxpose.xlu0.c.b16.cont [3/8] %v2028, 128
        %2645 = vxpose.xlu0.c.b16.cont [4/8] %v2029, 128
        %2646 = vxpose.xlu0.c.b16.cont [5/8] %v2030, 128
        %2647 = vxpose.xlu0.c.b16.cont [6/8] %v2031, 128
        %2648 = vxpose.xlu0.c.b16.cont [7/8] %v2032, 128
        %2649 = vxpose.xlu0.c.b16.end [8/8] %v2033, 128
        %v2650 = vpop.trf.xlu0
        %v2651 = vpop.trf.xlu0
        %v2652 = vpop.trf.xlu0
        %v2653 = vpop.trf.xlu0
        %v2654 = vpop.trf.xlu0
        %v2655 = vpop.trf.xlu0
        %v2656 = vpop.trf.xlu0
        %v2657 = vpop.trf.xlu0
        %2658 = vxpose.xlu0.c.b16.start [1/8] %v2034, 128
        %2659 = vxpose.xlu0.c.b16.cont [2/8] %v2035, 128
        %2660 = vxpose.xlu0.c.b16.cont [3/8] %v2036, 128
        %2661 = vxpose.xlu0.c.b16.cont [4/8] %v2037, 128
        %2662 = vxpose.xlu0.c.b16.cont [5/8] %v2038, 128
        %2663 = vxpose.xlu0.c.b16.cont [6/8] %v2039, 128
        %2664 = vxpose.xlu0.c.b16.cont [7/8] %v2040, 128
        %2665 = vxpose.xlu0.c.b16.end [8/8] %v2041, 128
        %v2666 = vpop.trf.xlu0
        %v2667 = vpop.trf.xlu0
        %v2668 = vpop.trf.xlu0
        %v2669 = vpop.trf.xlu0
        %v2670 = vpop.trf.xlu0
        %v2671 = vpop.trf.xlu0
        %v2672 = vpop.trf.xlu0
        %v2673 = vpop.trf.xlu0
        %2674 = vxpose.xlu0.c.b16.start [1/8] %v2042, 128
        %2675 = vxpose.xlu0.c.b16.cont [2/8] %v2043, 128
        %2676 = vxpose.xlu0.c.b16.cont [3/8] %v2044, 128
        %2677 = vxpose.xlu0.c.b16.cont [4/8] %v2045, 128
        %2678 = vxpose.xlu0.c.b16.cont [5/8] %v2046, 128
        %2679 = vxpose.xlu0.c.b16.cont [6/8] %v2047, 128
        %2680 = vxpose.xlu0.c.b16.cont [7/8] %v2048, 128
        %2681 = vxpose.xlu0.c.b16.end [8/8] %v2049, 128
        %v2682 = vpop.trf.xlu0
        %v2683 = vpop.trf.xlu0
        %v2684 = vpop.trf.xlu0
        %v2685 = vpop.trf.xlu0
        %v2686 = vpop.trf.xlu0
        %v2687 = vpop.trf.xlu0
        %v2688 = vpop.trf.xlu0
        %v2689 = vpop.trf.xlu0
        %2690 = vxpose.xlu0.c.b16.start [1/8] %v2050, 128
        %2691 = vxpose.xlu0.c.b16.cont [2/8] %v2051, 128
        %2692 = vxpose.xlu0.c.b16.cont [3/8] %v2052, 128
        %2693 = vxpose.xlu0.c.b16.cont [4/8] %v2053, 128
        %2694 = vxpose.xlu0.c.b16.cont [5/8] %v2054, 128
        %2695 = vxpose.xlu0.c.b16.cont [6/8] %v2055, 128
        %2696 = vxpose.xlu0.c.b16.cont [7/8] %v2056, 128
        %2697 = vxpose.xlu0.c.b16.end [8/8] %v2057, 128
        %v2698 = vpop.trf.xlu0
        %v2699 = vpop.trf.xlu0
        %v2700 = vpop.trf.xlu0
        %v2701 = vpop.trf.xlu0
        %v2702 = vpop.trf.xlu0
        %v2703 = vpop.trf.xlu0
        %v2704 = vpop.trf.xlu0
        %v2705 = vpop.trf.xlu0
        %v2958 = vunpack.c.l.b16 %v726
        %v2959 = vunpack.c.h.b16 %v726
        %v2960 = vunpack.c.l.b16 %v727
        %v2961 = vunpack.c.h.b16 %v727
        %v2962 = vunpack.c.l.b16 %v728
        %v2963 = vunpack.c.h.b16 %v728
        %v2964 = vunpack.c.l.b16 %v729
        %v2965 = vunpack.c.h.b16 %v729
        %v2966 = vunpack.c.l.b16 %v730
        %v2967 = vunpack.c.h.b16 %v730
        %v2968 = vunpack.c.l.b16 %v731
        %v2969 = vunpack.c.h.b16 %v731
        %v2970 = vunpack.c.l.b16 %v732
        %v2971 = vunpack.c.h.b16 %v732
        %v2972 = vunpack.c.l.b16 %v733
        %v2973 = vunpack.c.h.b16 %v733
        %v2974 = vunpack.c.l.b16 %v734
        %v2975 = vunpack.c.h.b16 %v734
        %v2976 = vunpack.c.l.b16 %v735
        %v2977 = vunpack.c.h.b16 %v735
        %v2978 = vunpack.c.l.b16 %v736
        %v2979 = vunpack.c.h.b16 %v736
        %v2980 = vunpack.c.l.b16 %v737
        %v2981 = vunpack.c.h.b16 %v737
        %v2982 = vunpack.c.l.b16 %v738
        %v2983 = vunpack.c.h.b16 %v738
        %v2984 = vunpack.c.l.b16 %v739
        %v2985 = vunpack.c.l.b16 %v740
        %v2986 = vunpack.c.h.b16 %v740
        %v2987 = vunpack.c.l.b16 %v741
        %v2988 = vunpack.c.h.b16 %v741
        %v2989 = vunpack.c.l.b16 %v742
        %v2990 = vunpack.c.h.b16 %v742
        %v2991 = vunpack.c.l.b16 %v743
        %v2992 = vunpack.c.h.b16 %v743
        %v2993 = vunpack.c.l.b16 %v744
        %v2994 = vunpack.c.h.b16 %v744
        %v2995 = vunpack.c.l.b16 %v745
        %v2996 = vunpack.c.h.b16 %v745
        %v2997 = vunpack.c.l.b16 %v746
        %v2998 = vunpack.c.h.b16 %v746
        %v2999 = vunpack.c.l.b16 %v747
        %v3000 = vunpack.c.h.b16 %v747
        %v3001 = vunpack.c.l.b16 %v748
        %v3002 = vunpack.c.h.b16 %v748
        %v3003 = vunpack.c.l.b16 %v749
        %v3004 = vunpack.c.h.b16 %v749
        %v3005 = vunpack.c.l.b16 %v750
        %v3006 = vunpack.c.h.b16 %v750
        %v3007 = vunpack.c.l.b16 %v751
        %v3008 = vunpack.c.h.b16 %v751
        %v3009 = vunpack.c.l.b16 %v752
        %v3010 = vunpack.c.h.b16 %v752
        %v3011 = vunpack.c.l.b16 %v753
        %v3012 = vunpack.c.l.b16 %v754
        %v3013 = vunpack.c.h.b16 %v754
        %v3014 = vunpack.c.l.b16 %v755
        %v3015 = vunpack.c.h.b16 %v755
        %v3016 = vunpack.c.l.b16 %v756
        %v3017 = vunpack.c.h.b16 %v756
        %v3018 = vunpack.c.l.b16 %v757
        %v3019 = vunpack.c.h.b16 %v757
        %v3020 = vunpack.c.l.b16 %v758
        %v3021 = vunpack.c.h.b16 %v758
        %v3022 = vunpack.c.l.b16 %v759
        %v3023 = vunpack.c.h.b16 %v759
        %v3024 = vunpack.c.l.b16 %v760
        %v3025 = vunpack.c.h.b16 %v760
        %v3026 = vunpack.c.l.b16 %v761
        %v3027 = vunpack.c.h.b16 %v761
        %v3028 = vunpack.c.l.b16 %v762
        %v3029 = vunpack.c.h.b16 %v762
        %v3030 = vunpack.c.l.b16 %v763
        %v3031 = vunpack.c.h.b16 %v763
        %v3032 = vunpack.c.l.b16 %v764
        %v3033 = vunpack.c.h.b16 %v764
        %v3034 = vunpack.c.l.b16 %v765
        %v3035 = vunpack.c.h.b16 %v765
        %v3036 = vunpack.c.l.b16 %v766
        %v3037 = vunpack.c.h.b16 %v766
        %v3038 = vunpack.c.l.b16 %v767
        %v3039 = vunpack.c.l.b16 %v768
        %v3040 = vunpack.c.h.b16 %v768
        %v3041 = vunpack.c.l.b16 %v769
        %v3042 = vunpack.c.h.b16 %v769
        %v3043 = vunpack.c.l.b16 %v770
        %v3044 = vunpack.c.h.b16 %v770
        %v3045 = vunpack.c.l.b16 %v771
        %v3046 = vunpack.c.h.b16 %v771
        %v3047 = vunpack.c.l.b16 %v772
        %v3048 = vunpack.c.h.b16 %v772
        %v3049 = vunpack.c.l.b16 %v773
        %v3050 = vunpack.c.h.b16 %v773
        %v3051 = vunpack.c.l.b16 %v774
        %v3052 = vunpack.c.h.b16 %v774
        %v3053 = vunpack.c.l.b16 %v775
        %v3054 = vunpack.c.h.b16 %v775
        %v3055 = vunpack.c.l.b16 %v776
        %v3056 = vunpack.c.h.b16 %v776
        %v3057 = vunpack.c.l.b16 %v777
        %v3058 = vunpack.c.h.b16 %v777
        %v3059 = vunpack.c.l.b16 %v778
        %v3060 = vunpack.c.h.b16 %v778
        %v3061 = vunpack.c.l.b16 %v779
        %v3062 = vunpack.c.h.b16 %v779
        %v3063 = vunpack.c.l.b16 %v780
        %v3064 = vunpack.c.h.b16 %v780
        %v3065 = vunpack.c.l.b16 %v781
        %v3066 = vunpack.c.l.b16 %v782
        %v3067 = vunpack.c.h.b16 %v782
        %v3068 = vunpack.c.l.b16 %v783
        %v3069 = vunpack.c.h.b16 %v783
        %v3070 = vunpack.c.l.b16 %v784
        %v3071 = vunpack.c.h.b16 %v784
        %v3072 = vunpack.c.l.b16 %v785
        %v3073 = vunpack.c.h.b16 %v785
        %v3074 = vunpack.c.l.b16 %v786
        %v3075 = vunpack.c.h.b16 %v786
        %v3076 = vunpack.c.l.b16 %v787
        %v3077 = vunpack.c.h.b16 %v787
        %v3078 = vunpack.c.l.b16 %v788
        %v3079 = vunpack.c.h.b16 %v788
        %v3080 = vunpack.c.l.b16 %v789
        %v3081 = vunpack.c.h.b16 %v789
        %v3082 = vunpack.c.l.b16 %v790
        %v3083 = vunpack.c.h.b16 %v790
        %v3084 = vunpack.c.l.b16 %v791
        %v3085 = vunpack.c.h.b16 %v791
        %v3086 = vunpack.c.l.b16 %v792
        %v3087 = vunpack.c.h.b16 %v792
        %v3088 = vunpack.c.l.b16 %v793
        %v3089 = vunpack.c.h.b16 %v793
        %v3090 = vunpack.c.l.b16 %v794
        %v3091 = vunpack.c.h.b16 %v794
        %v3092 = vunpack.c.l.b16 %v795
        %v3093 = vunpack.c.l.b16 %v796
        %v3094 = vunpack.c.h.b16 %v796
        %v3095 = vunpack.c.l.b16 %v797
        %v3096 = vunpack.c.h.b16 %v797
        %v3097 = vunpack.c.l.b16 %v798
        %v3098 = vunpack.c.h.b16 %v798
        %v3099 = vunpack.c.l.b16 %v799
        %v3100 = vunpack.c.h.b16 %v799
        %v3101 = vunpack.c.l.b16 %v800
        %v3102 = vunpack.c.h.b16 %v800
        %v3103 = vunpack.c.l.b16 %v801
        %v3104 = vunpack.c.h.b16 %v801
        %v3105 = vunpack.c.l.b16 %v802
        %v3106 = vunpack.c.h.b16 %v802
        %v3107 = vunpack.c.l.b16 %v803
        %v3108 = vunpack.c.h.b16 %v803
        %v3109 = vunpack.c.l.b16 %v804
        %v3110 = vunpack.c.h.b16 %v804
        %v3111 = vunpack.c.l.b16 %v805
        %v3112 = vunpack.c.h.b16 %v805
        %v3113 = vunpack.c.l.b16 %v806
        %v3114 = vunpack.c.h.b16 %v806
        %v3115 = vunpack.c.l.b16 %v807
        %v3116 = vunpack.c.h.b16 %v807
        %v3117 = vunpack.c.l.b16 %v808
        %v3118 = vunpack.c.h.b16 %v808
        %v3119 = vunpack.c.l.b16 %v809
        %v3120 = vunpack.c.l.b16 %v810
        %v3121 = vunpack.c.h.b16 %v810
        %v3122 = vunpack.c.l.b16 %v811
        %v3123 = vunpack.c.h.b16 %v811
        %v3124 = vunpack.c.l.b16 %v812
        %v3125 = vunpack.c.h.b16 %v812
        %v3126 = vunpack.c.l.b16 %v813
        %v3127 = vunpack.c.h.b16 %v813
        %v3128 = vunpack.c.l.b16 %v814
        %v3129 = vunpack.c.h.b16 %v814
        %v3130 = vunpack.c.l.b16 %v815
        %v3131 = vunpack.c.h.b16 %v815
        %v3132 = vunpack.c.l.b16 %v816
        %v3133 = vunpack.c.h.b16 %v816
        %v3134 = vunpack.c.l.b16 %v817
        %v3135 = vunpack.c.h.b16 %v817
        %v3136 = vunpack.c.l.b16 %v818
        %v3137 = vunpack.c.h.b16 %v818
        %v3138 = vunpack.c.l.b16 %v819
        %v3139 = vunpack.c.h.b16 %v819
        %v3140 = vunpack.c.l.b16 %v820
        %v3141 = vunpack.c.h.b16 %v820
        %v3142 = vunpack.c.l.b16 %v821
        %v3143 = vunpack.c.h.b16 %v821
        %v3144 = vunpack.c.l.b16 %v822
        %v3145 = vunpack.c.h.b16 %v822
        %v3146 = vunpack.c.l.b16 %v823
        %v3147 = vunpack.c.l.b16 %v824
        %v3148 = vunpack.c.h.b16 %v824
        %v3149 = vunpack.c.l.b16 %v825
        %v3150 = vunpack.c.h.b16 %v825
        %v3151 = vunpack.c.l.b16 %v826
        %v3152 = vunpack.c.h.b16 %v826
        %v3153 = vunpack.c.l.b16 %v827
        %v3154 = vunpack.c.h.b16 %v827
        %v3155 = vunpack.c.l.b16 %v828
        %v3156 = vunpack.c.h.b16 %v828
        %v3157 = vunpack.c.l.b16 %v829
        %v3158 = vunpack.c.h.b16 %v829
        %v3159 = vunpack.c.l.b16 %v830
        %v3160 = vunpack.c.h.b16 %v830
        %v3161 = vunpack.c.l.b16 %v831
        %v3162 = vunpack.c.h.b16 %v831
        %v3163 = vunpack.c.l.b16 %v832
        %v3164 = vunpack.c.h.b16 %v832
        %v3165 = vunpack.c.l.b16 %v833
        %v3166 = vunpack.c.h.b16 %v833
        %v3167 = vunpack.c.l.b16 %v834
        %v3168 = vunpack.c.h.b16 %v834
        %v3169 = vunpack.c.l.b16 %v835
        %v3170 = vunpack.c.h.b16 %v835
        %v3171 = vunpack.c.l.b16 %v836
        %v3172 = vunpack.c.h.b16 %v836
        %v3173 = vunpack.c.l.b16 %v837
        %v3174 = vunpack.c.l.b16 %v838
        %v3175 = vunpack.c.h.b16 %v838
        %v3176 = vunpack.c.l.b16 %v839
        %v3177 = vunpack.c.h.b16 %v839
        %v3178 = vunpack.c.l.b16 %v840
        %v3179 = vunpack.c.h.b16 %v840
        %v3180 = vunpack.c.l.b16 %v841
        %v3181 = vunpack.c.h.b16 %v841
        %v3182 = vunpack.c.l.b16 %v842
        %v3183 = vunpack.c.h.b16 %v842
        %v3184 = vunpack.c.l.b16 %v843
        %v3185 = vunpack.c.h.b16 %v843
        %v3186 = vunpack.c.l.b16 %v844
        %v3187 = vunpack.c.h.b16 %v844
        %v3188 = vunpack.c.l.b16 %v845
        %v3189 = vunpack.c.h.b16 %v845
        %v3190 = vunpack.c.l.b16 %v846
        %v3191 = vunpack.c.h.b16 %v846
        %v3192 = vunpack.c.l.b16 %v847
        %v3193 = vunpack.c.h.b16 %v847
        %v3194 = vunpack.c.l.b16 %v848
        %v3195 = vunpack.c.h.b16 %v848
        %v3196 = vunpack.c.l.b16 %v849
        %v3197 = vunpack.c.h.b16 %v849
        %v3198 = vunpack.c.l.b16 %v850
        %v3199 = vunpack.c.h.b16 %v850
        %v3200 = vunpack.c.l.b16 %v851
        %v3201 = vunpack.c.l.b16 %v852
        %v3202 = vunpack.c.h.b16 %v852
        %v3203 = vunpack.c.l.b16 %v853
        %v3204 = vunpack.c.h.b16 %v853
        %v3205 = vunpack.c.l.b16 %v854
        %v3206 = vunpack.c.h.b16 %v854
        %v3207 = vunpack.c.l.b16 %v855
        %v3208 = vunpack.c.h.b16 %v855
        %v3209 = vunpack.c.l.b16 %v856
        %v3210 = vunpack.c.h.b16 %v856
        %v3211 = vunpack.c.l.b16 %v857
        %v3212 = vunpack.c.h.b16 %v857
        %v3213 = vunpack.c.l.b16 %v858
        %v3214 = vunpack.c.h.b16 %v858
        %v3215 = vunpack.c.l.b16 %v859
        %v3216 = vunpack.c.h.b16 %v859
        %v3217 = vunpack.c.l.b16 %v860
        %v3218 = vunpack.c.h.b16 %v860
        %v3219 = vunpack.c.l.b16 %v861
        %v3220 = vunpack.c.h.b16 %v861
        %v3221 = vunpack.c.l.b16 %v862
        %v3222 = vunpack.c.h.b16 %v862
        %v3223 = vunpack.c.l.b16 %v863
        %v3224 = vunpack.c.h.b16 %v863
        %v3225 = vunpack.c.l.b16 %v864
        %v3226 = vunpack.c.h.b16 %v864
        %v3227 = vunpack.c.l.b16 %v865
        %v3228 = vunpack.c.l.b16 %v866
        %v3229 = vunpack.c.h.b16 %v866
        %v3230 = vunpack.c.l.b16 %v867
        %v3231 = vunpack.c.h.b16 %v867
        %v3232 = vunpack.c.l.b16 %v868
        %v3233 = vunpack.c.h.b16 %v868
        %v3234 = vunpack.c.l.b16 %v869
        %v3235 = vunpack.c.h.b16 %v869
        %v3236 = vunpack.c.l.b16 %v870
        %v3237 = vunpack.c.h.b16 %v870
        %v3238 = vunpack.c.l.b16 %v871
        %v3239 = vunpack.c.h.b16 %v871
        %v3240 = vunpack.c.l.b16 %v872
        %v3241 = vunpack.c.h.b16 %v872
        %v3242 = vunpack.c.l.b16 %v873
        %v3243 = vunpack.c.h.b16 %v873
        %v3244 = vunpack.c.l.b16 %v874
        %v3245 = vunpack.c.h.b16 %v874
        %v3246 = vunpack.c.l.b16 %v875
        %v3247 = vunpack.c.h.b16 %v875
        %v3248 = vunpack.c.l.b16 %v876
        %v3249 = vunpack.c.h.b16 %v876
        %v3250 = vunpack.c.l.b16 %v877
        %v3251 = vunpack.c.h.b16 %v877
        %v3252 = vunpack.c.l.b16 %v878
        %v3253 = vunpack.c.h.b16 %v878
        %v3254 = vunpack.c.l.b16 %v879
        %v3255 = vunpack.c.l.b16 %v880
        %v3256 = vunpack.c.h.b16 %v880
        %v3257 = vunpack.c.l.b16 %v881
        %v3258 = vunpack.c.h.b16 %v881
        %v3259 = vunpack.c.l.b16 %v882
        %v3260 = vunpack.c.h.b16 %v882
        %v3261 = vunpack.c.l.b16 %v883
        %v3262 = vunpack.c.h.b16 %v883
        %v3263 = vunpack.c.l.b16 %v884
        %v3264 = vunpack.c.h.b16 %v884
        %v3265 = vunpack.c.l.b16 %v885
        %v3266 = vunpack.c.h.b16 %v885
        %v3267 = vunpack.c.l.b16 %v886
        %v3268 = vunpack.c.h.b16 %v886
        %v3269 = vunpack.c.l.b16 %v887
        %v3270 = vunpack.c.h.b16 %v887
        %v3271 = vunpack.c.l.b16 %v888
        %v3272 = vunpack.c.h.b16 %v888
        %v3273 = vunpack.c.l.b16 %v889
        %v3274 = vunpack.c.h.b16 %v889
        %v3275 = vunpack.c.l.b16 %v890
        %v3276 = vunpack.c.h.b16 %v890
        %v3277 = vunpack.c.l.b16 %v891
        %v3278 = vunpack.c.h.b16 %v891
        %v3279 = vunpack.c.l.b16 %v892
        %v3280 = vunpack.c.h.b16 %v892
        %v3281 = vunpack.c.l.b16 %v893
        %v3282 = vunpack.c.l.b16 %v894
        %v3283 = vunpack.c.h.b16 %v894
        %v3284 = vunpack.c.l.b16 %v895
        %v3285 = vunpack.c.h.b16 %v895
        %v3286 = vunpack.c.l.b16 %v896
        %v3287 = vunpack.c.h.b16 %v896
        %v3288 = vunpack.c.l.b16 %v897
        %v3289 = vunpack.c.h.b16 %v897
        %v3290 = vunpack.c.l.b16 %v898
        %v3291 = vunpack.c.h.b16 %v898
        %v3292 = vunpack.c.l.b16 %v899
        %v3293 = vunpack.c.h.b16 %v899
        %v3294 = vunpack.c.l.b16 %v900
        %v3295 = vunpack.c.h.b16 %v900
        %v3296 = vunpack.c.l.b16 %v901
        %v3297 = vunpack.c.h.b16 %v901
        %v3298 = vunpack.c.l.b16 %v902
        %v3299 = vunpack.c.h.b16 %v902
        %v3300 = vunpack.c.l.b16 %v903
        %v3301 = vunpack.c.h.b16 %v903
        %v3302 = vunpack.c.l.b16 %v904
        %v3303 = vunpack.c.h.b16 %v904
        %v3304 = vunpack.c.l.b16 %v905
        %v3305 = vunpack.c.h.b16 %v905
        %v3306 = vunpack.c.l.b16 %v906
        %v3307 = vunpack.c.h.b16 %v906
        %v3308 = vunpack.c.l.b16 %v907
        %v3309 = vunpack.c.l.b16 %v908
        %v3310 = vunpack.c.h.b16 %v908
        %v3311 = vunpack.c.l.b16 %v909
        %v3312 = vunpack.c.h.b16 %v909
        %v3313 = vunpack.c.l.b16 %v910
        %v3314 = vunpack.c.h.b16 %v910
        %v3315 = vunpack.c.l.b16 %v911
        %v3316 = vunpack.c.h.b16 %v911
        %v3317 = vunpack.c.l.b16 %v912
        %v3318 = vunpack.c.h.b16 %v912
        %v3319 = vunpack.c.l.b16 %v913
        %v3320 = vunpack.c.h.b16 %v913
        %v3321 = vunpack.c.l.b16 %v914
        %v3322 = vunpack.c.h.b16 %v914
        %v3323 = vunpack.c.l.b16 %v915
        %v3324 = vunpack.c.h.b16 %v915
        %v3325 = vunpack.c.l.b16 %v916
        %v3326 = vunpack.c.h.b16 %v916
        %v3327 = vunpack.c.l.b16 %v917
        %v3328 = vunpack.c.h.b16 %v917
        %v3329 = vunpack.c.l.b16 %v918
        %v3330 = vunpack.c.h.b16 %v918
        %v3331 = vunpack.c.l.b16 %v919
        %v3332 = vunpack.c.h.b16 %v919
        %v3333 = vunpack.c.l.b16 %v920
        %v3334 = vunpack.c.h.b16 %v920
        %v3335 = vunpack.c.l.b16 %v921
        %v3336 = vunpack.c.l.b16 %v922
        %v3337 = vunpack.c.h.b16 %v922
        %v3338 = vunpack.c.l.b16 %v923
        %v3339 = vunpack.c.h.b16 %v923
        %v3340 = vunpack.c.l.b16 %v924
        %v3341 = vunpack.c.h.b16 %v924
        %v3342 = vunpack.c.l.b16 %v925
        %v3343 = vunpack.c.h.b16 %v925
        %v3344 = vunpack.c.l.b16 %v926
        %v3345 = vunpack.c.h.b16 %v926
        %v3346 = vunpack.c.l.b16 %v927
        %v3347 = vunpack.c.h.b16 %v927
        %v3348 = vunpack.c.l.b16 %v928
        %v3349 = vunpack.c.h.b16 %v928
        %v3350 = vunpack.c.l.b16 %v929
        %v3351 = vunpack.c.h.b16 %v929
        %v3352 = vunpack.c.l.b16 %v930
        %v3353 = vunpack.c.h.b16 %v930
        %v3354 = vunpack.c.l.b16 %v931
        %v3355 = vunpack.c.h.b16 %v931
        %v3356 = vunpack.c.l.b16 %v932
        %v3357 = vunpack.c.h.b16 %v932
        %v3358 = vunpack.c.l.b16 %v933
        %v3359 = vunpack.c.h.b16 %v933
        %v3360 = vunpack.c.l.b16 %v934
        %v3361 = vunpack.c.h.b16 %v934
        %v3362 = vunpack.c.l.b16 %v935
        %v3363 = vunpack.c.l.b16 %v936
        %v3364 = vunpack.c.h.b16 %v936
        %v3365 = vunpack.c.l.b16 %v937
        %v3366 = vunpack.c.h.b16 %v937
        %v3367 = vunpack.c.l.b16 %v938
        %v3368 = vunpack.c.h.b16 %v938
        %v3369 = vunpack.c.l.b16 %v939
        %v3370 = vunpack.c.h.b16 %v939
        %v3371 = vunpack.c.l.b16 %v940
        %v3372 = vunpack.c.h.b16 %v940
        %v3373 = vunpack.c.l.b16 %v941
        %v3374 = vunpack.c.h.b16 %v941
        %v3375 = vunpack.c.l.b16 %v942
        %v3376 = vunpack.c.h.b16 %v942
        %v3377 = vunpack.c.l.b16 %v943
        %v3378 = vunpack.c.h.b16 %v943
        %v3379 = vunpack.c.l.b16 %v944
        %v3380 = vunpack.c.h.b16 %v944
        %v3381 = vunpack.c.l.b16 %v945
        %v3382 = vunpack.c.h.b16 %v945
        %v3383 = vunpack.c.l.b16 %v946
        %v3384 = vunpack.c.h.b16 %v946
        %v3385 = vunpack.c.l.b16 %v947
        %v3386 = vunpack.c.h.b16 %v947
        %v3387 = vunpack.c.l.b16 %v948
        %v3388 = vunpack.c.h.b16 %v948
        %v3389 = vunpack.c.l.b16 %v949
        %v3390 = vunpack.c.l.b16 %v950
        %v3391 = vunpack.c.h.b16 %v950
        %v3392 = vunpack.c.l.b16 %v951
        %v3393 = vunpack.c.h.b16 %v951
        %v3394 = vunpack.c.l.b16 %v952
        %v3395 = vunpack.c.h.b16 %v952
        %v3396 = vunpack.c.l.b16 %v953
        %v3397 = vunpack.c.h.b16 %v953
        %v3398 = vunpack.c.l.b16 %v954
        %v3399 = vunpack.c.h.b16 %v954
        %v3400 = vunpack.c.l.b16 %v955
        %v3401 = vunpack.c.h.b16 %v955
        %v3402 = vunpack.c.l.b16 %v956
        %v3403 = vunpack.c.h.b16 %v956
        %v3404 = vunpack.c.l.b16 %v957
        %v3405 = vunpack.c.h.b16 %v957
        %v3406 = vunpack.c.l.b16 %v958
        %v3407 = vunpack.c.h.b16 %v958
        %v3408 = vunpack.c.l.b16 %v959
        %v3409 = vunpack.c.h.b16 %v959
        %v3410 = vunpack.c.l.b16 %v960
        %v3411 = vunpack.c.h.b16 %v960
        %v3412 = vunpack.c.l.b16 %v961
        %v3413 = vunpack.c.h.b16 %v961
        %v3414 = vunpack.c.l.b16 %v962
        %v3415 = vunpack.c.h.b16 %v962
        %v3416 = vunpack.c.l.b16 %v963
        %v3417 = vunpack.c.l.b16 %v964
        %v3418 = vunpack.c.h.b16 %v964
        %v3419 = vunpack.c.l.b16 %v965
        %v3420 = vunpack.c.h.b16 %v965
        %v3421 = vunpack.c.l.b16 %v966
        %v3422 = vunpack.c.h.b16 %v966
        %v3423 = vunpack.c.l.b16 %v967
        %v3424 = vunpack.c.h.b16 %v967
        %v3425 = vunpack.c.l.b16 %v968
        %v3426 = vunpack.c.h.b16 %v968
        %v3427 = vunpack.c.l.b16 %v969
        %v3428 = vunpack.c.h.b16 %v969
        %v3429 = vunpack.c.l.b16 %v970
        %v3430 = vunpack.c.h.b16 %v970
        %v3431 = vunpack.c.l.b16 %v971
        %v3432 = vunpack.c.h.b16 %v971
        %v3433 = vunpack.c.l.b16 %v972
        %v3434 = vunpack.c.h.b16 %v972
        %v3435 = vunpack.c.l.b16 %v973
        %v3436 = vunpack.c.h.b16 %v973
        %v3437 = vunpack.c.l.b16 %v974
        %v3438 = vunpack.c.h.b16 %v974
        %v3439 = vunpack.c.l.b16 %v975
        %v3440 = vunpack.c.h.b16 %v975
        %v3441 = vunpack.c.l.b16 %v976
        %v3442 = vunpack.c.h.b16 %v976
        %v3443 = vunpack.c.l.b16 %v977
        %v3444 = vpack.c.b16 %v2985, %v2958
        %v3445 = vpack.c.b16 %v2986, %v2959
        %v3446 = vpack.c.b16 %v2987, %v2960
        %v3447 = vpack.c.b16 %v2988, %v2961
        %v3448 = vpack.c.b16 %v2989, %v2962
        %v3449 = vpack.c.b16 %v2990, %v2963
        %v3450 = vpack.c.b16 %v2991, %v2964
        %v3451 = vpack.c.b16 %v2992, %v2965
        %v3452 = vpack.c.b16 %v2993, %v2966
        %v3453 = vpack.c.b16 %v2994, %v2967
        %v3454 = vpack.c.b16 %v2995, %v2968
        %v3455 = vpack.c.b16 %v2996, %v2969
        %v3456 = vpack.c.b16 %v2997, %v2970
        %v3457 = vpack.c.b16 %v2998, %v2971
        %v3458 = vpack.c.b16 %v2999, %v2972
        %v3459 = vpack.c.b16 %v3000, %v2973
        %v3460 = vpack.c.b16 %v3001, %v2974
        %v3461 = vpack.c.b16 %v3002, %v2975
        %v3462 = vpack.c.b16 %v3003, %v2976
        %v3463 = vpack.c.b16 %v3004, %v2977
        %v3464 = vpack.c.b16 %v3005, %v2978
        %v3465 = vpack.c.b16 %v3006, %v2979
        %v3466 = vpack.c.b16 %v3007, %v2980
        %v3467 = vpack.c.b16 %v3008, %v2981
        %v3468 = vpack.c.b16 %v3009, %v2982
        %v3469 = vpack.c.b16 %v3010, %v2983
        %v3470 = vpack.c.b16 %v3011, %v2984
        %v3471 = vpack.c.b16 %v3039, %v3012
        %v3472 = vpack.c.b16 %v3040, %v3013
        %v3473 = vpack.c.b16 %v3041, %v3014
        %v3474 = vpack.c.b16 %v3042, %v3015
        %v3475 = vpack.c.b16 %v3043, %v3016
        %v3476 = vpack.c.b16 %v3044, %v3017
        %v3477 = vpack.c.b16 %v3045, %v3018
        %v3478 = vpack.c.b16 %v3046, %v3019
        %v3479 = vpack.c.b16 %v3047, %v3020
        %v3480 = vpack.c.b16 %v3048, %v3021
        %v3481 = vpack.c.b16 %v3049, %v3022
        %v3482 = vpack.c.b16 %v3050, %v3023
        %v3483 = vpack.c.b16 %v3051, %v3024
        %v3484 = vpack.c.b16 %v3052, %v3025
        %v3485 = vpack.c.b16 %v3053, %v3026
        %v3486 = vpack.c.b16 %v3054, %v3027
        %v3487 = vpack.c.b16 %v3055, %v3028
        %v3488 = vpack.c.b16 %v3056, %v3029
        %v3489 = vpack.c.b16 %v3057, %v3030
        %v3490 = vpack.c.b16 %v3058, %v3031
        %v3491 = vpack.c.b16 %v3059, %v3032
        %v3492 = vpack.c.b16 %v3060, %v3033
        %v3493 = vpack.c.b16 %v3061, %v3034
        %v3494 = vpack.c.b16 %v3062, %v3035
        %v3495 = vpack.c.b16 %v3063, %v3036
        %v3496 = vpack.c.b16 %v3064, %v3037
        %v3497 = vpack.c.b16 %v3065, %v3038
        %v3498 = vpack.c.b16 %v3093, %v3066
        %v3499 = vpack.c.b16 %v3094, %v3067
        %v3500 = vpack.c.b16 %v3095, %v3068
        %v3501 = vpack.c.b16 %v3096, %v3069
        %v3502 = vpack.c.b16 %v3097, %v3070
        %v3503 = vpack.c.b16 %v3098, %v3071
        %v3504 = vpack.c.b16 %v3099, %v3072
        %v3505 = vpack.c.b16 %v3100, %v3073
        %v3506 = vpack.c.b16 %v3101, %v3074
        %v3507 = vpack.c.b16 %v3102, %v3075
        %v3508 = vpack.c.b16 %v3103, %v3076
        %v3509 = vpack.c.b16 %v3104, %v3077
        %v3510 = vpack.c.b16 %v3105, %v3078
        %v3511 = vpack.c.b16 %v3106, %v3079
        %v3512 = vpack.c.b16 %v3107, %v3080
        %v3513 = vpack.c.b16 %v3108, %v3081
        %v3514 = vpack.c.b16 %v3109, %v3082
        %v3515 = vpack.c.b16 %v3110, %v3083
        %v3516 = vpack.c.b16 %v3111, %v3084
        %v3517 = vpack.c.b16 %v3112, %v3085
        %v3518 = vpack.c.b16 %v3113, %v3086
        %v3519 = vpack.c.b16 %v3114, %v3087
        %v3520 = vpack.c.b16 %v3115, %v3088
        %v3521 = vpack.c.b16 %v3116, %v3089
        %v3522 = vpack.c.b16 %v3117, %v3090
        %v3523 = vpack.c.b16 %v3118, %v3091
        %v3524 = vpack.c.b16 %v3119, %v3092
        %v3525 = vpack.c.b16 %v3147, %v3120
        %v3526 = vpack.c.b16 %v3148, %v3121
        %v3527 = vpack.c.b16 %v3149, %v3122
        %v3528 = vpack.c.b16 %v3150, %v3123
        %v3529 = vpack.c.b16 %v3151, %v3124
        %v3530 = vpack.c.b16 %v3152, %v3125
        %v3531 = vpack.c.b16 %v3153, %v3126
        %v3532 = vpack.c.b16 %v3154, %v3127
        %v3533 = vpack.c.b16 %v3155, %v3128
        %v3534 = vpack.c.b16 %v3156, %v3129
        %v3535 = vpack.c.b16 %v3157, %v3130
        %v3536 = vpack.c.b16 %v3158, %v3131
        %v3537 = vpack.c.b16 %v3159, %v3132
        %v3538 = vpack.c.b16 %v3160, %v3133
        %v3539 = vpack.c.b16 %v3161, %v3134
        %v3540 = vpack.c.b16 %v3162, %v3135
        %v3541 = vpack.c.b16 %v3163, %v3136
        %v3542 = vpack.c.b16 %v3164, %v3137
        %v3543 = vpack.c.b16 %v3165, %v3138
        %v3544 = vpack.c.b16 %v3166, %v3139
        %v3545 = vpack.c.b16 %v3167, %v3140
        %v3546 = vpack.c.b16 %v3168, %v3141
        %v3547 = vpack.c.b16 %v3169, %v3142
        %v3548 = vpack.c.b16 %v3170, %v3143
        %v3549 = vpack.c.b16 %v3171, %v3144
        %v3550 = vpack.c.b16 %v3172, %v3145
        %v3551 = vpack.c.b16 %v3173, %v3146
        %v3552 = vpack.c.b16 %v3201, %v3174
        %v3553 = vpack.c.b16 %v3202, %v3175
        %v3554 = vpack.c.b16 %v3203, %v3176
        %v3555 = vpack.c.b16 %v3204, %v3177
        %v3556 = vpack.c.b16 %v3205, %v3178
        %v3557 = vpack.c.b16 %v3206, %v3179
        %v3558 = vpack.c.b16 %v3207, %v3180
        %v3559 = vpack.c.b16 %v3208, %v3181
        %v3560 = vpack.c.b16 %v3209, %v3182
        %v3561 = vpack.c.b16 %v3210, %v3183
        %v3562 = vpack.c.b16 %v3211, %v3184
        %v3563 = vpack.c.b16 %v3212, %v3185
        %v3564 = vpack.c.b16 %v3213, %v3186
        %v3565 = vpack.c.b16 %v3214, %v3187
        %v3566 = vpack.c.b16 %v3215, %v3188
        %v3567 = vpack.c.b16 %v3216, %v3189
        %v3568 = vpack.c.b16 %v3217, %v3190
        %v3569 = vpack.c.b16 %v3218, %v3191
        %v3570 = vpack.c.b16 %v3219, %v3192
        %v3571 = vpack.c.b16 %v3220, %v3193
        %v3572 = vpack.c.b16 %v3221, %v3194
        %v3573 = vpack.c.b16 %v3222, %v3195
        %v3574 = vpack.c.b16 %v3223, %v3196
        %v3575 = vpack.c.b16 %v3224, %v3197
        %v3576 = vpack.c.b16 %v3225, %v3198
        %v3577 = vpack.c.b16 %v3226, %v3199
        %v3578 = vpack.c.b16 %v3227, %v3200
        %v3579 = vpack.c.b16 %v3255, %v3228
        %v3580 = vpack.c.b16 %v3256, %v3229
        %v3581 = vpack.c.b16 %v3257, %v3230
        %v3582 = vpack.c.b16 %v3258, %v3231
        %v3583 = vpack.c.b16 %v3259, %v3232
        %v3584 = vpack.c.b16 %v3260, %v3233
        %v3585 = vpack.c.b16 %v3261, %v3234
        %v3586 = vpack.c.b16 %v3262, %v3235
        %v3587 = vpack.c.b16 %v3263, %v3236
        %v3588 = vpack.c.b16 %v3264, %v3237
        %v3589 = vpack.c.b16 %v3265, %v3238
        %v3590 = vpack.c.b16 %v3266, %v3239
        %v3591 = vpack.c.b16 %v3267, %v3240
        %v3592 = vpack.c.b16 %v3268, %v3241
        %v3593 = vpack.c.b16 %v3269, %v3242
        %v3594 = vpack.c.b16 %v3270, %v3243
        %v3595 = vpack.c.b16 %v3271, %v3244
        %v3596 = vpack.c.b16 %v3272, %v3245
        %v3597 = vpack.c.b16 %v3273, %v3246
        %v3598 = vpack.c.b16 %v3274, %v3247
        %v3599 = vpack.c.b16 %v3275, %v3248
        %v3600 = vpack.c.b16 %v3276, %v3249
        %v3601 = vpack.c.b16 %v3277, %v3250
        %v3602 = vpack.c.b16 %v3278, %v3251
        %v3603 = vpack.c.b16 %v3279, %v3252
        %v3604 = vpack.c.b16 %v3280, %v3253
        %v3605 = vpack.c.b16 %v3281, %v3254
        %v3606 = vpack.c.b16 %v3309, %v3282
        %v3607 = vpack.c.b16 %v3310, %v3283
        %v3608 = vpack.c.b16 %v3311, %v3284
        %v3609 = vpack.c.b16 %v3312, %v3285
        %v3610 = vpack.c.b16 %v3313, %v3286
        %v3611 = vpack.c.b16 %v3314, %v3287
        %v3612 = vpack.c.b16 %v3315, %v3288
        %v3613 = vpack.c.b16 %v3316, %v3289
        %v3614 = vpack.c.b16 %v3317, %v3290
        %v3615 = vpack.c.b16 %v3318, %v3291
        %v3616 = vpack.c.b16 %v3319, %v3292
        %v3617 = vpack.c.b16 %v3320, %v3293
        %v3618 = vpack.c.b16 %v3321, %v3294
        %v3619 = vpack.c.b16 %v3322, %v3295
        %v3620 = vpack.c.b16 %v3323, %v3296
        %v3621 = vpack.c.b16 %v3324, %v3297
        %v3622 = vpack.c.b16 %v3325, %v3298
        %v3623 = vpack.c.b16 %v3326, %v3299
        %v3624 = vpack.c.b16 %v3327, %v3300
        %v3625 = vpack.c.b16 %v3328, %v3301
        %v3626 = vpack.c.b16 %v3329, %v3302
        %v3627 = vpack.c.b16 %v3330, %v3303
        %v3628 = vpack.c.b16 %v3331, %v3304
        %v3629 = vpack.c.b16 %v3332, %v3305
        %v3630 = vpack.c.b16 %v3333, %v3306
        %v3631 = vpack.c.b16 %v3334, %v3307
        %v3632 = vpack.c.b16 %v3335, %v3308
        %v3633 = vpack.c.b16 %v3363, %v3336
        %v3634 = vpack.c.b16 %v3364, %v3337
        %v3635 = vpack.c.b16 %v3365, %v3338
        %v3636 = vpack.c.b16 %v3366, %v3339
        %v3637 = vpack.c.b16 %v3367, %v3340
        %v3638 = vpack.c.b16 %v3368, %v3341
        %v3639 = vpack.c.b16 %v3369, %v3342
        %v3640 = vpack.c.b16 %v3370, %v3343
        %v3641 = vpack.c.b16 %v3371, %v3344
        %v3642 = vpack.c.b16 %v3372, %v3345
        %v3643 = vpack.c.b16 %v3373, %v3346
        %v3644 = vpack.c.b16 %v3374, %v3347
        %v3645 = vpack.c.b16 %v3375, %v3348
        %v3646 = vpack.c.b16 %v3376, %v3349
        %v3647 = vpack.c.b16 %v3377, %v3350
        %v3648 = vpack.c.b16 %v3378, %v3351
        %v3649 = vpack.c.b16 %v3379, %v3352
        %v3650 = vpack.c.b16 %v3380, %v3353
        %v3651 = vpack.c.b16 %v3381, %v3354
        %v3652 = vpack.c.b16 %v3382, %v3355
        %v3653 = vpack.c.b16 %v3383, %v3356
        %v3654 = vpack.c.b16 %v3384, %v3357
        %v3655 = vpack.c.b16 %v3385, %v3358
        %v3656 = vpack.c.b16 %v3386, %v3359
        %v3657 = vpack.c.b16 %v3387, %v3360
        %v3658 = vpack.c.b16 %v3388, %v3361
        %v3659 = vpack.c.b16 %v3389, %v3362
        %v3660 = vpack.c.b16 %v3417, %v3390
        %v3661 = vpack.c.b16 %v3418, %v3391
        %v3662 = vpack.c.b16 %v3419, %v3392
        %v3663 = vpack.c.b16 %v3420, %v3393
        %v3664 = vpack.c.b16 %v3421, %v3394
        %v3665 = vpack.c.b16 %v3422, %v3395
        %v3666 = vpack.c.b16 %v3423, %v3396
        %v3667 = vpack.c.b16 %v3424, %v3397
        %v3668 = vpack.c.b16 %v3425, %v3398
        %v3669 = vpack.c.b16 %v3426, %v3399
        %v3670 = vpack.c.b16 %v3427, %v3400
        %v3671 = vpack.c.b16 %v3428, %v3401
        %v3672 = vpack.c.b16 %v3429, %v3402
        %v3673 = vpack.c.b16 %v3430, %v3403
        %v3674 = vpack.c.b16 %v3431, %v3404
        %v3675 = vpack.c.b16 %v3432, %v3405
        %v3676 = vpack.c.b16 %v3433, %v3406
        %v3677 = vpack.c.b16 %v3434, %v3407
        %v3678 = vpack.c.b16 %v3435, %v3408
        %v3679 = vpack.c.b16 %v3436, %v3409
        %v3680 = vpack.c.b16 %v3437, %v3410
        %v3681 = vpack.c.b16 %v3438, %v3411
        %v3682 = vpack.c.b16 %v3439, %v3412
        %v3683 = vpack.c.b16 %v3440, %v3413
        %v3684 = vpack.c.b16 %v3441, %v3414
        %v3685 = vpack.c.b16 %v3442, %v3415
        %v3686 = vpack.c.b16 %v3443, %v3416
        %3930 = vmatprep.subr.bf16.mxu0 %v3634
        %3931 = vmatpush1.bf16.xpose.msra.mxu0 %v3633
        %3932 = vmatprep.subr.bf16.mxu0 %v3607
        %3933 = vmatpush1.bf16.xpose.msra.mxu0 %v3606
        %3934 = vmatprep.subr.bf16.mxu0 %v3580
        %3935 = vmatpush1.bf16.xpose.msra.mxu0 %v3579
        %3936 = vmatprep.subr.bf16.mxu0 %v3553
        %3937 = vmatpush1.bf16.xpose.msra.mxu0 %v3552
        %3938 = vmatprep.subr.bf16.mxu0 %v3526
        %3939 = vmatpush1.bf16.xpose.msra.mxu0 %v3525
        %3940 = vmatprep.subr.bf16.mxu0 %v3499
        %3941 = vmatpush1.bf16.xpose.msra.mxu0 %v3498
        %3942 = vmatprep.subr.bf16.mxu0 %v3472
        %3943 = vmatpush1.bf16.xpose.msra.mxu0 %v3471
        %3944 = vmatprep.subr.bf16.mxu0 %v3445
        %3945 = vmatpush1.bf16.xpose.msra.mxu0 %v3444
        %3946 = vmatprep.subr.bf16.mxu0 0
        %3947 = vmatpush2.bf16.xpose.msra.mxu0 0
        %3948 = vmatprep.subr.bf16.mxu0 0
        %3949 = vmatpush2.bf16.xpose.msra.mxu0 0
        %3950 = vmatprep.subr.bf16.mxu0 0
        %3951 = vmatpush2.bf16.xpose.msra.mxu0 0
        %3952 = vmatprep.subr.bf16.mxu0 0
        %3953 = vmatpush2.bf16.xpose.msra.mxu0 0
        %3954 = vmatprep.subr.bf16.mxu0 0
        %3955 = vmatpush2.bf16.xpose.msra.mxu0 0
        %3956 = vmatprep.subr.bf16.mxu0 0
        %3957 = vmatpush2.bf16.xpose.msra.mxu0 0
        %3958 = vmatprep.subr.bf16.mxu0 0
        %3959 = vmatpush2.bf16.xpose.msra.mxu0 0
        %3960 = vmatprep.subr.bf16.mxu0 %v3661
        %3961 = vmatpush2.bf16.xpose.msra.mxu0 %v3660
        %3962 = vmatprep.mubr.bf16.mxu0 %v2298
        %3963 = vmatmul.mubr.bf16.gmra.mxu0 %v2282
        %v3964 = vpop.f32.mrf.mxu0
        %v3965 = vadd.f32 0.0, %v3964
        %v3966 = vpop.f32.mrf.mxu0
        %v3967 = vadd.f32 0.0, %v3966
        %v3968 = vpop.f32.mrf.mxu0
        %v3969 = vadd.f32 0.0, %v3968
        %v3970 = vpop.f32.mrf.mxu0
        %v3971 = vadd.f32 0.0, %v3970
        %3972 = vmatprep.mubr.bf16.mxu0 %v2299
        %3973 = vmatmul.mubr.bf16.gmra.mxu0 %v2283
        %v3974 = vpop.f32.mrf.mxu0
        %v3975 = vadd.f32 0.0, %v3974
        %v3976 = vpop.f32.mrf.mxu0
        %v3977 = vadd.f32 0.0, %v3976
        %v3978 = vpop.f32.mrf.mxu0
        %v3979 = vadd.f32 0.0, %v3978
        %v3980 = vpop.f32.mrf.mxu0
        %v3981 = vadd.f32 0.0, %v3980
        %3982 = vmatprep.mubr.bf16.mxu0 %v2300
        %3983 = vmatmul.mubr.bf16.gmra.mxu0 %v2284
        %v3984 = vpop.f32.mrf.mxu0
        %v3985 = vadd.f32 0.0, %v3984
        %v3986 = vpop.f32.mrf.mxu0
        %v3987 = vadd.f32 0.0, %v3986
        %v3988 = vpop.f32.mrf.mxu0
        %v3989 = vadd.f32 0.0, %v3988
        %v3990 = vpop.f32.mrf.mxu0
        %v3991 = vadd.f32 0.0, %v3990
        %3992 = vmatprep.mubr.bf16.mxu0 %v2301
        %3993 = vmatmul.mubr.bf16.gmra.mxu0 %v2285
        %v3994 = vpop.f32.mrf.mxu0
        %v3995 = vadd.f32 0.0, %v3994
        %v3996 = vpop.f32.mrf.mxu0
        %v3997 = vadd.f32 0.0, %v3996
        %v3998 = vpop.f32.mrf.mxu0
        %v3999 = vpop.f32.mrf.mxu0
        %4000 = vdwg.mxu0
        %4001 = vmatprep.subr.bf16.mxu0 %v3636
        %4002 = vmatpush1.bf16.xpose.msra.mxu0 %v3635
        %4003 = vmatprep.subr.bf16.mxu0 %v3609
        %4004 = vmatpush1.bf16.xpose.msra.mxu0 %v3608
        %4005 = vmatprep.subr.bf16.mxu0 %v3582
        %4006 = vmatpush1.bf16.xpose.msra.mxu0 %v3581
        %4007 = vmatprep.subr.bf16.mxu0 %v3555
        %4008 = vmatpush1.bf16.xpose.msra.mxu0 %v3554
        %4009 = vmatprep.subr.bf16.mxu0 %v3528
        %4010 = vmatpush1.bf16.xpose.msra.mxu0 %v3527
        %4011 = vmatprep.subr.bf16.mxu0 %v3501
        %4012 = vmatpush1.bf16.xpose.msra.mxu0 %v3500
        %4013 = vmatprep.subr.bf16.mxu0 %v3474
        %4014 = vmatpush1.bf16.xpose.msra.mxu0 %v3473
        %4015 = vmatprep.subr.bf16.mxu0 %v3447
        %4016 = vmatpush1.bf16.xpose.msra.mxu0 %v3446
        %4017 = vmatprep.subr.bf16.mxu0 0
        %4018 = vmatpush2.bf16.xpose.msra.mxu0 0
        %4019 = vmatprep.subr.bf16.mxu0 0
        %4020 = vmatpush2.bf16.xpose.msra.mxu0 0
        %4021 = vmatprep.subr.bf16.mxu0 0
        %4022 = vmatpush2.bf16.xpose.msra.mxu0 0
        %4023 = vmatprep.subr.bf16.mxu0 0
        %4024 = vmatpush2.bf16.xpose.msra.mxu0 0
        %4025 = vmatprep.subr.bf16.mxu0 0
        %4026 = vmatpush2.bf16.xpose.msra.mxu0 0
        %4027 = vmatprep.subr.bf16.mxu0 0
        %4028 = vmatpush2.bf16.xpose.msra.mxu0 0
        %4029 = vmatprep.subr.bf16.mxu0 0
        %4030 = vmatpush2.bf16.xpose.msra.mxu0 0
        %4031 = vmatprep.subr.bf16.mxu0 %v3663
        %4032 = vmatpush2.bf16.xpose.msra.mxu0 %v3662
        %4033 = vmatprep.mubr.bf16.mxu0 %v2330
        %4034 = vmatmul.mubr.bf16.gmra.mxu0 %v2314
        %v4035 = vpop.f32.mrf.mxu0
        %v4036 = vadd.f32 %v3965, %v4035
        %v4037 = vpop.f32.mrf.mxu0
        %v4038 = vadd.f32 %v3967, %v4037
        %v4039 = vpop.f32.mrf.mxu0
        %v4040 = vadd.f32 %v3969, %v4039
        %v4041 = vpop.f32.mrf.mxu0
        %v4042 = vadd.f32 %v3971, %v4041
        %4043 = vmatprep.mubr.bf16.mxu0 %v2331
        %4044 = vmatmul.mubr.bf16.gmra.mxu0 %v2315
        %v4045 = vpop.f32.mrf.mxu0
        %v4046 = vadd.f32 %v3975, %v4045
        %v4047 = vpop.f32.mrf.mxu0
        %v4048 = vadd.f32 %v3977, %v4047
        %v4049 = vpop.f32.mrf.mxu0
        %v4050 = vadd.f32 %v3979, %v4049
        %v4051 = vpop.f32.mrf.mxu0
        %v4052 = vadd.f32 %v3981, %v4051
        %4053 = vmatprep.mubr.bf16.mxu0 %v2332
        %4054 = vmatmul.mubr.bf16.gmra.mxu0 %v2316
        %v4055 = vpop.f32.mrf.mxu0
        %v4056 = vadd.f32 %v3985, %v4055
        %v4057 = vpop.f32.mrf.mxu0
        %v4058 = vadd.f32 %v3987, %v4057
        %v4059 = vpop.f32.mrf.mxu0
        %v4060 = vadd.f32 %v3989, %v4059
        %v4061 = vpop.f32.mrf.mxu0
        %v4062 = vadd.f32 %v3991, %v4061
        %4063 = vmatprep.mubr.bf16.mxu0 %v2333
        %4064 = vmatmul.mubr.bf16.gmra.mxu0 %v2317
        %v4065 = vpop.f32.mrf.mxu0
        %v4066 = vadd.f32 %v3995, %v4065
        %v4067 = vpop.f32.mrf.mxu0
        %v4068 = vadd.f32 %v3997, %v4067
        %v4069 = vpop.f32.mrf.mxu0
        %v4070 = vpop.f32.mrf.mxu0
        %4071 = vdwg.mxu0
        %4072 = vmatprep.subr.bf16.mxu0 %v3638
        %4073 = vmatpush1.bf16.xpose.msra.mxu0 %v3637
        %4074 = vmatprep.subr.bf16.mxu0 %v3611
        %4075 = vmatpush1.bf16.xpose.msra.mxu0 %v3610
        %4076 = vmatprep.subr.bf16.mxu0 %v3584
        %4077 = vmatpush1.bf16.xpose.msra.mxu0 %v3583
        %4078 = vmatprep.subr.bf16.mxu0 %v3557
        %4079 = vmatpush1.bf16.xpose.msra.mxu0 %v3556
        %4080 = vmatprep.subr.bf16.mxu0 %v3530
        %4081 = vmatpush1.bf16.xpose.msra.mxu0 %v3529
        %4082 = vmatprep.subr.bf16.mxu0 %v3503
        %4083 = vmatpush1.bf16.xpose.msra.mxu0 %v3502
        %4084 = vmatprep.subr.bf16.mxu0 %v3476
        %4085 = vmatpush1.bf16.xpose.msra.mxu0 %v3475
        %4086 = vmatprep.subr.bf16.mxu0 %v3449
        %4087 = vmatpush1.bf16.xpose.msra.mxu0 %v3448
        %4088 = vmatprep.subr.bf16.mxu0 0
        %4089 = vmatpush2.bf16.xpose.msra.mxu0 0
        %4090 = vmatprep.subr.bf16.mxu0 0
        %4091 = vmatpush2.bf16.xpose.msra.mxu0 0
        %4092 = vmatprep.subr.bf16.mxu0 0
        %4093 = vmatpush2.bf16.xpose.msra.mxu0 0
        %4094 = vmatprep.subr.bf16.mxu0 0
        %4095 = vmatpush2.bf16.xpose.msra.mxu0 0
        %4096 = vmatprep.subr.bf16.mxu0 0
        %4097 = vmatpush2.bf16.xpose.msra.mxu0 0
        %4098 = vmatprep.subr.bf16.mxu0 0
        %4099 = vmatpush2.bf16.xpose.msra.mxu0 0
        %4100 = vmatprep.subr.bf16.mxu0 0
        %4101 = vmatpush2.bf16.xpose.msra.mxu0 0
        %4102 = vmatprep.subr.bf16.mxu0 %v3665
        %4103 = vmatpush2.bf16.xpose.msra.mxu0 %v3664
        %4104 = vmatprep.mubr.bf16.mxu0 %v2362
        %4105 = vmatmul.mubr.bf16.gmra.mxu0 %v2346
        %v4106 = vpop.f32.mrf.mxu0
        %v4107 = vadd.f32 %v4036, %v4106
        %v4108 = vpop.f32.mrf.mxu0
        %v4109 = vadd.f32 %v4038, %v4108
        %v4110 = vpop.f32.mrf.mxu0
        %v4111 = vadd.f32 %v4040, %v4110
        %v4112 = vpop.f32.mrf.mxu0
        %v4113 = vadd.f32 %v4042, %v4112
        %4114 = vmatprep.mubr.bf16.mxu0 %v2363
        %4115 = vmatmul.mubr.bf16.gmra.mxu0 %v2347
        %v4116 = vpop.f32.mrf.mxu0
        %v4117 = vadd.f32 %v4046, %v4116
        %v4118 = vpop.f32.mrf.mxu0
        %v4119 = vadd.f32 %v4048, %v4118
        %v4120 = vpop.f32.mrf.mxu0
        %v4121 = vadd.f32 %v4050, %v4120
        %v4122 = vpop.f32.mrf.mxu0
        %v4123 = vadd.f32 %v4052, %v4122
        %4124 = vmatprep.mubr.bf16.mxu0 %v2364
        %4125 = vmatmul.mubr.bf16.gmra.mxu0 %v2348
        %v4126 = vpop.f32.mrf.mxu0
        %v4127 = vadd.f32 %v4056, %v4126
        %v4128 = vpop.f32.mrf.mxu0
        %v4129 = vadd.f32 %v4058, %v4128
        %v4130 = vpop.f32.mrf.mxu0
        %v4131 = vadd.f32 %v4060, %v4130
        %v4132 = vpop.f32.mrf.mxu0
        %v4133 = vadd.f32 %v4062, %v4132
        %4134 = vmatprep.mubr.bf16.mxu0 %v2365
        %4135 = vmatmul.mubr.bf16.gmra.mxu0 %v2349
        %v4136 = vpop.f32.mrf.mxu0
        %v4137 = vadd.f32 %v4066, %v4136
        %v4138 = vpop.f32.mrf.mxu0
        %v4139 = vadd.f32 %v4068, %v4138
        %v4140 = vpop.f32.mrf.mxu0
        %v4141 = vpop.f32.mrf.mxu0
        %4142 = vdwg.mxu0
        %4143 = vmatprep.subr.bf16.mxu0 %v3640
        %4144 = vmatpush1.bf16.xpose.msra.mxu0 %v3639
        %4145 = vmatprep.subr.bf16.mxu0 %v3613
        %4146 = vmatpush1.bf16.xpose.msra.mxu0 %v3612
        %4147 = vmatprep.subr.bf16.mxu0 %v3586
        %4148 = vmatpush1.bf16.xpose.msra.mxu0 %v3585
        %4149 = vmatprep.subr.bf16.mxu0 %v3559
        %4150 = vmatpush1.bf16.xpose.msra.mxu0 %v3558
        %4151 = vmatprep.subr.bf16.mxu0 %v3532
        %4152 = vmatpush1.bf16.xpose.msra.mxu0 %v3531
        %4153 = vmatprep.subr.bf16.mxu0 %v3505
        %4154 = vmatpush1.bf16.xpose.msra.mxu0 %v3504
        %4155 = vmatprep.subr.bf16.mxu0 %v3478
        %4156 = vmatpush1.bf16.xpose.msra.mxu0 %v3477
        %4157 = vmatprep.subr.bf16.mxu0 %v3451
        %4158 = vmatpush1.bf16.xpose.msra.mxu0 %v3450
        %4159 = vmatprep.subr.bf16.mxu0 0
        %4160 = vmatpush2.bf16.xpose.msra.mxu0 0
        %4161 = vmatprep.subr.bf16.mxu0 0
        %4162 = vmatpush2.bf16.xpose.msra.mxu0 0
        %4163 = vmatprep.subr.bf16.mxu0 0
        %4164 = vmatpush2.bf16.xpose.msra.mxu0 0
        %4165 = vmatprep.subr.bf16.mxu0 0
        %4166 = vmatpush2.bf16.xpose.msra.mxu0 0
        %4167 = vmatprep.subr.bf16.mxu0 0
        %4168 = vmatpush2.bf16.xpose.msra.mxu0 0
        %4169 = vmatprep.subr.bf16.mxu0 0
        %4170 = vmatpush2.bf16.xpose.msra.mxu0 0
        %4171 = vmatprep.subr.bf16.mxu0 0
        %4172 = vmatpush2.bf16.xpose.msra.mxu0 0
        %4173 = vmatprep.subr.bf16.mxu0 %v3667
        %4174 = vmatpush2.bf16.xpose.msra.mxu0 %v3666
        %4175 = vmatprep.mubr.bf16.mxu0 %v2394
        %4176 = vmatmul.mubr.bf16.gmra.mxu0 %v2378
        %v4177 = vpop.f32.mrf.mxu0
        %v4178 = vadd.f32 %v4107, %v4177
        %v4179 = vpop.f32.mrf.mxu0
        %v4180 = vadd.f32 %v4109, %v4179
        %v4181 = vpop.f32.mrf.mxu0
        %v4182 = vadd.f32 %v4111, %v4181
        %v4183 = vpop.f32.mrf.mxu0
        %v4184 = vadd.f32 %v4113, %v4183
        %4185 = vmatprep.mubr.bf16.mxu0 %v2395
        %4186 = vmatmul.mubr.bf16.gmra.mxu0 %v2379
        %v4187 = vpop.f32.mrf.mxu0
        %v4188 = vadd.f32 %v4117, %v4187
        %v4189 = vpop.f32.mrf.mxu0
        %v4190 = vadd.f32 %v4119, %v4189
        %v4191 = vpop.f32.mrf.mxu0
        %v4192 = vadd.f32 %v4121, %v4191
        %v4193 = vpop.f32.mrf.mxu0
        %v4194 = vadd.f32 %v4123, %v4193
        %4195 = vmatprep.mubr.bf16.mxu0 %v2396
        %4196 = vmatmul.mubr.bf16.gmra.mxu0 %v2380
        %v4197 = vpop.f32.mrf.mxu0
        %v4198 = vadd.f32 %v4127, %v4197
        %v4199 = vpop.f32.mrf.mxu0
        %v4200 = vadd.f32 %v4129, %v4199
        %v4201 = vpop.f32.mrf.mxu0
        %v4202 = vadd.f32 %v4131, %v4201
        %v4203 = vpop.f32.mrf.mxu0
        %v4204 = vadd.f32 %v4133, %v4203
        %4205 = vmatprep.mubr.bf16.mxu0 %v2397
        %4206 = vmatmul.mubr.bf16.gmra.mxu0 %v2381
        %v4207 = vpop.f32.mrf.mxu0
        %v4208 = vadd.f32 %v4137, %v4207
        %v4209 = vpop.f32.mrf.mxu0
        %v4210 = vadd.f32 %v4139, %v4209
        %v4211 = vpop.f32.mrf.mxu0
        %v4212 = vpop.f32.mrf.mxu0
        %4213 = vdwg.mxu0
        %4214 = vmatprep.subr.bf16.mxu0 %v3642
        %4215 = vmatpush1.bf16.xpose.msra.mxu0 %v3641
        %4216 = vmatprep.subr.bf16.mxu0 %v3615
        %4217 = vmatpush1.bf16.xpose.msra.mxu0 %v3614
        %4218 = vmatprep.subr.bf16.mxu0 %v3588
        %4219 = vmatpush1.bf16.xpose.msra.mxu0 %v3587
        %4220 = vmatprep.subr.bf16.mxu0 %v3561
        %4221 = vmatpush1.bf16.xpose.msra.mxu0 %v3560
        %4222 = vmatprep.subr.bf16.mxu0 %v3534
        %4223 = vmatpush1.bf16.xpose.msra.mxu0 %v3533
        %4224 = vmatprep.subr.bf16.mxu0 %v3507
        %4225 = vmatpush1.bf16.xpose.msra.mxu0 %v3506
        %4226 = vmatprep.subr.bf16.mxu0 %v3480
        %4227 = vmatpush1.bf16.xpose.msra.mxu0 %v3479
        %4228 = vmatprep.subr.bf16.mxu0 %v3453
        %4229 = vmatpush1.bf16.xpose.msra.mxu0 %v3452
        %4230 = vmatprep.subr.bf16.mxu0 0
        %4231 = vmatpush2.bf16.xpose.msra.mxu0 0
        %4232 = vmatprep.subr.bf16.mxu0 0
        %4233 = vmatpush2.bf16.xpose.msra.mxu0 0
        %4234 = vmatprep.subr.bf16.mxu0 0
        %4235 = vmatpush2.bf16.xpose.msra.mxu0 0
        %4236 = vmatprep.subr.bf16.mxu0 0
        %4237 = vmatpush2.bf16.xpose.msra.mxu0 0
        %4238 = vmatprep.subr.bf16.mxu0 0
        %4239 = vmatpush2.bf16.xpose.msra.mxu0 0
        %4240 = vmatprep.subr.bf16.mxu0 0
        %4241 = vmatpush2.bf16.xpose.msra.mxu0 0
        %4242 = vmatprep.subr.bf16.mxu0 0
        %4243 = vmatpush2.bf16.xpose.msra.mxu0 0
        %4244 = vmatprep.subr.bf16.mxu0 %v3669
        %4245 = vmatpush2.bf16.xpose.msra.mxu0 %v3668
        %4246 = vmatprep.mubr.bf16.mxu0 %v2426
        %4247 = vmatmul.mubr.bf16.gmra.mxu0 %v2410
        %v4248 = vpop.f32.mrf.mxu0
        %v4249 = vadd.f32 %v4178, %v4248
        %v4250 = vpop.f32.mrf.mxu0
        %v4251 = vadd.f32 %v4180, %v4250
        %v4252 = vpop.f32.mrf.mxu0
        %v4253 = vadd.f32 %v4182, %v4252
        %v4254 = vpop.f32.mrf.mxu0
        %v4255 = vadd.f32 %v4184, %v4254
        %4256 = vmatprep.mubr.bf16.mxu0 %v2427
        %4257 = vmatmul.mubr.bf16.gmra.mxu0 %v2411
        %v4258 = vpop.f32.mrf.mxu0
        %v4259 = vadd.f32 %v4188, %v4258
        %v4260 = vpop.f32.mrf.mxu0
        %v4261 = vadd.f32 %v4190, %v4260
        %v4262 = vpop.f32.mrf.mxu0
        %v4263 = vadd.f32 %v4192, %v4262
        %v4264 = vpop.f32.mrf.mxu0
        %v4265 = vadd.f32 %v4194, %v4264
        %4266 = vmatprep.mubr.bf16.mxu0 %v2428
        %4267 = vmatmul.mubr.bf16.gmra.mxu0 %v2412
        %v4268 = vpop.f32.mrf.mxu0
        %v4269 = vadd.f32 %v4198, %v4268
        %v4270 = vpop.f32.mrf.mxu0
        %v4271 = vadd.f32 %v4200, %v4270
        %v4272 = vpop.f32.mrf.mxu0
        %v4273 = vadd.f32 %v4202, %v4272
        %v4274 = vpop.f32.mrf.mxu0
        %v4275 = vadd.f32 %v4204, %v4274
        %4276 = vmatprep.mubr.bf16.mxu0 %v2429
        %4277 = vmatmul.mubr.bf16.gmra.mxu0 %v2413
        %v4278 = vpop.f32.mrf.mxu0
        %v4279 = vadd.f32 %v4208, %v4278
        %v4280 = vpop.f32.mrf.mxu0
        %v4281 = vadd.f32 %v4210, %v4280
        %v4282 = vpop.f32.mrf.mxu0
        %v4283 = vpop.f32.mrf.mxu0
        %4284 = vdwg.mxu0
        %4285 = vmatprep.subr.bf16.mxu0 %v3644
        %4286 = vmatpush1.bf16.xpose.msra.mxu0 %v3643
        %4287 = vmatprep.subr.bf16.mxu0 %v3617
        %4288 = vmatpush1.bf16.xpose.msra.mxu0 %v3616
        %4289 = vmatprep.subr.bf16.mxu0 %v3590
        %4290 = vmatpush1.bf16.xpose.msra.mxu0 %v3589
        %4291 = vmatprep.subr.bf16.mxu0 %v3563
        %4292 = vmatpush1.bf16.xpose.msra.mxu0 %v3562
        %4293 = vmatprep.subr.bf16.mxu0 %v3536
        %4294 = vmatpush1.bf16.xpose.msra.mxu0 %v3535
        %4295 = vmatprep.subr.bf16.mxu0 %v3509
        %4296 = vmatpush1.bf16.xpose.msra.mxu0 %v3508
        %4297 = vmatprep.subr.bf16.mxu0 %v3482
        %4298 = vmatpush1.bf16.xpose.msra.mxu0 %v3481
        %4299 = vmatprep.subr.bf16.mxu0 %v3455
        %4300 = vmatpush1.bf16.xpose.msra.mxu0 %v3454
        %4301 = vmatprep.subr.bf16.mxu0 0
        %4302 = vmatpush2.bf16.xpose.msra.mxu0 0
        %4303 = vmatprep.subr.bf16.mxu0 0
        %4304 = vmatpush2.bf16.xpose.msra.mxu0 0
        %4305 = vmatprep.subr.bf16.mxu0 0
        %4306 = vmatpush2.bf16.xpose.msra.mxu0 0
        %4307 = vmatprep.subr.bf16.mxu0 0
        %4308 = vmatpush2.bf16.xpose.msra.mxu0 0
        %4309 = vmatprep.subr.bf16.mxu0 0
        %4310 = vmatpush2.bf16.xpose.msra.mxu0 0
        %4311 = vmatprep.subr.bf16.mxu0 0
        %4312 = vmatpush2.bf16.xpose.msra.mxu0 0
        %4313 = vmatprep.subr.bf16.mxu0 0
        %4314 = vmatpush2.bf16.xpose.msra.mxu0 0
        %4315 = vmatprep.subr.bf16.mxu0 %v3671
        %4316 = vmatpush2.bf16.xpose.msra.mxu0 %v3670
        %4317 = vmatprep.mubr.bf16.mxu0 %v2458
        %4318 = vmatmul.mubr.bf16.gmra.mxu0 %v2442
        %v4319 = vpop.f32.mrf.mxu0
        %v4320 = vadd.f32 %v4249, %v4319
        %v4321 = vpop.f32.mrf.mxu0
        %v4322 = vadd.f32 %v4251, %v4321
        %v4323 = vpop.f32.mrf.mxu0
        %v4324 = vadd.f32 %v4253, %v4323
        %v4325 = vpop.f32.mrf.mxu0
        %v4326 = vadd.f32 %v4255, %v4325
        %4327 = vmatprep.mubr.bf16.mxu0 %v2459
        %4328 = vmatmul.mubr.bf16.gmra.mxu0 %v2443
        %v4329 = vpop.f32.mrf.mxu0
        %v4330 = vadd.f32 %v4259, %v4329
        %v4331 = vpop.f32.mrf.mxu0
        %v4332 = vadd.f32 %v4261, %v4331
        %v4333 = vpop.f32.mrf.mxu0
        %v4334 = vadd.f32 %v4263, %v4333
        %v4335 = vpop.f32.mrf.mxu0
        %v4336 = vadd.f32 %v4265, %v4335
        %4337 = vmatprep.mubr.bf16.mxu0 %v2460
        %4338 = vmatmul.mubr.bf16.gmra.mxu0 %v2444
        %v4339 = vpop.f32.mrf.mxu0
        %v4340 = vadd.f32 %v4269, %v4339
        %v4341 = vpop.f32.mrf.mxu0
        %v4342 = vadd.f32 %v4271, %v4341
        %v4343 = vpop.f32.mrf.mxu0
        %v4344 = vadd.f32 %v4273, %v4343
        %v4345 = vpop.f32.mrf.mxu0
        %v4346 = vadd.f32 %v4275, %v4345
        %4347 = vmatprep.mubr.bf16.mxu0 %v2461
        %4348 = vmatmul.mubr.bf16.gmra.mxu0 %v2445
        %v4349 = vpop.f32.mrf.mxu0
        %v4350 = vadd.f32 %v4279, %v4349
        %v4351 = vpop.f32.mrf.mxu0
        %v4352 = vadd.f32 %v4281, %v4351
        %v4353 = vpop.f32.mrf.mxu0
        %v4354 = vpop.f32.mrf.mxu0
        %4355 = vdwg.mxu0
        %4356 = vmatprep.subr.bf16.mxu0 %v3646
        %4357 = vmatpush1.bf16.xpose.msra.mxu0 %v3645
        %4358 = vmatprep.subr.bf16.mxu0 %v3619
        %4359 = vmatpush1.bf16.xpose.msra.mxu0 %v3618
        %4360 = vmatprep.subr.bf16.mxu0 %v3592
        %4361 = vmatpush1.bf16.xpose.msra.mxu0 %v3591
        %4362 = vmatprep.subr.bf16.mxu0 %v3565
        %4363 = vmatpush1.bf16.xpose.msra.mxu0 %v3564
        %4364 = vmatprep.subr.bf16.mxu0 %v3538
        %4365 = vmatpush1.bf16.xpose.msra.mxu0 %v3537
        %4366 = vmatprep.subr.bf16.mxu0 %v3511
        %4367 = vmatpush1.bf16.xpose.msra.mxu0 %v3510
        %4368 = vmatprep.subr.bf16.mxu0 %v3484
        %4369 = vmatpush1.bf16.xpose.msra.mxu0 %v3483
        %4370 = vmatprep.subr.bf16.mxu0 %v3457
        %4371 = vmatpush1.bf16.xpose.msra.mxu0 %v3456
        %4372 = vmatprep.subr.bf16.mxu0 0
        %4373 = vmatpush2.bf16.xpose.msra.mxu0 0
        %4374 = vmatprep.subr.bf16.mxu0 0
        %4375 = vmatpush2.bf16.xpose.msra.mxu0 0
        %4376 = vmatprep.subr.bf16.mxu0 0
        %4377 = vmatpush2.bf16.xpose.msra.mxu0 0
        %4378 = vmatprep.subr.bf16.mxu0 0
        %4379 = vmatpush2.bf16.xpose.msra.mxu0 0
        %4380 = vmatprep.subr.bf16.mxu0 0
        %4381 = vmatpush2.bf16.xpose.msra.mxu0 0
        %4382 = vmatprep.subr.bf16.mxu0 0
        %4383 = vmatpush2.bf16.xpose.msra.mxu0 0
        %4384 = vmatprep.subr.bf16.mxu0 0
        %4385 = vmatpush2.bf16.xpose.msra.mxu0 0
        %4386 = vmatprep.subr.bf16.mxu0 %v3673
        %4387 = vmatpush2.bf16.xpose.msra.mxu0 %v3672
        %4388 = vmatprep.mubr.bf16.mxu0 %v2490
        %4389 = vmatmul.mubr.bf16.gmra.mxu0 %v2474
        %v4390 = vpop.f32.mrf.mxu0
        %v4391 = vadd.f32 %v4320, %v4390
        %v4392 = vpop.f32.mrf.mxu0
        %v4393 = vadd.f32 %v4322, %v4392
        %v4394 = vpop.f32.mrf.mxu0
        %v4395 = vadd.f32 %v4324, %v4394
        %v4396 = vpop.f32.mrf.mxu0
        %v4397 = vadd.f32 %v4326, %v4396
        %4398 = vmatprep.mubr.bf16.mxu0 %v2491
        %4399 = vmatmul.mubr.bf16.gmra.mxu0 %v2475
        %v4400 = vpop.f32.mrf.mxu0
        %v4401 = vadd.f32 %v4330, %v4400
        %v4402 = vpop.f32.mrf.mxu0
        %v4403 = vadd.f32 %v4332, %v4402
        %v4404 = vpop.f32.mrf.mxu0
        %v4405 = vadd.f32 %v4334, %v4404
        %v4406 = vpop.f32.mrf.mxu0
        %v4407 = vadd.f32 %v4336, %v4406
        %4408 = vmatprep.mubr.bf16.mxu0 %v2492
        %4409 = vmatmul.mubr.bf16.gmra.mxu0 %v2476
        %v4410 = vpop.f32.mrf.mxu0
        %v4411 = vadd.f32 %v4340, %v4410
        %v4412 = vpop.f32.mrf.mxu0
        %v4413 = vadd.f32 %v4342, %v4412
        %v4414 = vpop.f32.mrf.mxu0
        %v4415 = vadd.f32 %v4344, %v4414
        %v4416 = vpop.f32.mrf.mxu0
        %v4417 = vadd.f32 %v4346, %v4416
        %4418 = vmatprep.mubr.bf16.mxu0 %v2493
        %4419 = vmatmul.mubr.bf16.gmra.mxu0 %v2477
        %v4420 = vpop.f32.mrf.mxu0
        %v4421 = vadd.f32 %v4350, %v4420
        %v4422 = vpop.f32.mrf.mxu0
        %v4423 = vadd.f32 %v4352, %v4422
        %v4424 = vpop.f32.mrf.mxu0
        %v4425 = vpop.f32.mrf.mxu0
        %4426 = vdwg.mxu0
        %4427 = vmatprep.subr.bf16.mxu0 %v3648
        %4428 = vmatpush1.bf16.xpose.msra.mxu0 %v3647
        %4429 = vmatprep.subr.bf16.mxu0 %v3621
        %4430 = vmatpush1.bf16.xpose.msra.mxu0 %v3620
        %4431 = vmatprep.subr.bf16.mxu0 %v3594
        %4432 = vmatpush1.bf16.xpose.msra.mxu0 %v3593
        %4433 = vmatprep.subr.bf16.mxu0 %v3567
        %4434 = vmatpush1.bf16.xpose.msra.mxu0 %v3566
        %4435 = vmatprep.subr.bf16.mxu0 %v3540
        %4436 = vmatpush1.bf16.xpose.msra.mxu0 %v3539
        %4437 = vmatprep.subr.bf16.mxu0 %v3513
        %4438 = vmatpush1.bf16.xpose.msra.mxu0 %v3512
        %4439 = vmatprep.subr.bf16.mxu0 %v3486
        %4440 = vmatpush1.bf16.xpose.msra.mxu0 %v3485
        %4441 = vmatprep.subr.bf16.mxu0 %v3459
        %4442 = vmatpush1.bf16.xpose.msra.mxu0 %v3458
        %4443 = vmatprep.subr.bf16.mxu0 0
        %4444 = vmatpush2.bf16.xpose.msra.mxu0 0
        %4445 = vmatprep.subr.bf16.mxu0 0
        %4446 = vmatpush2.bf16.xpose.msra.mxu0 0
        %4447 = vmatprep.subr.bf16.mxu0 0
        %4448 = vmatpush2.bf16.xpose.msra.mxu0 0
        %4449 = vmatprep.subr.bf16.mxu0 0
        %4450 = vmatpush2.bf16.xpose.msra.mxu0 0
        %4451 = vmatprep.subr.bf16.mxu0 0
        %4452 = vmatpush2.bf16.xpose.msra.mxu0 0
        %4453 = vmatprep.subr.bf16.mxu0 0
        %4454 = vmatpush2.bf16.xpose.msra.mxu0 0
        %4455 = vmatprep.subr.bf16.mxu0 0
        %4456 = vmatpush2.bf16.xpose.msra.mxu0 0
        %4457 = vmatprep.subr.bf16.mxu0 %v3675
        %4458 = vmatpush2.bf16.xpose.msra.mxu0 %v3674
        %4459 = vmatprep.mubr.bf16.mxu0 %v2522
        %4460 = vmatmul.mubr.bf16.gmra.mxu0 %v2506
        %v4461 = vpop.f32.mrf.mxu0
        %v4462 = vadd.f32 %v4391, %v4461
        %v4463 = vpop.f32.mrf.mxu0
        %v4464 = vadd.f32 %v4393, %v4463
        %v4465 = vpop.f32.mrf.mxu0
        %v4466 = vadd.f32 %v4395, %v4465
        %v4467 = vpop.f32.mrf.mxu0
        %v4468 = vadd.f32 %v4397, %v4467
        %4469 = vmatprep.mubr.bf16.mxu0 %v2523
        %4470 = vmatmul.mubr.bf16.gmra.mxu0 %v2507
        %v4471 = vpop.f32.mrf.mxu0
        %v4472 = vadd.f32 %v4401, %v4471
        %v4473 = vpop.f32.mrf.mxu0
        %v4474 = vadd.f32 %v4403, %v4473
        %v4475 = vpop.f32.mrf.mxu0
        %v4476 = vadd.f32 %v4405, %v4475
        %v4477 = vpop.f32.mrf.mxu0
        %v4478 = vadd.f32 %v4407, %v4477
        %4479 = vmatprep.mubr.bf16.mxu0 %v2524
        %4480 = vmatmul.mubr.bf16.gmra.mxu0 %v2508
        %v4481 = vpop.f32.mrf.mxu0
        %v4482 = vadd.f32 %v4411, %v4481
        %v4483 = vpop.f32.mrf.mxu0
        %v4484 = vadd.f32 %v4413, %v4483
        %v4485 = vpop.f32.mrf.mxu0
        %v4486 = vadd.f32 %v4415, %v4485
        %v4487 = vpop.f32.mrf.mxu0
        %v4488 = vadd.f32 %v4417, %v4487
        %4489 = vmatprep.mubr.bf16.mxu0 %v2525
        %4490 = vmatmul.mubr.bf16.gmra.mxu0 %v2509
        %v4491 = vpop.f32.mrf.mxu0
        %v4492 = vadd.f32 %v4421, %v4491
        %v4493 = vpop.f32.mrf.mxu0
        %v4494 = vadd.f32 %v4423, %v4493
        %v4495 = vpop.f32.mrf.mxu0
        %v4496 = vpop.f32.mrf.mxu0
        %4497 = vdwg.mxu0
        %4498 = vmatprep.subr.bf16.mxu0 %v3650
        %4499 = vmatpush1.bf16.xpose.msra.mxu0 %v3649
        %4500 = vmatprep.subr.bf16.mxu0 %v3623
        %4501 = vmatpush1.bf16.xpose.msra.mxu0 %v3622
        %4502 = vmatprep.subr.bf16.mxu0 %v3596
        %4503 = vmatpush1.bf16.xpose.msra.mxu0 %v3595
        %4504 = vmatprep.subr.bf16.mxu0 %v3569
        %4505 = vmatpush1.bf16.xpose.msra.mxu0 %v3568
        %4506 = vmatprep.subr.bf16.mxu0 %v3542
        %4507 = vmatpush1.bf16.xpose.msra.mxu0 %v3541
        %4508 = vmatprep.subr.bf16.mxu0 %v3515
        %4509 = vmatpush1.bf16.xpose.msra.mxu0 %v3514
        %4510 = vmatprep.subr.bf16.mxu0 %v3488
        %4511 = vmatpush1.bf16.xpose.msra.mxu0 %v3487
        %4512 = vmatprep.subr.bf16.mxu0 %v3461
        %4513 = vmatpush1.bf16.xpose.msra.mxu0 %v3460
        %4514 = vmatprep.subr.bf16.mxu0 0
        %4515 = vmatpush2.bf16.xpose.msra.mxu0 0
        %4516 = vmatprep.subr.bf16.mxu0 0
        %4517 = vmatpush2.bf16.xpose.msra.mxu0 0
        %4518 = vmatprep.subr.bf16.mxu0 0
        %4519 = vmatpush2.bf16.xpose.msra.mxu0 0
        %4520 = vmatprep.subr.bf16.mxu0 0
        %4521 = vmatpush2.bf16.xpose.msra.mxu0 0
        %4522 = vmatprep.subr.bf16.mxu0 0
        %4523 = vmatpush2.bf16.xpose.msra.mxu0 0
        %4524 = vmatprep.subr.bf16.mxu0 0
        %4525 = vmatpush2.bf16.xpose.msra.mxu0 0
        %4526 = vmatprep.subr.bf16.mxu0 0
        %4527 = vmatpush2.bf16.xpose.msra.mxu0 0
        %4528 = vmatprep.subr.bf16.mxu0 %v3677
        %4529 = vmatpush2.bf16.xpose.msra.mxu0 %v3676
        %4530 = vmatprep.mubr.bf16.mxu0 %v2554
        %4531 = vmatmul.mubr.bf16.gmra.mxu0 %v2538
        %v4532 = vpop.f32.mrf.mxu0
        %v4533 = vadd.f32 %v4462, %v4532
        %v4534 = vpop.f32.mrf.mxu0
        %v4535 = vadd.f32 %v4464, %v4534
        %v4536 = vpop.f32.mrf.mxu0
        %v4537 = vadd.f32 %v4466, %v4536
        %v4538 = vpop.f32.mrf.mxu0
        %v4539 = vadd.f32 %v4468, %v4538
        %4540 = vmatprep.mubr.bf16.mxu0 %v2555
        %4541 = vmatmul.mubr.bf16.gmra.mxu0 %v2539
        %v4542 = vpop.f32.mrf.mxu0
        %v4543 = vadd.f32 %v4472, %v4542
        %v4544 = vpop.f32.mrf.mxu0
        %v4545 = vadd.f32 %v4474, %v4544
        %v4546 = vpop.f32.mrf.mxu0
        %v4547 = vadd.f32 %v4476, %v4546
        %v4548 = vpop.f32.mrf.mxu0
        %v4549 = vadd.f32 %v4478, %v4548
        %4550 = vmatprep.mubr.bf16.mxu0 %v2556
        %4551 = vmatmul.mubr.bf16.gmra.mxu0 %v2540
        %v4552 = vpop.f32.mrf.mxu0
        %v4553 = vadd.f32 %v4482, %v4552
        %v4554 = vpop.f32.mrf.mxu0
        %v4555 = vadd.f32 %v4484, %v4554
        %v4556 = vpop.f32.mrf.mxu0
        %v4557 = vadd.f32 %v4486, %v4556
        %v4558 = vpop.f32.mrf.mxu0
        %v4559 = vadd.f32 %v4488, %v4558
        %4560 = vmatprep.mubr.bf16.mxu0 %v2557
        %4561 = vmatmul.mubr.bf16.gmra.mxu0 %v2541
        %v4562 = vpop.f32.mrf.mxu0
        %v4563 = vadd.f32 %v4492, %v4562
        %v4564 = vpop.f32.mrf.mxu0
        %v4565 = vadd.f32 %v4494, %v4564
        %v4566 = vpop.f32.mrf.mxu0
        %v4567 = vpop.f32.mrf.mxu0
        %4568 = vdwg.mxu0
        %4569 = vmatprep.subr.bf16.mxu0 %v3652
        %4570 = vmatpush1.bf16.xpose.msra.mxu0 %v3651
        %4571 = vmatprep.subr.bf16.mxu0 %v3625
        %4572 = vmatpush1.bf16.xpose.msra.mxu0 %v3624
        %4573 = vmatprep.subr.bf16.mxu0 %v3598
        %4574 = vmatpush1.bf16.xpose.msra.mxu0 %v3597
        %4575 = vmatprep.subr.bf16.mxu0 %v3571
        %4576 = vmatpush1.bf16.xpose.msra.mxu0 %v3570
        %4577 = vmatprep.subr.bf16.mxu0 %v3544
        %4578 = vmatpush1.bf16.xpose.msra.mxu0 %v3543
        %4579 = vmatprep.subr.bf16.mxu0 %v3517
        %4580 = vmatpush1.bf16.xpose.msra.mxu0 %v3516
        %4581 = vmatprep.subr.bf16.mxu0 %v3490
        %4582 = vmatpush1.bf16.xpose.msra.mxu0 %v3489
        %4583 = vmatprep.subr.bf16.mxu0 %v3463
        %4584 = vmatpush1.bf16.xpose.msra.mxu0 %v3462
        %4585 = vmatprep.subr.bf16.mxu0 0
        %4586 = vmatpush2.bf16.xpose.msra.mxu0 0
        %4587 = vmatprep.subr.bf16.mxu0 0
        %4588 = vmatpush2.bf16.xpose.msra.mxu0 0
        %4589 = vmatprep.subr.bf16.mxu0 0
        %4590 = vmatpush2.bf16.xpose.msra.mxu0 0
        %4591 = vmatprep.subr.bf16.mxu0 0
        %4592 = vmatpush2.bf16.xpose.msra.mxu0 0
        %4593 = vmatprep.subr.bf16.mxu0 0
        %4594 = vmatpush2.bf16.xpose.msra.mxu0 0
        %4595 = vmatprep.subr.bf16.mxu0 0
        %4596 = vmatpush2.bf16.xpose.msra.mxu0 0
        %4597 = vmatprep.subr.bf16.mxu0 0
        %4598 = vmatpush2.bf16.xpose.msra.mxu0 0
        %4599 = vmatprep.subr.bf16.mxu0 %v3679
        %4600 = vmatpush2.bf16.xpose.msra.mxu0 %v3678
        %4601 = vmatprep.mubr.bf16.mxu0 %v2586
        %4602 = vmatmul.mubr.bf16.gmra.mxu0 %v2570
        %v4603 = vpop.f32.mrf.mxu0
        %v4604 = vadd.f32 %v4533, %v4603
        %v4605 = vpop.f32.mrf.mxu0
        %v4606 = vadd.f32 %v4535, %v4605
        %v4607 = vpop.f32.mrf.mxu0
        %v4608 = vadd.f32 %v4537, %v4607
        %v4609 = vpop.f32.mrf.mxu0
        %v4610 = vadd.f32 %v4539, %v4609
        %4611 = vmatprep.mubr.bf16.mxu0 %v2587
        %4612 = vmatmul.mubr.bf16.gmra.mxu0 %v2571
        %v4613 = vpop.f32.mrf.mxu0
        %v4614 = vadd.f32 %v4543, %v4613
        %v4615 = vpop.f32.mrf.mxu0
        %v4616 = vadd.f32 %v4545, %v4615
        %v4617 = vpop.f32.mrf.mxu0
        %v4618 = vadd.f32 %v4547, %v4617
        %v4619 = vpop.f32.mrf.mxu0
        %v4620 = vadd.f32 %v4549, %v4619
        %4621 = vmatprep.mubr.bf16.mxu0 %v2588
        %4622 = vmatmul.mubr.bf16.gmra.mxu0 %v2572
        %v4623 = vpop.f32.mrf.mxu0
        %v4624 = vadd.f32 %v4553, %v4623
        %v4625 = vpop.f32.mrf.mxu0
        %v4626 = vadd.f32 %v4555, %v4625
        %v4627 = vpop.f32.mrf.mxu0
        %v4628 = vadd.f32 %v4557, %v4627
        %v4629 = vpop.f32.mrf.mxu0
        %v4630 = vadd.f32 %v4559, %v4629
        %4631 = vmatprep.mubr.bf16.mxu0 %v2589
        %4632 = vmatmul.mubr.bf16.gmra.mxu0 %v2573
        %v4633 = vpop.f32.mrf.mxu0
        %v4634 = vadd.f32 %v4563, %v4633
        %v4635 = vpop.f32.mrf.mxu0
        %v4636 = vadd.f32 %v4565, %v4635
        %v4637 = vpop.f32.mrf.mxu0
        %v4638 = vpop.f32.mrf.mxu0
        %4639 = vdwg.mxu0
        %4640 = vmatprep.subr.bf16.mxu0 %v3654
        %4641 = vmatpush1.bf16.xpose.msra.mxu0 %v3653
        %4642 = vmatprep.subr.bf16.mxu0 %v3627
        %4643 = vmatpush1.bf16.xpose.msra.mxu0 %v3626
        %4644 = vmatprep.subr.bf16.mxu0 %v3600
        %4645 = vmatpush1.bf16.xpose.msra.mxu0 %v3599
        %4646 = vmatprep.subr.bf16.mxu0 %v3573
        %4647 = vmatpush1.bf16.xpose.msra.mxu0 %v3572
        %4648 = vmatprep.subr.bf16.mxu0 %v3546
        %4649 = vmatpush1.bf16.xpose.msra.mxu0 %v3545
        %4650 = vmatprep.subr.bf16.mxu0 %v3519
        %4651 = vmatpush1.bf16.xpose.msra.mxu0 %v3518
        %4652 = vmatprep.subr.bf16.mxu0 %v3492
        %4653 = vmatpush1.bf16.xpose.msra.mxu0 %v3491
        %4654 = vmatprep.subr.bf16.mxu0 %v3465
        %4655 = vmatpush1.bf16.xpose.msra.mxu0 %v3464
        %4656 = vmatprep.subr.bf16.mxu0 0
        %4657 = vmatpush2.bf16.xpose.msra.mxu0 0
        %4658 = vmatprep.subr.bf16.mxu0 0
        %4659 = vmatpush2.bf16.xpose.msra.mxu0 0
        %4660 = vmatprep.subr.bf16.mxu0 0
        %4661 = vmatpush2.bf16.xpose.msra.mxu0 0
        %4662 = vmatprep.subr.bf16.mxu0 0
        %4663 = vmatpush2.bf16.xpose.msra.mxu0 0
        %4664 = vmatprep.subr.bf16.mxu0 0
        %4665 = vmatpush2.bf16.xpose.msra.mxu0 0
        %4666 = vmatprep.subr.bf16.mxu0 0
        %4667 = vmatpush2.bf16.xpose.msra.mxu0 0
        %4668 = vmatprep.subr.bf16.mxu0 0
        %4669 = vmatpush2.bf16.xpose.msra.mxu0 0
        %4670 = vmatprep.subr.bf16.mxu0 %v3681
        %4671 = vmatpush2.bf16.xpose.msra.mxu0 %v3680
        %4672 = vmatprep.mubr.bf16.mxu0 %v2618
        %4673 = vmatmul.mubr.bf16.gmra.mxu0 %v2602
        %v4674 = vpop.f32.mrf.mxu0
        %v4675 = vadd.f32 %v4604, %v4674
        %v4676 = vpop.f32.mrf.mxu0
        %v4677 = vadd.f32 %v4606, %v4676
        %v4678 = vpop.f32.mrf.mxu0
        %v4679 = vadd.f32 %v4608, %v4678
        %v4680 = vpop.f32.mrf.mxu0
        %v4681 = vadd.f32 %v4610, %v4680
        %4682 = vmatprep.mubr.bf16.mxu0 %v2619
        %4683 = vmatmul.mubr.bf16.gmra.mxu0 %v2603
        %v4684 = vpop.f32.mrf.mxu0
        %v4685 = vadd.f32 %v4614, %v4684
        %v4686 = vpop.f32.mrf.mxu0
        %v4687 = vadd.f32 %v4616, %v4686
        %v4688 = vpop.f32.mrf.mxu0
        %v4689 = vadd.f32 %v4618, %v4688
        %v4690 = vpop.f32.mrf.mxu0
        %v4691 = vadd.f32 %v4620, %v4690
        %4692 = vmatprep.mubr.bf16.mxu0 %v2620
        %4693 = vmatmul.mubr.bf16.gmra.mxu0 %v2604
        %v4694 = vpop.f32.mrf.mxu0
        %v4695 = vadd.f32 %v4624, %v4694
        %v4696 = vpop.f32.mrf.mxu0
        %v4697 = vadd.f32 %v4626, %v4696
        %v4698 = vpop.f32.mrf.mxu0
        %v4699 = vadd.f32 %v4628, %v4698
        %v4700 = vpop.f32.mrf.mxu0
        %v4701 = vadd.f32 %v4630, %v4700
        %4702 = vmatprep.mubr.bf16.mxu0 %v2621
        %4703 = vmatmul.mubr.bf16.gmra.mxu0 %v2605
        %v4704 = vpop.f32.mrf.mxu0
        %v4705 = vadd.f32 %v4634, %v4704
        %v4706 = vpop.f32.mrf.mxu0
        %v4707 = vadd.f32 %v4636, %v4706
        %v4708 = vpop.f32.mrf.mxu0
        %v4709 = vpop.f32.mrf.mxu0
        %4710 = vdwg.mxu0
        %4711 = vmatprep.subr.bf16.mxu0 %v3656
        %4712 = vmatpush1.bf16.xpose.msra.mxu0 %v3655
        %4713 = vmatprep.subr.bf16.mxu0 %v3629
        %4714 = vmatpush1.bf16.xpose.msra.mxu0 %v3628
        %4715 = vmatprep.subr.bf16.mxu0 %v3602
        %4716 = vmatpush1.bf16.xpose.msra.mxu0 %v3601
        %4717 = vmatprep.subr.bf16.mxu0 %v3575
        %4718 = vmatpush1.bf16.xpose.msra.mxu0 %v3574
        %4719 = vmatprep.subr.bf16.mxu0 %v3548
        %4720 = vmatpush1.bf16.xpose.msra.mxu0 %v3547
        %4721 = vmatprep.subr.bf16.mxu0 %v3521
        %4722 = vmatpush1.bf16.xpose.msra.mxu0 %v3520
        %4723 = vmatprep.subr.bf16.mxu0 %v3494
        %4724 = vmatpush1.bf16.xpose.msra.mxu0 %v3493
        %4725 = vmatprep.subr.bf16.mxu0 %v3467
        %4726 = vmatpush1.bf16.xpose.msra.mxu0 %v3466
        %4727 = vmatprep.subr.bf16.mxu0 0
        %4728 = vmatpush2.bf16.xpose.msra.mxu0 0
        %4729 = vmatprep.subr.bf16.mxu0 0
        %4730 = vmatpush2.bf16.xpose.msra.mxu0 0
        %4731 = vmatprep.subr.bf16.mxu0 0
        %4732 = vmatpush2.bf16.xpose.msra.mxu0 0
        %4733 = vmatprep.subr.bf16.mxu0 0
        %4734 = vmatpush2.bf16.xpose.msra.mxu0 0
        %4735 = vmatprep.subr.bf16.mxu0 0
        %4736 = vmatpush2.bf16.xpose.msra.mxu0 0
        %4737 = vmatprep.subr.bf16.mxu0 0
        %4738 = vmatpush2.bf16.xpose.msra.mxu0 0
        %4739 = vmatprep.subr.bf16.mxu0 0
        %4740 = vmatpush2.bf16.xpose.msra.mxu0 0
        %4741 = vmatprep.subr.bf16.mxu0 %v3683
        %4742 = vmatpush2.bf16.xpose.msra.mxu0 %v3682
        %4743 = vmatprep.mubr.bf16.mxu0 %v2650
        %4744 = vmatmul.mubr.bf16.gmra.mxu0 %v2634
        %v4745 = vpop.f32.mrf.mxu0
        %v4746 = vadd.f32 %v4675, %v4745
        %v4747 = vpop.f32.mrf.mxu0
        %v4748 = vadd.f32 %v4677, %v4747
        %v4749 = vpop.f32.mrf.mxu0
        %v4750 = vadd.f32 %v4679, %v4749
        %v4751 = vpop.f32.mrf.mxu0
        %v4752 = vadd.f32 %v4681, %v4751
        %4753 = vmatprep.mubr.bf16.mxu0 %v2651
        %4754 = vmatmul.mubr.bf16.gmra.mxu0 %v2635
        %v4755 = vpop.f32.mrf.mxu0
        %v4756 = vadd.f32 %v4685, %v4755
        %v4757 = vpop.f32.mrf.mxu0
        %v4758 = vadd.f32 %v4687, %v4757
        %v4759 = vpop.f32.mrf.mxu0
        %v4760 = vadd.f32 %v4689, %v4759
        %v4761 = vpop.f32.mrf.mxu0
        %v4762 = vadd.f32 %v4691, %v4761
        %4763 = vmatprep.mubr.bf16.mxu0 %v2652
        %4764 = vmatmul.mubr.bf16.gmra.mxu0 %v2636
        %v4765 = vpop.f32.mrf.mxu0
        %v4766 = vadd.f32 %v4695, %v4765
        %v4767 = vpop.f32.mrf.mxu0
        %v4768 = vadd.f32 %v4697, %v4767
        %v4769 = vpop.f32.mrf.mxu0
        %v4770 = vadd.f32 %v4699, %v4769
        %v4771 = vpop.f32.mrf.mxu0
        %v4772 = vadd.f32 %v4701, %v4771
        %4773 = vmatprep.mubr.bf16.mxu0 %v2653
        %4774 = vmatmul.mubr.bf16.gmra.mxu0 %v2637
        %v4775 = vpop.f32.mrf.mxu0
        %v4776 = vadd.f32 %v4705, %v4775
        %v4777 = vpop.f32.mrf.mxu0
        %v4778 = vadd.f32 %v4707, %v4777
        %v4779 = vpop.f32.mrf.mxu0
        %v4780 = vpop.f32.mrf.mxu0
        %4781 = vdwg.mxu0
        %4782 = vmatprep.subr.bf16.mxu0 %v3658
        %4783 = vmatpush1.bf16.xpose.msra.mxu0 %v3657
        %4784 = vmatprep.subr.bf16.mxu0 %v3631
        %4785 = vmatpush1.bf16.xpose.msra.mxu0 %v3630
        %4786 = vmatprep.subr.bf16.mxu0 %v3604
        %4787 = vmatpush1.bf16.xpose.msra.mxu0 %v3603
        %4788 = vmatprep.subr.bf16.mxu0 %v3577
        %4789 = vmatpush1.bf16.xpose.msra.mxu0 %v3576
        %4790 = vmatprep.subr.bf16.mxu0 %v3550
        %4791 = vmatpush1.bf16.xpose.msra.mxu0 %v3549
        %4792 = vmatprep.subr.bf16.mxu0 %v3523
        %4793 = vmatpush1.bf16.xpose.msra.mxu0 %v3522
        %4794 = vmatprep.subr.bf16.mxu0 %v3496
        %4795 = vmatpush1.bf16.xpose.msra.mxu0 %v3495
        %4796 = vmatprep.subr.bf16.mxu0 %v3469
        %4797 = vmatpush1.bf16.xpose.msra.mxu0 %v3468
        %4798 = vmatprep.subr.bf16.mxu0 0
        %4799 = vmatpush2.bf16.xpose.msra.mxu0 0
        %4800 = vmatprep.subr.bf16.mxu0 0
        %4801 = vmatpush2.bf16.xpose.msra.mxu0 0
        %4802 = vmatprep.subr.bf16.mxu0 0
        %4803 = vmatpush2.bf16.xpose.msra.mxu0 0
        %4804 = vmatprep.subr.bf16.mxu0 0
        %4805 = vmatpush2.bf16.xpose.msra.mxu0 0
        %4806 = vmatprep.subr.bf16.mxu0 0
        %4807 = vmatpush2.bf16.xpose.msra.mxu0 0
        %4808 = vmatprep.subr.bf16.mxu0 0
        %4809 = vmatpush2.bf16.xpose.msra.mxu0 0
        %4810 = vmatprep.subr.bf16.mxu0 0
        %4811 = vmatpush2.bf16.xpose.msra.mxu0 0
        %4812 = vmatprep.subr.bf16.mxu0 %v3685
        %4813 = vmatpush2.bf16.xpose.msra.mxu0 %v3684
        %4814 = vmatprep.mubr.bf16.mxu0 %v2682
        %4815 = vmatmul.mubr.bf16.gmra.mxu0 %v2666
        %v4816 = vpop.f32.mrf.mxu0
        %v4817 = vadd.f32 %v4746, %v4816
        %v4818 = vpop.f32.mrf.mxu0
        %v4819 = vadd.f32 %v4748, %v4818
        %v4820 = vpop.f32.mrf.mxu0
        %v4821 = vadd.f32 %v4750, %v4820
        %v4822 = vpop.f32.mrf.mxu0
        %v4823 = vadd.f32 %v4752, %v4822
        %4824 = vmatprep.mubr.bf16.mxu0 %v2683
        %4825 = vmatmul.mubr.bf16.gmra.mxu0 %v2667
        %v4826 = vpop.f32.mrf.mxu0
        %v4827 = vadd.f32 %v4756, %v4826
        %v4828 = vpop.f32.mrf.mxu0
        %v4829 = vadd.f32 %v4758, %v4828
        %v4830 = vpop.f32.mrf.mxu0
        %v4831 = vadd.f32 %v4760, %v4830
        %v4832 = vpop.f32.mrf.mxu0
        %v4833 = vadd.f32 %v4762, %v4832
        %4834 = vmatprep.mubr.bf16.mxu0 %v2684
        %4835 = vmatmul.mubr.bf16.gmra.mxu0 %v2668
        %v4836 = vpop.f32.mrf.mxu0
        %v4837 = vadd.f32 %v4766, %v4836
        %v4838 = vpop.f32.mrf.mxu0
        %v4839 = vadd.f32 %v4768, %v4838
        %v4840 = vpop.f32.mrf.mxu0
        %v4841 = vadd.f32 %v4770, %v4840
        %v4842 = vpop.f32.mrf.mxu0
        %v4843 = vadd.f32 %v4772, %v4842
        %4844 = vmatprep.mubr.bf16.mxu0 %v2685
        %4845 = vmatmul.mubr.bf16.gmra.mxu0 %v2669
        %v4846 = vpop.f32.mrf.mxu0
        %v4847 = vadd.f32 %v4776, %v4846
        %v4848 = vpop.f32.mrf.mxu0
        %v4849 = vadd.f32 %v4778, %v4848
        %v4850 = vpop.f32.mrf.mxu0
        %v4851 = vpop.f32.mrf.mxu0
        %4852 = vdwg.mxu0
        %4853 = vmatprep.subr.bf16.mxu0 0
        %4854 = vmatpush1.bf16.xpose.msra.mxu0 %v3659
        %4855 = vmatprep.subr.bf16.mxu0 0
        %4856 = vmatpush1.bf16.xpose.msra.mxu0 %v3632
        %4857 = vmatprep.subr.bf16.mxu0 0
        %4858 = vmatpush1.bf16.xpose.msra.mxu0 %v3605
        %4859 = vmatprep.subr.bf16.mxu0 0
        %4860 = vmatpush1.bf16.xpose.msra.mxu0 %v3578
        %4861 = vmatprep.subr.bf16.mxu0 0
        %4862 = vmatpush1.bf16.xpose.msra.mxu0 %v3551
        %4863 = vmatprep.subr.bf16.mxu0 0
        %4864 = vmatpush1.bf16.xpose.msra.mxu0 %v3524
        %4865 = vmatprep.subr.bf16.mxu0 0
        %4866 = vmatpush1.bf16.xpose.msra.mxu0 %v3497
        %4867 = vmatprep.subr.bf16.mxu0 0
        %4868 = vmatpush1.bf16.xpose.msra.mxu0 %v3470
        %4869 = vmatprep.subr.bf16.mxu0 0
        %4870 = vmatpush2.bf16.xpose.msra.mxu0 0
        %4871 = vmatprep.subr.bf16.mxu0 0
        %4872 = vmatpush2.bf16.xpose.msra.mxu0 0
        %4873 = vmatprep.subr.bf16.mxu0 0
        %4874 = vmatpush2.bf16.xpose.msra.mxu0 0
        %4875 = vmatprep.subr.bf16.mxu0 0
        %4876 = vmatpush2.bf16.xpose.msra.mxu0 0
        %4877 = vmatprep.subr.bf16.mxu0 0
        %4878 = vmatpush2.bf16.xpose.msra.mxu0 0
        %4879 = vmatprep.subr.bf16.mxu0 0
        %4880 = vmatpush2.bf16.xpose.msra.mxu0 0
        %4881 = vmatprep.subr.bf16.mxu0 0
        %4882 = vmatpush2.bf16.xpose.msra.mxu0 0
        %4883 = vmatprep.subr.bf16.mxu0 0
        %4884 = vmatpush2.bf16.xpose.msra.mxu0 %v3686
        %4885 = vmatprep.mubr.bf16.mxu0 0
        %4886 = vmatmul.mubr.bf16.gmra.mxu0 %v2698
        %v4887 = vpop.f32.mrf.mxu0
        %v4888 = vadd.f32 %v4817, %v4887
        %v4889 = vpop.f32.mrf.mxu0
        %v4890 = vadd.f32 %v4819, %v4889
        %v4891 = vpop.f32.mrf.mxu0
        %v4892 = vadd.f32 %v4821, %v4891
        %v4893 = vpop.f32.mrf.mxu0
        %v4894 = vadd.f32 %v4823, %v4893
        %4895 = vmatprep.mubr.bf16.mxu0 0
        %4896 = vmatmul.mubr.bf16.gmra.mxu0 %v2699
        %v4897 = vpop.f32.mrf.mxu0
        %v4898 = vadd.f32 %v4827, %v4897
        %v4899 = vpop.f32.mrf.mxu0
        %v4900 = vadd.f32 %v4829, %v4899
        %v4901 = vpop.f32.mrf.mxu0
        %v4902 = vadd.f32 %v4831, %v4901
        %v4903 = vpop.f32.mrf.mxu0
        %v4904 = vadd.f32 %v4833, %v4903
        %4905 = vmatprep.mubr.bf16.mxu0 0
        %4906 = vmatmul.mubr.bf16.gmra.mxu0 %v2700
        %v4907 = vpop.f32.mrf.mxu0
        %v4908 = vadd.f32 %v4837, %v4907
        %v4909 = vpop.f32.mrf.mxu0
        %v4910 = vadd.f32 %v4839, %v4909
        %v4911 = vpop.f32.mrf.mxu0
        %v4912 = vadd.f32 %v4841, %v4911
        %v4913 = vpop.f32.mrf.mxu0
        %v4914 = vadd.f32 %v4843, %v4913
        %4915 = vmatprep.mubr.bf16.mxu0 0
        %4916 = vmatmul.mubr.bf16.gmra.mxu0 %v2701
        %v4917 = vpop.f32.mrf.mxu0
        %v4918 = vadd.f32 %v4847, %v4917
        %v4919 = vpop.f32.mrf.mxu0
        %v4920 = vadd.f32 %v4849, %v4919
        %v4921 = vpop.f32.mrf.mxu0
        %v4922 = vpop.f32.mrf.mxu0
        %4923 = vdwg.mxu0
        %v4924 = vadd.f32 %v4888, %v4892
        %v4925 = vadd.f32 %v4924, %v4898
        %v4926 = vadd.f32 %v4925, %v4902
        %v4927 = vadd.f32 %v4926, %v4908
        %v4928 = vadd.f32 %v4927, %v4912
        %vm4929 = vcmask 1040384
        %v4930 = vsel %vm4929, %v4918, 0.0
        %v4931 = vadd.f32 %v4928, %v4930
        %v4932 = vrot.slane %v4931, 4
        %v4933 = vadd.f32 %v4931, %v4932
        %v4934 = vrot.slane %v4933, 2
        %v4935 = vadd.f32 %v4933, %v4934
        %v4936 = vrot.slane %v4935, 1
        %v4937 = vadd.f32 %v4935, %v4936
        %vm4938 = vcmask 130048
        %v4939 = vsel %vm4938, %v4890, 0.0
        %v4940 = vsel %vm4938, %v4894, 0.0
        %v4941 = vadd.f32 %v4939, %v4940
        %v4942 = vsel %vm4938, %v4900, 0.0
        %v4943 = vadd.f32 %v4941, %v4942
        %v4944 = vsel %vm4938, %v4904, 0.0
        %v4945 = vadd.f32 %v4943, %v4944
        %v4946 = vsel %vm4938, %v4910, 0.0
        %v4947 = vadd.f32 %v4945, %v4946
        %v4948 = vsel %vm4938, %v4914, 0.0
        %v4949 = vadd.f32 %v4947, %v4948
        %vm4950 = vcmask 122880
        %v4951 = vsel %vm4950, %v4920, 0.0
        %v4952 = vadd.f32 %v4949, %v4951
        %v4953 = vrot.slane %v4952, 4
        %v4954 = vadd.f32 %v4952, %v4953
        %v4955 = vrot.slane %v4954, 2
        %v4956 = vadd.f32 %v4954, %v4955
        %v4957 = vrot.slane %v4956, 1
        %v4958 = vadd.f32 %v4956, %v4957
        %v4959 = vmul.f32 %v4937, 0.020408163
        %v4960 = vmul.f32 %v4958, 0.020408163
        %v4961 = vsub.f32 %v4888, %v4959
        %v4962 = vsub.f32 %v4890, %v4960
        %v4963 = vsub.f32 %v4892, %v4959
        %v4964 = vsub.f32 %v4894, %v4960
        %v4965 = vsub.f32 %v4898, %v4959
        %v4966 = vsub.f32 %v4900, %v4960
        %v4967 = vsub.f32 %v4902, %v4959
        %v4968 = vsub.f32 %v4904, %v4960
        %v4969 = vsub.f32 %v4908, %v4959
        %v4970 = vsub.f32 %v4910, %v4960
        %v4971 = vsub.f32 %v4912, %v4959
        %v4972 = vsub.f32 %v4914, %v4960
        %v4973 = vsub.f32 %v4918, %v4959
        %v4974 = vsub.f32 %v4920, %v4960
        %v4975 = vmul.f32 %v4961, %v4961
        %v4976 = vmul.f32 %v4962, %v4962
        %v4977 = vmul.f32 %v4963, %v4963
        %v4978 = vmul.f32 %v4964, %v4964
        %v4979 = vmul.f32 %v4965, %v4965
        %v4980 = vmul.f32 %v4966, %v4966
        %v4981 = vmul.f32 %v4967, %v4967
        %v4982 = vmul.f32 %v4968, %v4968
        %v4983 = vmul.f32 %v4969, %v4969
        %v4984 = vmul.f32 %v4970, %v4970
        %v4985 = vmul.f32 %v4971, %v4971
        %v4986 = vmul.f32 %v4972, %v4972
        %v4987 = vmul.f32 %v4973, %v4973
        %v4988 = vmul.f32 %v4974, %v4974
        %v4989 = vadd.f32 %v4975, %v4977
        %v4990 = vadd.f32 %v4989, %v4979
        %v4991 = vadd.f32 %v4990, %v4981
        %v4992 = vadd.f32 %v4991, %v4983
        %v4993 = vadd.f32 %v4992, %v4985
        %v4994 = vsel %vm4929, %v4987, 0.0
        %v4995 = vadd.f32 %v4993, %v4994
        %v4996 = vrot.slane %v4995, 4
        %v4997 = vadd.f32 %v4995, %v4996
        %v4998 = vrot.slane %v4997, 2
        %v4999 = vadd.f32 %v4997, %v4998
        %v5000 = vrot.slane %v4999, 1
        %v5001 = vadd.f32 %v4999, %v5000
        %v5002 = vsel %vm4938, %v4976, 0.0
        %v5003 = vsel %vm4938, %v4978, 0.0
        %v5004 = vadd.f32 %v5002, %v5003
        %v5005 = vsel %vm4938, %v4980, 0.0
        %v5006 = vadd.f32 %v5004, %v5005
        %v5007 = vsel %vm4938, %v4982, 0.0
        %v5008 = vadd.f32 %v5006, %v5007
        %v5009 = vsel %vm4938, %v4984, 0.0
        %v5010 = vadd.f32 %v5008, %v5009
        %v5011 = vsel %vm4938, %v4986, 0.0
        %v5012 = vadd.f32 %v5010, %v5011
        %v5013 = vsel %vm4950, %v4988, 0.0
        %v5014 = vadd.f32 %v5012, %v5013
        %v5015 = vrot.slane %v5014, 4
        %v5016 = vadd.f32 %v5014, %v5015
        %v5017 = vrot.slane %v5016, 2
        %v5018 = vadd.f32 %v5016, %v5017
        %v5019 = vrot.slane %v5018, 1
        %v5020 = vadd.f32 %v5018, %v5019
        %v5021 = vmul.f32 %v5001, 0.020408163
        %v5022 = vmul.f32 %v5020, 0.020408163
        %v5023 = vadd.f32 %v5021, 0.001
        %v5024 = vadd.f32 %v5022, 0.001
        %v5025 = vrsqrt.pop %v5023
        %v5026 = vrsqrt.pop %v5024
        %v5027 = vld [vmem:[%s243] sm:$0x3]
        %v5029 = vlaneseq
        %v5030 = vshrl.u32 %v5029, 7
        %v5031 = vsub.s32 0, %v5030
        %v5032 = vrot.slane %v5027, %v5031
        %v5033 = vlaneseq
        %v5034 = vshrl.u32 %v5033, 7
        %v5035 = vsub.s32 1, %v5034
        %v5036 = vrot.slane %v5027, %v5035
        %v5039 = vmul.f32 %v5025, %v5032
        %v5040 = vmul.f32 %v5026, %v5036
        %v5041 = vlaneseq
        %v5042 = vshrl.u32 %v5041, 7
        %v5043 = vsub.s32 0, %v5042
        %v5044 = vrot.slane %v5039, %v5043
        %v5045 = vlaneseq
        %v5046 = vshrl.u32 %v5045, 7
        %v5047 = vsub.s32 0, %v5046
        %v5048 = vrot.slane %v5040, %v5047
        %v5049 = vmul.f32 %v4961, %v5044
        %v5050 = vmul.f32 %v4962, %v5048
        %v5051 = vmul.f32 %v4963, %v5044
        %v5052 = vmul.f32 %v4964, %v5048
        %v5053 = vmul.f32 %v4965, %v5044
        %v5054 = vmul.f32 %v4966, %v5048
        %v5055 = vmul.f32 %v4967, %v5044
        %v5056 = vmul.f32 %v4968, %v5048
        %v5057 = vmul.f32 %v4969, %v5044
        %v5058 = vmul.f32 %v4970, %v5048
        %v5059 = vmul.f32 %v4971, %v5044
        %v5060 = vmul.f32 %v4972, %v5048
        %v5061 = vmul.f32 %v4973, %v5044
        %v5062 = vmul.f32 %v4974, %v5048
        %v5063 = vld [vmem:[%s252] sm:$0x3]
        %v5065 = vlaneseq
        %v5066 = vshrl.u32 %v5065, 7
        %v5067 = vsub.s32 0, %v5066
        %v5068 = vrot.slane %v5063, %v5067
        %v5069 = vlaneseq
        %v5070 = vshrl.u32 %v5069, 7
        %v5071 = vsub.s32 1, %v5070
        %v5072 = vrot.slane %v5063, %v5071
        %v5075 = vadd.f32 %v5049, %v5068
        %v5076 = vadd.f32 %v5050, %v5072
        %v5077 = vadd.f32 %v5051, %v5068
        %v5078 = vadd.f32 %v5052, %v5072
        %v5079 = vadd.f32 %v5053, %v5068
        %v5080 = vadd.f32 %v5054, %v5072
        %v5081 = vadd.f32 %v5055, %v5068
        %v5082 = vadd.f32 %v5056, %v5072
        %v5083 = vadd.f32 %v5057, %v5068
        %v5084 = vadd.f32 %v5058, %v5072
        %v5085 = vadd.f32 %v5059, %v5068
        %v5086 = vadd.f32 %v5060, %v5072
        %v5087 = vadd.f32 %v5061, %v5068
        %v5088 = vadd.f32 %v5062, %v5072
        %5089 = vst [vmem:[%s292] sm:$0xff] %v5075
        %5090 = vst.msk [vmem:[%s292 + $0x8] sm:$0xff] %vm4938, %v5076
        %5091 = vst [vmem:[%s292 + $0x10] sm:$0xff] %v5077
        %5092 = vst.msk [vmem:[%s292 + $0x18] sm:$0xff] %vm4938, %v5078
        %5093 = vst [vmem:[%s292 + $0x20] sm:$0xff] %v5079
        %5094 = vst.msk [vmem:[%s292 + $0x28] sm:$0xff] %vm4938, %v5080
        %5095 = vst [vmem:[%s292 + $0x30] sm:$0xff] %v5081
        %5096 = vst.msk [vmem:[%s292 + $0x38] sm:$0xff] %vm4938, %v5082
        %5097 = vst [vmem:[%s292 + $0x40] sm:$0xff] %v5083
        %5098 = vst.msk [vmem:[%s292 + $0x48] sm:$0xff] %vm4938, %v5084
        %5099 = vst [vmem:[%s292 + $0x50] sm:$0xff] %v5085
        %5100 = vst.msk [vmem:[%s292 + $0x58] sm:$0xff] %vm4938, %v5086
        %5101 = vst [vmem:[%s292 + $0x60] sm:$0x1] %v5087
        %5102 = vst.msk [vmem:[%s292 + $0x68] sm:$0x1] %vm4950, %v5088
        %p5103 = scmp.lt.s32.totalorder %s21, 3
        %s5104 = scalar_select %p5103, %s21, 3
        %s5105 = smul.addr %s5104, 14
        %s5106 = smul.addr %s5105, 8
        %s5107 = scalar_lea.vmem %s4, %s5106
        // Predicated region
        $region49: #{tpu_custom_call.1} parent=35 // pred_check
          %p5108 = pneg %p138
        $region50: #{tpu_custom_call.1} parent=35 // pred_check_branch
          %5110 = sbr.rel (%p5108) target = $region52
        $region51: #{tpu_custom_call.1} parent=35 // pred_region
          _
        $region52: #{tpu_custom_call.1} parent=35 // pred_fallthru
          _
      $region36: #{tpu_custom_call.1} parent=5 // pred_fallthru
        _
      %p5111 = scmp.le.s32.totalorder 2, %s16
      // Predicated region
      $region53: #{tpu_custom_call.1} parent=5 // pred_check
        %p5112 = pneg %p5111
      $region54: #{tpu_custom_call.1} parent=5 // pred_check_branch
        %5114 = sbr.rel (%p5112) target = $region56
      $region55: #{tpu_custom_call.1} parent=5 // pred_region
        %s5115 = ssub.s32 %s16, 2
        // Predicated region
        $region57: #{tpu_custom_call.1} parent=55 // pred_check
          %p5116 = pneg %p144
        $region58: #{tpu_custom_call.1} parent=55 // pred_check_branch
          %5118 = sbr.rel (%p5116) target = $region60
        $region59: #{tpu_custom_call.1} parent=55 // pred_region
          %p5119 = scmp.lt.s32.totalorder %s22, 3
          %s5120 = scalar_select %p5119, %s22, 3
          %s5121 = smul.addr %s5120, 14
          %s5122 = smul.addr %s5121, 8
          %s5123 = scalar_lea.vmem %s4, %s5122
        $region60: #{tpu_custom_call.1} parent=55 // pred_fallthru
          _
      $region56: #{tpu_custom_call.1} parent=5 // pred_fallthru
        _
    $region6: #{tpu_custom_call.1} parent=1 // loop_footer
      %s20 = sadd.s32 1, %s16
    $region7: #{tpu_custom_call.1} parent=1 // loop_footer_branch
      %15 = sbr.rel target = $region3
    $region8: #{tpu_custom_call.1} parent=1 // loop_exit
      _
    %5124 = vsyncpa [#allocation3], 1
    %s5125 = scalar_lea.sflag [#allocation3], 1
    %5126 = vsyncpa %s5125, 1
    %5127 = vsyncpa [#allocation5], 1
    %s5128 = scalar_lea.sflag [#allocation5], 1
    %5129 = vsyncpa %s5128, 1

</llo_original>
